<compile_context>
chip_gen: v7x
topology: tpu7x:2x2x1
jax: 0.10.0
libtpu: 0.0.40
codegen_flags: <defaults>
</compile_context>

<pallas_src>
import math
from functools import partial

import numpy as np
import jax
import jax.numpy as jnp
from jax.experimental import pallas as pl
from jax.experimental.pallas import tpu as pltpu


# ---------------------------------------------------------------------------
# Fused Pallas kernel: whole Decoder1Step forward, whole batch, one invocation
# ---------------------------------------------------------------------------

def _decoder1step_kernel(*refs, n_layers, n_heads, s_params,
                         ctx_z, act_last, dec_act, eps):
    out_ref = refs[-1]                       # (B, L, s_params)
    it = iter(refs[:-1])

    ctx_ref = next(it)                       # (B, Lc, D) f32
    z_ref = next(it)                         # (B, 1, D)  f32
    pe_ref = next(it)                        # (L, D)     f32
    if ctx_z == "proj":
        projw_ref = next(it)                 # (2D, D)    bf16
        projb_ref = next(it)                 # (1, D)     f32
    wsaqkv_ref = next(it)                    # (NL, D, 3D) bf16
    wsao_ref = next(it)                      # (NL, D, D)  bf16
    wcaqkv_ref = next(it)                    # (NL, D, 3D) bf16
    wcao_ref = next(it)                      # (NL, D, D)  bf16
    wf1_ref = next(it)                       # (NL, D, FF) bf16
    wf2_ref = next(it)                       # (NL, FF, D) bf16
    bqkv_ref = next(it)                      # (NL, 2, 3D) f32  rows: [self, cross]
    bd_ref = next(it)                        # (NL, 9, D)  f32  rows: sa_bo, ca_bo, ff_b2,
                                             #   ln1_g, ln1_b, ln2_g, ln2_b, ln3_g, ln3_b
    bf1_ref = next(it)                       # (NL, 1, FF) f32
    norm1_ref = next(it)                     # (2, D)      f32  [gamma, beta]
    headw_ref = next(it)                     # (D, sp)     bf16
    headb_ref = next(it)                     # (1, sp)     f32

    B, Lc, D = ctx_ref.shape
    L = pe_ref.shape[0]
    H = n_heads
    dh = D // H
    scale = 1.0 / math.sqrt(dh)
    bf16 = jnp.bfloat16

    def mm(a, w):
        # bf16 x bf16 MXU matmul with f32 accumulation (weights already bf16).
        return jnp.dot(a.astype(bf16), w.astype(bf16),
                       preferred_element_type=jnp.float32)

    def layer_norm(v, g, b):
        mu = jnp.mean(v, axis=-1, keepdims=True)
        c = v - mu
        var = jnp.mean(c * c, axis=-1, keepdims=True)
        return c * jax.lax.rsqrt(var + eps) * g + b

    def ff_act(v):
        if dec_act == "relu":
            return jnp.maximum(v, 0.0)
        if dec_act == "gelu":
            return jax.nn.gelu(v, approximate=False)   # torch F.gelu default (erf)
        raise NotImplementedError(dec_act)

    def attend(q2, k2, v2, Lq, Lk):
        # q2: (B*Lq, D), k2/v2: (B*Lk, D) -> (B*Lq, D). Per-head loop (H small),
        # each head batched over B in a single dot_general.
        q3 = q2.reshape(B, Lq, D)
        k3 = k2.reshape(B, Lk, D)
        v3 = v2.reshape(B, Lk, D)
        heads = []
        for h in range(H):
            lo = h * dh
            qh = q3[:, :, lo:lo + dh]
            kh = k3[:, :, lo:lo + dh]
            vh = v3[:, :, lo:lo + dh]
            s = jnp.einsum("bqd,bkd->bqk", qh.astype(bf16), kh.astype(bf16),
                           preferred_element_type=jnp.float32) * scale
            s = s - jnp.max(s, axis=-1, keepdims=True)
            p = jnp.exp(s)
            p = p / jnp.sum(p, axis=-1, keepdims=True)          # exact softmax
            heads.append(jnp.einsum("bqk,bkd->bqd",
                                    p.astype(bf16), vh.astype(bf16),
                                    preferred_element_type=jnp.float32))
        return jnp.concatenate(heads, axis=-1).reshape(B * Lq, D)

    # ---- memory (context [+ z]) ----
    if ctx_z == "proj":
        pw = projw_ref[...]                                     # (2D, D)
        ctx2 = ctx_ref[...].reshape(B * Lc, D)
        mem = mm(ctx2, pw[:D]).reshape(B, Lc, D)
        mem = mem + mm(z_ref[...].reshape(B, D), pw[D:])[:, None, :] + projb_ref[...]
        Lm = Lc
    elif ctx_z == "cat":
        mem = jnp.concatenate([ctx_ref[...], z_ref[...]], axis=1)   # (B, Lc+1, D)
        Lm = Lc + 1
    else:
        mem = ctx_ref[...]
        Lm = Lc
    mem2 = mem.reshape(B * Lm, D)

    # ---- query tokens: positional encoding repeated over the batch ----
    x = jnp.broadcast_to(pe_ref[...][None], (B, L, D)).reshape(B * L, D)

    # ---- decoder stack (post-norm TransformerDecoderLayer, eval, no masks) ----
    for l in range(n_layers):
        bqkv = bqkv_ref[l]                                      # (2, 3D)
        bd = bd_ref[l]                                          # (9, D)

        # self-attention: one fused QKV matmul over all B*L rows
        qkv = mm(x, wsaqkv_ref[l]) + bqkv[0:1, :]
        sa = attend(qkv[:, :D], qkv[:, D:2 * D], qkv[:, 2 * D:], L, L)
        sa = mm(sa, wsao_ref[l]) + bd[0:1, :]
        x = layer_norm(x + sa, bd[3:4, :], bd[4:5, :])

        # cross-attention: fused KV matmul over all B*Lm memory rows
        wca = wcaqkv_ref[l]
        q = mm(x, wca[:, :D]) + bqkv[1:2, :D]
        kv = mm(mem2, wca[:, D:]) + bqkv[1:2, D:]
        ca = attend(q, kv[:, :D], kv[:, D:], L, Lm)
        ca = mm(ca, wcao_ref[l]) + bd[1:2, :]
        x = layer_norm(x + ca, bd[5:6, :], bd[6:7, :])

        # feed-forward
        h1 = ff_act(mm(x, wf1_ref[l]) + bf1_ref[l])
        ff = mm(h1, wf2_ref[l]) + bd[2:3, :]
        x = layer_norm(x + ff, bd[7:8, :], bd[8:9, :])

    # ---- final norm + head (+ last activation) ----
    g = norm1_ref[...]
    xn = layer_norm(x, g[0:1, :], g[1:2, :])
    out = mm(xn, headw_ref[...]) + headb_ref[...]
    if act_last == "sigmoid":
        out = jax.nn.sigmoid(out)
    elif act_last == "relu":
        out = jnp.maximum(out, 0.0)
    out_ref[...] = out.reshape(B, L, s_params)                  # single full-slab store


# ---------------------------------------------------------------------------
# Host-side glue
# ---------------------------------------------------------------------------

_PE_CACHE = {}


def positionalencoding1d(length, orig_channels):
    """1D sinusoidal PE with interleaved sin/cos channels, cached per shape."""
    # TODO(synk): verify interleave-vs-concat ordering against the exact
    # `positionalencoding1d` implementation used by the original repo.
    key = (length, orig_channels)
    if key not in _PE_CACHE:
        channels = int(math.ceil(orig_channels / 2) * 2)
        inv_freq = 1.0 / (10000.0 ** (np.arange(0, channels, 2, dtype=np.float64) / channels))
        pos = np.arange(length, dtype=np.float64)
        sin_inp = pos[:, None] * inv_freq[None, :]
        emb = np.stack([np.sin(sin_inp), np.cos(sin_inp)], axis=-1).reshape(length, channels)
        _PE_CACHE[key] = jnp.asarray(emb[:, :orig_channels], dtype=jnp.float32)
    return _PE_CACHE[key]


def pack_params(params, cfg):
    """Stack per-layer weights into a few slabs; matmul weights -> bf16 (MXU-native)."""
    bf16, f32 = jnp.bfloat16, jnp.float32
    lyrs = params["layers"]
    stk = lambda k, dt: jnp.stack([lp[k] for lp in lyrs]).astype(dt)
    packed = dict(
        w_sa_qkv=stk("sa_wqkv", bf16), w_sa_o=stk("sa_wo", bf16),
        w_ca_qkv=stk("ca_wqkv", bf16), w_ca_o=stk("ca_wo", bf16),
        w_ff1=stk("ff_w1", bf16), w_ff2=stk("ff_w2", bf16),
        b_qkv=jnp.stack([jnp.concatenate([lp["sa_bqkv"], lp["ca_bqkv"]], axis=0)
                         for lp in lyrs]).astype(f32),                  # (NL, 2, 3D)
        b_d=jnp.stack([jnp.concatenate(
            [lp["sa_bo"], lp["ca_bo"], lp["ff_b2"],
             lp["ln1_g"], lp["ln1_b"], lp["ln2_g"], lp["ln2_b"],
             lp["ln3_g"], lp["ln3_b"]], axis=0) for lp in lyrs]).astype(f32),  # (NL, 9, D)
        b_ff1=stk("ff_b1", f32),                                        # (NL, 1, FF)
        norm1=jnp.concatenate([params["norm1_g"], params["norm1_b"]], axis=0).astype(f32),
        head_w=params["head_w"].astype(bf16),
        head_b=params["head_b"].astype(f32),
    )
    if cfg["ctx_z"] == "proj":
        packed["proj_w"] = params["proj_ctx_z_w"].astype(bf16)
        packed["proj_b"] = params["proj_ctx_z_b"].astype(f32)
    return packed


def decoder1step_forward(packed, z, context, visual_features, seq_length, cfg):
    # visual_features is unused in the reference forward pass.
    del visual_features
    d = cfg["d_model"]
    sp = cfg["s_params"]
    ctx_len, bs, _ = context.shape

    # batch-first internal layout (per-(l,b) semantics identical to seq-first)
    ctx_bf = jnp.transpose(context, (1, 0, 2)).astype(jnp.float32)     # (B, Lc, D)
    z_bf = z.astype(jnp.float32).reshape(bs, 1, d)                     # (B, 1, D)
    pe = positionalencoding1d(seq_length, d)                           # (L, D), cached

    args = [ctx_bf, z_bf, pe]
    if cfg["ctx_z"] == "proj":
        args += [packed["proj_w"], packed["proj_b"]]
    args += [packed["w_sa_qkv"], packed["w_sa_o"],
             packed["w_ca_qkv"], packed["w_ca_o"],
             packed["w_ff1"], packed["w_ff2"],
             packed["b_qkv"], packed["b_d"], packed["b_ff1"],
             packed["norm1"], packed["head_w"], packed["head_b"]]

    kernel = partial(
        _decoder1step_kernel,
        n_layers=cfg["n_layers"], n_heads=cfg["n_heads"], s_params=sp,
        ctx_z=cfg["ctx_z"], act_last=cfg["act_last"],
        dec_act=cfg.get("dec_act", "relu"), eps=1e-5,
    )

    # Grid-less call: single invocation, every array whole-block resident in VMEM.
    out = pl.pallas_call(
        kernel,
        out_shape=jax.ShapeDtypeStruct((bs, seq_length, sp), jnp.float32),
        in_specs=[pl.BlockSpec(memory_space=pltpu.MemorySpace.VMEM) for _ in args],
        out_specs=pl.BlockSpec(memory_space=pltpu.MemorySpace.VMEM),
    )(*args)
    return out                               # (bs, L, s_params), batch-first


# ---------------------------------------------------------------------------
# Deterministic parameter initialization (shapes from Decoder1Step.__init__)
# Weights are stored as (in, out) = nn.Linear weight transposed; fused QKV
# column order is [Wq | Wk | Wv], matching in_proj_weight.T.
# ---------------------------------------------------------------------------

def init_params(key, cfg):
    d, ff, sp = cfg["d_model"], cfg["ff_dim"], cfg["s_params"]
    keys = iter(jax.random.split(key, 512))

    def w(shape, scale=0.05):
        return scale * jax.random.normal(next(keys), shape, jnp.float32)

    def zeros(n):
        return jnp.zeros((1, n), jnp.float32)

    def ones(n):
        return jnp.ones((1, n), jnp.float32)

    def attn():
        return dict(wqkv=w((d, 3 * d)), bqkv=zeros(3 * d), wo=w((d, d)), bo=zeros(d))

    layers = []
    for _ in range(cfg["n_layers"]):
        sa, ca = attn(), attn()
        layers.append(dict(
            sa_wqkv=sa["wqkv"], sa_bqkv=sa["bqkv"], sa_wo=sa["wo"], sa_bo=sa["bo"],
            ca_wqkv=ca["wqkv"], ca_bqkv=ca["bqkv"], ca_wo=ca["wo"], ca_bo=ca["bo"],
            ln1_g=ones(d), ln1_b=zeros(d),
            ln2_g=ones(d), ln2_b=zeros(d),
            ln3_g=ones(d), ln3_b=zeros(d),
            ff_w1=w((d, ff)), ff_b1=zeros(ff),
            ff_w2=w((ff, d)), ff_b2=zeros(d),
        ))

    return dict(
        layers=layers,
        proj_ctx_z_w=w((2 * d, d)), proj_ctx_z_b=zeros(d),
        norm1_g=ones(d), norm1_b=zeros(d),
        head_w=w((d, sp)), head_b=zeros(sp),
    )


# ---------------------------------------------------------------------------

if __name__ == "__main__":
    cfg = dict(
        d_model=32,
        n_heads=2,
        ff_dim=64,
        n_layers=2,
        s_params=8,
        ctx_z="proj",
        act_last="sigmoid",
        dec_act="relu",
    )
    bs, ctx_len, seq_length = 2, 4, 8

    key = jax.random.PRNGKey(0)
    kz, kc, kv, kp = jax.random.split(key, 4)
    z = jax.random.normal(kz, (bs, cfg["d_model"]), jnp.float32)
    context = jax.random.normal(kc, (ctx_len, bs, cfg["d_model"]), jnp.float32)
    visual_features = jax.random.normal(kv, (bs, cfg["d_model"]), jnp.float32)  # unused, as in reference
    packed = pack_params(init_params(kp, cfg), cfg)   # pack once, off the hot path

    out = decoder1step_forward(packed, z, context, visual_features, seq_length, cfg)
    out = jax.block_until_ready(out)

    assert out.shape == (bs, seq_length, cfg["s_params"]), out.shape
    assert bool(jnp.all(jnp.isfinite(out)))
    assert bool(jnp.all((out >= 0.0) & (out <= 1.0)))  # sigmoid head
    print("KERNEL_OK")
</pallas_src>

<mosaic_0001>
module attributes {stable_mosaic.version = 11 : i64} {
  func.func @_decoder1step_kernel(%arg0: memref<2x4x32xf32, #tpu.memory_space<vmem>>, %arg1: memref<2x1x32xf32, #tpu.memory_space<vmem>>, %arg2: memref<8x32xf32, #tpu.memory_space<vmem>>, %arg3: memref<64x32xbf16, #tpu.memory_space<vmem>>, %arg4: memref<1x32xf32, #tpu.memory_space<vmem>>, %arg5: memref<2x32x96xbf16, #tpu.memory_space<vmem>>, %arg6: memref<2x32x32xbf16, #tpu.memory_space<vmem>>, %arg7: memref<2x32x96xbf16, #tpu.memory_space<vmem>>, %arg8: memref<2x32x32xbf16, #tpu.memory_space<vmem>>, %arg9: memref<2x32x64xbf16, #tpu.memory_space<vmem>>, %arg10: memref<2x64x32xbf16, #tpu.memory_space<vmem>>, %arg11: memref<2x2x96xf32, #tpu.memory_space<vmem>>, %arg12: memref<2x9x32xf32, #tpu.memory_space<vmem>>, %arg13: memref<2x1x64xf32, #tpu.memory_space<vmem>>, %arg14: memref<2x32xf32, #tpu.memory_space<vmem>>, %arg15: memref<32x8xbf16, #tpu.memory_space<vmem>>, %arg16: memref<1x8xf32, #tpu.memory_space<vmem>>, %arg17: memref<2x8x8xf32, #tpu.memory_space<vmem>>) attributes {dimension_semantics = [], scalar_prefetch = 0 : i64, scratch_operands = 0 : i64, tpu.core_type = #tpu.core_type<tc>} {
    %c0 = arith.constant 0 : index
    %c0_0 = arith.constant 0 : index
    %0 = vector.load %arg3[%c0, %c0_0] : memref<64x32xbf16, #tpu.memory_space<vmem>>, vector<64x32xbf16>
    %c0_1 = arith.constant 0 : index
    %c0_2 = arith.constant 0 : index
    %c0_3 = arith.constant 0 : index
    %1 = vector.load %arg0[%c0_1, %c0_2, %c0_3] : memref<2x4x32xf32, #tpu.memory_space<vmem>>, vector<2x4x32xf32>
    %2 = vector.shape_cast %1 : vector<2x4x32xf32> to vector<8x32xf32>
    %3 = vector.extract_strided_slice %0 {offsets = [0, 0], sizes = [32, 32], strides = [1, 1]} : vector<64x32xbf16> to vector<32x32xbf16>
    %4 = arith.truncf %2 : vector<8x32xf32> to vector<8x32xbf16>
    %cst = arith.constant dense<0.000000e+00> : vector<8x32xf32>
    %5 = tpu.matmul %4, %3, %cst {dimension_numbers = #tpu.dot_dimension_numbers<[1], [0], [0], [1], [0, 0, 1, 1], [], []>} : vector<8x32xbf16>, vector<32x32xbf16>, vector<8x32xf32> -> vector<8x32xf32>
    %6 = vector.shape_cast %5 : vector<8x32xf32> to vector<2x4x32xf32>
    %c0_4 = arith.constant 0 : index
    %c0_5 = arith.constant 0 : index
    %c0_6 = arith.constant 0 : index
    %7 = vector.load %arg1[%c0_4, %c0_5, %c0_6] : memref<2x1x32xf32, #tpu.memory_space<vmem>>, vector<2x1x32xf32>
    %8 = vector.shape_cast %7 : vector<2x1x32xf32> to vector<2x32xf32>
    %9 = vector.extract_strided_slice %0 {offsets = [32, 0], sizes = [32, 32], strides = [1, 1]} : vector<64x32xbf16> to vector<32x32xbf16>
    %10 = arith.truncf %8 : vector<2x32xf32> to vector<2x32xbf16>
    %cst_7 = arith.constant dense<0.000000e+00> : vector<2x32xf32>
    %11 = tpu.matmul %10, %9, %cst_7 {dimension_numbers = #tpu.dot_dimension_numbers<[1], [0], [0], [1], [0, 0, 1, 1], [], []>} : vector<2x32xbf16>, vector<32x32xbf16>, vector<2x32xf32> -> vector<2x32xf32>
    %12 = vector.shape_cast %11 : vector<2x32xf32> to vector<2x1x32xf32>
    %13 = vector.broadcast %12 : vector<2x1x32xf32> to vector<2x4x32xf32>
    %14 = arith.addf %6, %13 : vector<2x4x32xf32>
    %c0_8 = arith.constant 0 : index
    %c0_9 = arith.constant 0 : index
    %15 = vector.load %arg4[%c0_8, %c0_9] : memref<1x32xf32, #tpu.memory_space<vmem>>, vector<1x32xf32>
    %16 = vector.shape_cast %15 : vector<1x32xf32> to vector<1x1x32xf32>
    %17 = vector.broadcast %16 : vector<1x1x32xf32> to vector<2x4x32xf32>
    %18 = arith.addf %14, %17 : vector<2x4x32xf32>
    %19 = vector.shape_cast %18 : vector<2x4x32xf32> to vector<8x32xf32>
    %c0_10 = arith.constant 0 : index
    %c0_11 = arith.constant 0 : index
    %20 = vector.load %arg2[%c0_10, %c0_11] : memref<8x32xf32, #tpu.memory_space<vmem>>, vector<8x32xf32>
    %21 = vector.shape_cast %20 : vector<8x32xf32> to vector<1x8x32xf32>
    %22 = vector.shape_cast %21 : vector<1x8x32xf32> to vector<1x8x32xf32>
    %23 = vector.broadcast %22 : vector<1x8x32xf32> to vector<2x8x32xf32>
    %24 = vector.shape_cast %23 : vector<2x8x32xf32> to vector<16x32xf32>
    %c0_12 = arith.constant 0 : index
    %c0_13 = arith.constant 0 : index
    %c0_14 = arith.constant 0 : index
    %25 = vector.load %arg11[%c0_12, %c0_13, %c0_14] : memref<2x2x96xf32, #tpu.memory_space<vmem>>, vector<1x2x96xf32>
    %26 = vector.shape_cast %25 : vector<1x2x96xf32> to vector<2x96xf32>
    %c0_15 = arith.constant 0 : index
    %c0_16 = arith.constant 0 : index
    %c0_17 = arith.constant 0 : index
    %27 = vector.load %arg12[%c0_15, %c0_16, %c0_17] : memref<2x9x32xf32, #tpu.memory_space<vmem>>, vector<1x9x32xf32>
    %28 = vector.shape_cast %27 : vector<1x9x32xf32> to vector<9x32xf32>
    %c0_18 = arith.constant 0 : index
    %c0_19 = arith.constant 0 : index
    %c0_20 = arith.constant 0 : index
    %29 = vector.load %arg5[%c0_18, %c0_19, %c0_20] : memref<2x32x96xbf16, #tpu.memory_space<vmem>>, vector<1x32x96xbf16>
    %30 = vector.shape_cast %29 : vector<1x32x96xbf16> to vector<32x96xbf16>
    %31 = arith.truncf %24 : vector<16x32xf32> to vector<16x32xbf16>
    %cst_21 = arith.constant dense<0.000000e+00> : vector<16x96xf32>
    %32 = tpu.matmul %31, %30, %cst_21 {dimension_numbers = #tpu.dot_dimension_numbers<[1], [0], [0], [1], [0, 0, 1, 1], [], []>} : vector<16x32xbf16>, vector<32x96xbf16>, vector<16x96xf32> -> vector<16x96xf32>
    %33 = vector.extract_strided_slice %26 {offsets = [0, 0], sizes = [1, 96], strides = [1, 1]} : vector<2x96xf32> to vector<1x96xf32>
    %34 = vector.broadcast %33 : vector<1x96xf32> to vector<16x96xf32>
    %35 = arith.addf %32, %34 : vector<16x96xf32>
    %36 = vector.extract_strided_slice %35 {offsets = [0, 0], sizes = [16, 32], strides = [1, 1]} : vector<16x96xf32> to vector<16x32xf32>
    %37 = vector.extract_strided_slice %35 {offsets = [0, 32], sizes = [16, 32], strides = [1, 1]} : vector<16x96xf32> to vector<16x32xf32>
    %38 = vector.extract_strided_slice %35 {offsets = [0, 64], sizes = [16, 32], strides = [1, 1]} : vector<16x96xf32> to vector<16x32xf32>
    %39 = vector.shape_cast %36 : vector<16x32xf32> to vector<2x8x32xf32>
    %40 = vector.shape_cast %37 : vector<16x32xf32> to vector<2x8x32xf32>
    %41 = vector.shape_cast %38 : vector<16x32xf32> to vector<2x8x32xf32>
    %42 = vector.extract_strided_slice %39 {offsets = [0, 0, 0], sizes = [2, 8, 16], strides = [1, 1, 1]} : vector<2x8x32xf32> to vector<2x8x16xf32>
    %43 = vector.extract_strided_slice %40 {offsets = [0, 0, 0], sizes = [2, 8, 16], strides = [1, 1, 1]} : vector<2x8x32xf32> to vector<2x8x16xf32>
    %44 = vector.extract_strided_slice %41 {offsets = [0, 0, 0], sizes = [2, 8, 16], strides = [1, 1, 1]} : vector<2x8x32xf32> to vector<2x8x16xf32>
    %45 = arith.truncf %42 : vector<2x8x16xf32> to vector<2x8x16xbf16>
    %46 = arith.truncf %43 : vector<2x8x16xf32> to vector<2x8x16xbf16>
    "tpu.trace_start"() <{level = 10 : i32, message = "bqd,bkd->bqk"}> : () -> ()
    %cst_22 = arith.constant dense<0.000000e+00> : vector<2x8x8xf32>
    %47 = tpu.matmul %45, %46, %cst_22 {dimension_numbers = #tpu.dot_dimension_numbers<[2], [2], [1], [1], [0, 0, 0, 1, 1, 1], [0], [0]>} : vector<2x8x16xbf16>, vector<2x8x16xbf16>, vector<2x8x8xf32> -> vector<2x8x8xf32>
    "tpu.trace_stop"() : () -> ()
    %cst_23 = arith.constant 2.500000e-01 : f32
    %48 = vector.broadcast %cst_23 : f32 to vector<2x8x8xf32>
    %49 = arith.mulf %47, %48 : vector<2x8x8xf32>
    %cst_24 = arith.constant dense<0xFF800000> : vector<2x8xf32>
    %50 = vector.multi_reduction <maximumf>, %49, %cst_24 [2] : vector<2x8x8xf32> to vector<2x8xf32>
    %51 = vector.shape_cast %50 : vector<2x8xf32> to vector<2x8x1xf32>
    %52 = vector.broadcast %51 : vector<2x8x1xf32> to vector<2x8x8xf32>
    %53 = arith.subf %49, %52 : vector<2x8x8xf32>
    %54 = math.exp %53 : vector<2x8x8xf32>
    %cst_25 = arith.constant dense<0.000000e+00> : vector<2x8xf32>
    %55 = vector.multi_reduction <add>, %54, %cst_25 [2] : vector<2x8x8xf32> to vector<2x8xf32>
    %56 = vector.shape_cast %55 : vector<2x8xf32> to vector<2x8x1xf32>
    %57 = vector.broadcast %56 : vector<2x8x1xf32> to vector<2x8x8xf32>
    %58 = arith.divf %54, %57 : vector<2x8x8xf32>
    %59 = arith.truncf %58 : vector<2x8x8xf32> to vector<2x8x8xbf16>
    %60 = arith.truncf %44 : vector<2x8x16xf32> to vector<2x8x16xbf16>
    "tpu.trace_start"() <{level = 10 : i32, message = "bqk,bkd->bqd"}> : () -> ()
    %cst_26 = arith.constant dense<0.000000e+00> : vector<2x8x16xf32>
    %61 = tpu.matmul %59, %60, %cst_26 {dimension_numbers = #tpu.dot_dimension_numbers<[2], [1], [1], [2], [0, 0, 0, 1, 1, 2], [0], [0]>} : vector<2x8x8xbf16>, vector<2x8x16xbf16>, vector<2x8x16xf32> -> vector<2x8x16xf32>
    "tpu.trace_stop"() : () -> ()
    %62 = vector.extract_strided_slice %39 {offsets = [0, 0, 16], sizes = [2, 8, 16], strides = [1, 1, 1]} : vector<2x8x32xf32> to vector<2x8x16xf32>
    %63 = vector.extract_strided_slice %40 {offsets = [0, 0, 16], sizes = [2, 8, 16], strides = [1, 1, 1]} : vector<2x8x32xf32> to vector<2x8x16xf32>
    %64 = vector.extract_strided_slice %41 {offsets = [0, 0, 16], sizes = [2, 8, 16], strides = [1, 1, 1]} : vector<2x8x32xf32> to vector<2x8x16xf32>
    %65 = arith.truncf %62 : vector<2x8x16xf32> to vector<2x8x16xbf16>
    %66 = arith.truncf %63 : vector<2x8x16xf32> to vector<2x8x16xbf16>
    "tpu.trace_start"() <{level = 10 : i32, message = "bqd,bkd->bqk"}> : () -> ()
    %cst_27 = arith.constant dense<0.000000e+00> : vector<2x8x8xf32>
    %67 = tpu.matmul %65, %66, %cst_27 {dimension_numbers = #tpu.dot_dimension_numbers<[2], [2], [1], [1], [0, 0, 0, 1, 1, 1], [0], [0]>} : vector<2x8x16xbf16>, vector<2x8x16xbf16>, vector<2x8x8xf32> -> vector<2x8x8xf32>
    "tpu.trace_stop"() : () -> ()
    %cst_28 = arith.constant 2.500000e-01 : f32
    %68 = vector.broadcast %cst_28 : f32 to vector<2x8x8xf32>
    %69 = arith.mulf %67, %68 : vector<2x8x8xf32>
    %cst_29 = arith.constant dense<0xFF800000> : vector<2x8xf32>
    %70 = vector.multi_reduction <maximumf>, %69, %cst_29 [2] : vector<2x8x8xf32> to vector<2x8xf32>
    %71 = vector.shape_cast %70 : vector<2x8xf32> to vector<2x8x1xf32>
    %72 = vector.broadcast %71 : vector<2x8x1xf32> to vector<2x8x8xf32>
    %73 = arith.subf %69, %72 : vector<2x8x8xf32>
    %74 = math.exp %73 : vector<2x8x8xf32>
    %cst_30 = arith.constant dense<0.000000e+00> : vector<2x8xf32>
    %75 = vector.multi_reduction <add>, %74, %cst_30 [2] : vector<2x8x8xf32> to vector<2x8xf32>
    %76 = vector.shape_cast %75 : vector<2x8xf32> to vector<2x8x1xf32>
    %77 = vector.broadcast %76 : vector<2x8x1xf32> to vector<2x8x8xf32>
    %78 = arith.divf %74, %77 : vector<2x8x8xf32>
    %79 = arith.truncf %78 : vector<2x8x8xf32> to vector<2x8x8xbf16>
    %80 = arith.truncf %64 : vector<2x8x16xf32> to vector<2x8x16xbf16>
    "tpu.trace_start"() <{level = 10 : i32, message = "bqk,bkd->bqd"}> : () -> ()
    %cst_31 = arith.constant dense<0.000000e+00> : vector<2x8x16xf32>
    %81 = tpu.matmul %79, %80, %cst_31 {dimension_numbers = #tpu.dot_dimension_numbers<[2], [1], [1], [2], [0, 0, 0, 1, 1, 2], [0], [0]>} : vector<2x8x8xbf16>, vector<2x8x16xbf16>, vector<2x8x16xf32> -> vector<2x8x16xf32>
    "tpu.trace_stop"() : () -> ()
    %82 = tpu.concatenate %61, %81 in 2 : vector<2x8x16xf32>, vector<2x8x16xf32> -> vector<2x8x32xf32>
    %83 = vector.shape_cast %82 : vector<2x8x32xf32> to vector<16x32xf32>
    %c0_32 = arith.constant 0 : index
    %c0_33 = arith.constant 0 : index
    %c0_34 = arith.constant 0 : index
    %84 = vector.load %arg6[%c0_32, %c0_33, %c0_34] : memref<2x32x32xbf16, #tpu.memory_space<vmem>>, vector<1x32x32xbf16>
    %85 = vector.shape_cast %84 : vector<1x32x32xbf16> to vector<32x32xbf16>
    %86 = arith.truncf %83 : vector<16x32xf32> to vector<16x32xbf16>
    %cst_35 = arith.constant dense<0.000000e+00> : vector<16x32xf32>
    %87 = tpu.matmul %86, %85, %cst_35 {dimension_numbers = #tpu.dot_dimension_numbers<[1], [0], [0], [1], [0, 0, 1, 1], [], []>} : vector<16x32xbf16>, vector<32x32xbf16>, vector<16x32xf32> -> vector<16x32xf32>
    %88 = vector.extract_strided_slice %28 {offsets = [0, 0], sizes = [1, 32], strides = [1, 1]} : vector<9x32xf32> to vector<1x32xf32>
    %89 = vector.broadcast %88 : vector<1x32xf32> to vector<16x32xf32>
    %90 = arith.addf %87, %89 : vector<16x32xf32>
    %91 = arith.addf %24, %90 : vector<16x32xf32>
    %92 = vector.extract_strided_slice %28 {offsets = [3, 0], sizes = [1, 32], strides = [1, 1]} : vector<9x32xf32> to vector<1x32xf32>
    %93 = vector.extract_strided_slice %28 {offsets = [4, 0], sizes = [1, 32], strides = [1, 1]} : vector<9x32xf32> to vector<1x32xf32>
    %cst_36 = arith.constant dense<0.000000e+00> : vector<16xf32>
    %94 = vector.multi_reduction <add>, %91, %cst_36 [1] : vector<16x32xf32> to vector<16xf32>
    %95 = vector.shape_cast %94 : vector<16xf32> to vector<16x1xf32>
    %cst_37 = arith.constant 3.200000e+01 : f32
    %96 = vector.broadcast %cst_37 : f32 to vector<16x1xf32>
    %97 = arith.divf %95, %96 : vector<16x1xf32>
    %98 = vector.broadcast %97 : vector<16x1xf32> to vector<16x32xf32>
    %99 = arith.subf %91, %98 : vector<16x32xf32>
    %100 = arith.mulf %99, %99 : vector<16x32xf32>
    %cst_38 = arith.constant dense<0.000000e+00> : vector<16xf32>
    %101 = vector.multi_reduction <add>, %100, %cst_38 [1] : vector<16x32xf32> to vector<16xf32>
    %102 = vector.shape_cast %101 : vector<16xf32> to vector<16x1xf32>
    %cst_39 = arith.constant 3.200000e+01 : f32
    %103 = vector.broadcast %cst_39 : f32 to vector<16x1xf32>
    %104 = arith.divf %102, %103 : vector<16x1xf32>
    %cst_40 = arith.constant 9.99999974E-6 : f32
    %105 = vector.broadcast %cst_40 : f32 to vector<16x1xf32>
    %106 = arith.addf %104, %105 : vector<16x1xf32>
    %107 = math.rsqrt %106 : vector<16x1xf32>
    %108 = vector.broadcast %107 : vector<16x1xf32> to vector<16x32xf32>
    %109 = arith.mulf %99, %108 : vector<16x32xf32>
    %110 = vector.broadcast %92 : vector<1x32xf32> to vector<16x32xf32>
    %111 = arith.mulf %109, %110 : vector<16x32xf32>
    %112 = vector.broadcast %93 : vector<1x32xf32> to vector<16x32xf32>
    %113 = arith.addf %111, %112 : vector<16x32xf32>
    %c0_41 = arith.constant 0 : index
    %c0_42 = arith.constant 0 : index
    %c0_43 = arith.constant 0 : index
    %114 = vector.load %arg7[%c0_41, %c0_42, %c0_43] : memref<2x32x96xbf16, #tpu.memory_space<vmem>>, vector<1x32x96xbf16>
    %115 = vector.shape_cast %114 : vector<1x32x96xbf16> to vector<32x96xbf16>
    %116 = vector.extract_strided_slice %115 {offsets = [0, 0], sizes = [32, 32], strides = [1, 1]} : vector<32x96xbf16> to vector<32x32xbf16>
    %117 = arith.truncf %113 : vector<16x32xf32> to vector<16x32xbf16>
    %cst_44 = arith.constant dense<0.000000e+00> : vector<16x32xf32>
    %118 = tpu.matmul %117, %116, %cst_44 {dimension_numbers = #tpu.dot_dimension_numbers<[1], [0], [0], [1], [0, 0, 1, 1], [], []>} : vector<16x32xbf16>, vector<32x32xbf16>, vector<16x32xf32> -> vector<16x32xf32>
    %119 = vector.extract_strided_slice %26 {offsets = [1, 0], sizes = [1, 32], strides = [1, 1]} : vector<2x96xf32> to vector<1x32xf32>
    %120 = vector.broadcast %119 : vector<1x32xf32> to vector<16x32xf32>
    %121 = arith.addf %118, %120 : vector<16x32xf32>
    %122 = vector.extract_strided_slice %115 {offsets = [0, 32], sizes = [32, 64], strides = [1, 1]} : vector<32x96xbf16> to vector<32x64xbf16>
    %123 = arith.truncf %19 : vector<8x32xf32> to vector<8x32xbf16>
    %cst_45 = arith.constant dense<0.000000e+00> : vector<8x64xf32>
    %124 = tpu.matmul %123, %122, %cst_45 {dimension_numbers = #tpu.dot_dimension_numbers<[1], [0], [0], [1], [0, 0, 1, 1], [], []>} : vector<8x32xbf16>, vector<32x64xbf16>, vector<8x64xf32> -> vector<8x64xf32>
    %125 = vector.extract_strided_slice %26 {offsets = [1, 32], sizes = [1, 64], strides = [1, 1]} : vector<2x96xf32> to vector<1x64xf32>
    %126 = vector.broadcast %125 : vector<1x64xf32> to vector<8x64xf32>
    %127 = arith.addf %124, %126 : vector<8x64xf32>
    %128 = vector.extract_strided_slice %127 {offsets = [0, 0], sizes = [8, 32], strides = [1, 1]} : vector<8x64xf32> to vector<8x32xf32>
    %129 = vector.extract_strided_slice %127 {offsets = [0, 32], sizes = [8, 32], strides = [1, 1]} : vector<8x64xf32> to vector<8x32xf32>
    %130 = vector.shape_cast %121 : vector<16x32xf32> to vector<2x8x32xf32>
    %131 = vector.shape_cast %128 : vector<8x32xf32> to vector<2x4x32xf32>
    %132 = vector.shape_cast %129 : vector<8x32xf32> to vector<2x4x32xf32>
    %133 = vector.extract_strided_slice %130 {offsets = [0, 0, 0], sizes = [2, 8, 16], strides = [1, 1, 1]} : vector<2x8x32xf32> to vector<2x8x16xf32>
    %134 = vector.extract_strided_slice %131 {offsets = [0, 0, 0], sizes = [2, 4, 16], strides = [1, 1, 1]} : vector<2x4x32xf32> to vector<2x4x16xf32>
    %135 = vector.extract_strided_slice %132 {offsets = [0, 0, 0], sizes = [2, 4, 16], strides = [1, 1, 1]} : vector<2x4x32xf32> to vector<2x4x16xf32>
    %136 = arith.truncf %133 : vector<2x8x16xf32> to vector<2x8x16xbf16>
    %137 = arith.truncf %134 : vector<2x4x16xf32> to vector<2x4x16xbf16>
    "tpu.trace_start"() <{level = 10 : i32, message = "bqd,bkd->bqk"}> : () -> ()
    %cst_46 = arith.constant dense<0.000000e+00> : vector<2x8x4xf32>
    %138 = tpu.matmul %136, %137, %cst_46 {dimension_numbers = #tpu.dot_dimension_numbers<[2], [2], [1], [1], [0, 0, 0, 1, 1, 1], [0], [0]>} : vector<2x8x16xbf16>, vector<2x4x16xbf16>, vector<2x8x4xf32> -> vector<2x8x4xf32>
    "tpu.trace_stop"() : () -> ()
    %cst_47 = arith.constant 2.500000e-01 : f32
    %139 = vector.broadcast %cst_47 : f32 to vector<2x8x4xf32>
    %140 = arith.mulf %138, %139 : vector<2x8x4xf32>
    %cst_48 = arith.constant dense<0xFF800000> : vector<2x8xf32>
    %141 = vector.multi_reduction <maximumf>, %140, %cst_48 [2] : vector<2x8x4xf32> to vector<2x8xf32>
    %142 = vector.shape_cast %141 : vector<2x8xf32> to vector<2x8x1xf32>
    %143 = vector.broadcast %142 : vector<2x8x1xf32> to vector<2x8x4xf32>
    %144 = arith.subf %140, %143 : vector<2x8x4xf32>
    %145 = math.exp %144 : vector<2x8x4xf32>
    %cst_49 = arith.constant dense<0.000000e+00> : vector<2x8xf32>
    %146 = vector.multi_reduction <add>, %145, %cst_49 [2] : vector<2x8x4xf32> to vector<2x8xf32>
    %147 = vector.shape_cast %146 : vector<2x8xf32> to vector<2x8x1xf32>
    %148 = vector.broadcast %147 : vector<2x8x1xf32> to vector<2x8x4xf32>
    %149 = arith.divf %145, %148 : vector<2x8x4xf32>
    %150 = arith.truncf %149 : vector<2x8x4xf32> to vector<2x8x4xbf16>
    %151 = arith.truncf %135 : vector<2x4x16xf32> to vector<2x4x16xbf16>
    "tpu.trace_start"() <{level = 10 : i32, message = "bqk,bkd->bqd"}> : () -> ()
    %cst_50 = arith.constant dense<0.000000e+00> : vector<2x8x16xf32>
    %152 = tpu.matmul %150, %151, %cst_50 {dimension_numbers = #tpu.dot_dimension_numbers<[2], [1], [1], [2], [0, 0, 0, 1, 1, 2], [0], [0]>} : vector<2x8x4xbf16>, vector<2x4x16xbf16>, vector<2x8x16xf32> -> vector<2x8x16xf32>
    "tpu.trace_stop"() : () -> ()
    %153 = vector.extract_strided_slice %130 {offsets = [0, 0, 16], sizes = [2, 8, 16], strides = [1, 1, 1]} : vector<2x8x32xf32> to vector<2x8x16xf32>
    %154 = vector.extract_strided_slice %131 {offsets = [0, 0, 16], sizes = [2, 4, 16], strides = [1, 1, 1]} : vector<2x4x32xf32> to vector<2x4x16xf32>
    %155 = vector.extract_strided_slice %132 {offsets = [0, 0, 16], sizes = [2, 4, 16], strides = [1, 1, 1]} : vector<2x4x32xf32> to vector<2x4x16xf32>
    %156 = arith.truncf %153 : vector<2x8x16xf32> to vector<2x8x16xbf16>
    %157 = arith.truncf %154 : vector<2x4x16xf32> to vector<2x4x16xbf16>
    "tpu.trace_start"() <{level = 10 : i32, message = "bqd,bkd->bqk"}> : () -> ()
    %cst_51 = arith.constant dense<0.000000e+00> : vector<2x8x4xf32>
    %158 = tpu.matmul %156, %157, %cst_51 {dimension_numbers = #tpu.dot_dimension_numbers<[2], [2], [1], [1], [0, 0, 0, 1, 1, 1], [0], [0]>} : vector<2x8x16xbf16>, vector<2x4x16xbf16>, vector<2x8x4xf32> -> vector<2x8x4xf32>
    "tpu.trace_stop"() : () -> ()
    %cst_52 = arith.constant 2.500000e-01 : f32
    %159 = vector.broadcast %cst_52 : f32 to vector<2x8x4xf32>
    %160 = arith.mulf %158, %159 : vector<2x8x4xf32>
    %cst_53 = arith.constant dense<0xFF800000> : vector<2x8xf32>
    %161 = vector.multi_reduction <maximumf>, %160, %cst_53 [2] : vector<2x8x4xf32> to vector<2x8xf32>
    %162 = vector.shape_cast %161 : vector<2x8xf32> to vector<2x8x1xf32>
    %163 = vector.broadcast %162 : vector<2x8x1xf32> to vector<2x8x4xf32>
    %164 = arith.subf %160, %163 : vector<2x8x4xf32>
    %165 = math.exp %164 : vector<2x8x4xf32>
    %cst_54 = arith.constant dense<0.000000e+00> : vector<2x8xf32>
    %166 = vector.multi_reduction <add>, %165, %cst_54 [2] : vector<2x8x4xf32> to vector<2x8xf32>
    %167 = vector.shape_cast %166 : vector<2x8xf32> to vector<2x8x1xf32>
    %168 = vector.broadcast %167 : vector<2x8x1xf32> to vector<2x8x4xf32>
    %169 = arith.divf %165, %168 : vector<2x8x4xf32>
    %170 = arith.truncf %169 : vector<2x8x4xf32> to vector<2x8x4xbf16>
    %171 = arith.truncf %155 : vector<2x4x16xf32> to vector<2x4x16xbf16>
    "tpu.trace_start"() <{level = 10 : i32, message = "bqk,bkd->bqd"}> : () -> ()
    %cst_55 = arith.constant dense<0.000000e+00> : vector<2x8x16xf32>
    %172 = tpu.matmul %170, %171, %cst_55 {dimension_numbers = #tpu.dot_dimension_numbers<[2], [1], [1], [2], [0, 0, 0, 1, 1, 2], [0], [0]>} : vector<2x8x4xbf16>, vector<2x4x16xbf16>, vector<2x8x16xf32> -> vector<2x8x16xf32>
    "tpu.trace_stop"() : () -> ()
    %173 = tpu.concatenate %152, %172 in 2 : vector<2x8x16xf32>, vector<2x8x16xf32> -> vector<2x8x32xf32>
    %174 = vector.shape_cast %173 : vector<2x8x32xf32> to vector<16x32xf32>
    %c0_56 = arith.constant 0 : index
    %c0_57 = arith.constant 0 : index
    %c0_58 = arith.constant 0 : index
    %175 = vector.load %arg8[%c0_56, %c0_57, %c0_58] : memref<2x32x32xbf16, #tpu.memory_space<vmem>>, vector<1x32x32xbf16>
    %176 = vector.shape_cast %175 : vector<1x32x32xbf16> to vector<32x32xbf16>
    %177 = arith.truncf %174 : vector<16x32xf32> to vector<16x32xbf16>
    %cst_59 = arith.constant dense<0.000000e+00> : vector<16x32xf32>
    %178 = tpu.matmul %177, %176, %cst_59 {dimension_numbers = #tpu.dot_dimension_numbers<[1], [0], [0], [1], [0, 0, 1, 1], [], []>} : vector<16x32xbf16>, vector<32x32xbf16>, vector<16x32xf32> -> vector<16x32xf32>
    %179 = vector.extract_strided_slice %28 {offsets = [1, 0], sizes = [1, 32], strides = [1, 1]} : vector<9x32xf32> to vector<1x32xf32>
    %180 = vector.broadcast %179 : vector<1x32xf32> to vector<16x32xf32>
    %181 = arith.addf %178, %180 : vector<16x32xf32>
    %182 = arith.addf %113, %181 : vector<16x32xf32>
    %183 = vector.extract_strided_slice %28 {offsets = [5, 0], sizes = [1, 32], strides = [1, 1]} : vector<9x32xf32> to vector<1x32xf32>
    %184 = vector.extract_strided_slice %28 {offsets = [6, 0], sizes = [1, 32], strides = [1, 1]} : vector<9x32xf32> to vector<1x32xf32>
    %cst_60 = arith.constant dense<0.000000e+00> : vector<16xf32>
    %185 = vector.multi_reduction <add>, %182, %cst_60 [1] : vector<16x32xf32> to vector<16xf32>
    %186 = vector.shape_cast %185 : vector<16xf32> to vector<16x1xf32>
    %cst_61 = arith.constant 3.200000e+01 : f32
    %187 = vector.broadcast %cst_61 : f32 to vector<16x1xf32>
    %188 = arith.divf %186, %187 : vector<16x1xf32>
    %189 = vector.broadcast %188 : vector<16x1xf32> to vector<16x32xf32>
    %190 = arith.subf %182, %189 : vector<16x32xf32>
    %191 = arith.mulf %190, %190 : vector<16x32xf32>
    %cst_62 = arith.constant dense<0.000000e+00> : vector<16xf32>
    %192 = vector.multi_reduction <add>, %191, %cst_62 [1] : vector<16x32xf32> to vector<16xf32>
    %193 = vector.shape_cast %192 : vector<16xf32> to vector<16x1xf32>
    %cst_63 = arith.constant 3.200000e+01 : f32
    %194 = vector.broadcast %cst_63 : f32 to vector<16x1xf32>
    %195 = arith.divf %193, %194 : vector<16x1xf32>
    %cst_64 = arith.constant 9.99999974E-6 : f32
    %196 = vector.broadcast %cst_64 : f32 to vector<16x1xf32>
    %197 = arith.addf %195, %196 : vector<16x1xf32>
    %198 = math.rsqrt %197 : vector<16x1xf32>
    %199 = vector.broadcast %198 : vector<16x1xf32> to vector<16x32xf32>
    %200 = arith.mulf %190, %199 : vector<16x32xf32>
    %201 = vector.broadcast %183 : vector<1x32xf32> to vector<16x32xf32>
    %202 = arith.mulf %200, %201 : vector<16x32xf32>
    %203 = vector.broadcast %184 : vector<1x32xf32> to vector<16x32xf32>
    %204 = arith.addf %202, %203 : vector<16x32xf32>
    %c0_65 = arith.constant 0 : index
    %c0_66 = arith.constant 0 : index
    %c0_67 = arith.constant 0 : index
    %205 = vector.load %arg9[%c0_65, %c0_66, %c0_67] : memref<2x32x64xbf16, #tpu.memory_space<vmem>>, vector<1x32x64xbf16>
    %206 = vector.shape_cast %205 : vector<1x32x64xbf16> to vector<32x64xbf16>
    %207 = arith.truncf %204 : vector<16x32xf32> to vector<16x32xbf16>
    %cst_68 = arith.constant dense<0.000000e+00> : vector<16x64xf32>
    %208 = tpu.matmul %207, %206, %cst_68 {dimension_numbers = #tpu.dot_dimension_numbers<[1], [0], [0], [1], [0, 0, 1, 1], [], []>} : vector<16x32xbf16>, vector<32x64xbf16>, vector<16x64xf32> -> vector<16x64xf32>
    %c0_69 = arith.constant 0 : index
    %c0_70 = arith.constant 0 : index
    %c0_71 = arith.constant 0 : index
    %209 = vector.load %arg13[%c0_69, %c0_70, %c0_71] : memref<2x1x64xf32, #tpu.memory_space<vmem>>, vector<1x1x64xf32>
    %210 = vector.shape_cast %209 : vector<1x1x64xf32> to vector<1x64xf32>
    %211 = vector.broadcast %210 : vector<1x64xf32> to vector<16x64xf32>
    %212 = arith.addf %208, %211 : vector<16x64xf32>
    %cst_72 = arith.constant 0.000000e+00 : f32
    %213 = vector.broadcast %cst_72 : f32 to vector<16x64xf32>
    %214 = arith.maximumf %212, %213 : vector<16x64xf32>
    %c0_73 = arith.constant 0 : index
    %c0_74 = arith.constant 0 : index
    %c0_75 = arith.constant 0 : index
    %215 = vector.load %arg10[%c0_73, %c0_74, %c0_75] : memref<2x64x32xbf16, #tpu.memory_space<vmem>>, vector<1x64x32xbf16>
    %216 = vector.shape_cast %215 : vector<1x64x32xbf16> to vector<64x32xbf16>
    %217 = arith.truncf %214 : vector<16x64xf32> to vector<16x64xbf16>
    %cst_76 = arith.constant dense<0.000000e+00> : vector<16x32xf32>
    %218 = tpu.matmul %217, %216, %cst_76 {dimension_numbers = #tpu.dot_dimension_numbers<[1], [0], [0], [1], [0, 0, 1, 1], [], []>} : vector<16x64xbf16>, vector<64x32xbf16>, vector<16x32xf32> -> vector<16x32xf32>
    %219 = vector.extract_strided_slice %28 {offsets = [2, 0], sizes = [1, 32], strides = [1, 1]} : vector<9x32xf32> to vector<1x32xf32>
    %220 = vector.broadcast %219 : vector<1x32xf32> to vector<16x32xf32>
    %221 = arith.addf %218, %220 : vector<16x32xf32>
    %222 = arith.addf %204, %221 : vector<16x32xf32>
    %223 = vector.extract_strided_slice %28 {offsets = [7, 0], sizes = [1, 32], strides = [1, 1]} : vector<9x32xf32> to vector<1x32xf32>
    %224 = vector.extract_strided_slice %28 {offsets = [8, 0], sizes = [1, 32], strides = [1, 1]} : vector<9x32xf32> to vector<1x32xf32>
    %cst_77 = arith.constant dense<0.000000e+00> : vector<16xf32>
    %225 = vector.multi_reduction <add>, %222, %cst_77 [1] : vector<16x32xf32> to vector<16xf32>
    %226 = vector.shape_cast %225 : vector<16xf32> to vector<16x1xf32>
    %cst_78 = arith.constant 3.200000e+01 : f32
    %227 = vector.broadcast %cst_78 : f32 to vector<16x1xf32>
    %228 = arith.divf %226, %227 : vector<16x1xf32>
    %229 = vector.broadcast %228 : vector<16x1xf32> to vector<16x32xf32>
    %230 = arith.subf %222, %229 : vector<16x32xf32>
    %231 = arith.mulf %230, %230 : vector<16x32xf32>
    %cst_79 = arith.constant dense<0.000000e+00> : vector<16xf32>
    %232 = vector.multi_reduction <add>, %231, %cst_79 [1] : vector<16x32xf32> to vector<16xf32>
    %233 = vector.shape_cast %232 : vector<16xf32> to vector<16x1xf32>
    %cst_80 = arith.constant 3.200000e+01 : f32
    %234 = vector.broadcast %cst_80 : f32 to vector<16x1xf32>
    %235 = arith.divf %233, %234 : vector<16x1xf32>
    %cst_81 = arith.constant 9.99999974E-6 : f32
    %236 = vector.broadcast %cst_81 : f32 to vector<16x1xf32>
    %237 = arith.addf %235, %236 : vector<16x1xf32>
    %238 = math.rsqrt %237 : vector<16x1xf32>
    %239 = vector.broadcast %238 : vector<16x1xf32> to vector<16x32xf32>
    %240 = arith.mulf %230, %239 : vector<16x32xf32>
    %241 = vector.broadcast %223 : vector<1x32xf32> to vector<16x32xf32>
    %242 = arith.mulf %240, %241 : vector<16x32xf32>
    %243 = vector.broadcast %224 : vector<1x32xf32> to vector<16x32xf32>
    %244 = arith.addf %242, %243 : vector<16x32xf32>
    %c1 = arith.constant 1 : index
    %c0_82 = arith.constant 0 : index
    %c0_83 = arith.constant 0 : index
    %245 = vector.load %arg11[%c1, %c0_82, %c0_83] : memref<2x2x96xf32, #tpu.memory_space<vmem>>, vector<1x2x96xf32>
    %246 = vector.shape_cast %245 : vector<1x2x96xf32> to vector<2x96xf32>
    %c1_84 = arith.constant 1 : index
    %c0_85 = arith.constant 0 : index
    %c0_86 = arith.constant 0 : index
    %247 = vector.load %arg12[%c1_84, %c0_85, %c0_86] : memref<2x9x32xf32, #tpu.memory_space<vmem>>, vector<1x9x32xf32>
    %248 = vector.shape_cast %247 : vector<1x9x32xf32> to vector<9x32xf32>
    %c1_87 = arith.constant 1 : index
    %c0_88 = arith.constant 0 : index
    %c0_89 = arith.constant 0 : index
    %249 = vector.load %arg5[%c1_87, %c0_88, %c0_89] : memref<2x32x96xbf16, #tpu.memory_space<vmem>>, vector<1x32x96xbf16>
    %250 = vector.shape_cast %249 : vector<1x32x96xbf16> to vector<32x96xbf16>
    %251 = arith.truncf %244 : vector<16x32xf32> to vector<16x32xbf16>
    %cst_90 = arith.constant dense<0.000000e+00> : vector<16x96xf32>
    %252 = tpu.matmul %251, %250, %cst_90 {dimension_numbers = #tpu.dot_dimension_numbers<[1], [0], [0], [1], [0, 0, 1, 1], [], []>} : vector<16x32xbf16>, vector<32x96xbf16>, vector<16x96xf32> -> vector<16x96xf32>
    %253 = vector.extract_strided_slice %246 {offsets = [0, 0], sizes = [1, 96], strides = [1, 1]} : vector<2x96xf32> to vector<1x96xf32>
    %254 = vector.broadcast %253 : vector<1x96xf32> to vector<16x96xf32>
    %255 = arith.addf %252, %254 : vector<16x96xf32>
    %256 = vector.extract_strided_slice %255 {offsets = [0, 0], sizes = [16, 32], strides = [1, 1]} : vector<16x96xf32> to vector<16x32xf32>
    %257 = vector.extract_strided_slice %255 {offsets = [0, 32], sizes = [16, 32], strides = [1, 1]} : vector<16x96xf32> to vector<16x32xf32>
    %258 = vector.extract_strided_slice %255 {offsets = [0, 64], sizes = [16, 32], strides = [1, 1]} : vector<16x96xf32> to vector<16x32xf32>
    %259 = vector.shape_cast %256 : vector<16x32xf32> to vector<2x8x32xf32>
    %260 = vector.shape_cast %257 : vector<16x32xf32> to vector<2x8x32xf32>
    %261 = vector.shape_cast %258 : vector<16x32xf32> to vector<2x8x32xf32>
    %262 = vector.extract_strided_slice %259 {offsets = [0, 0, 0], sizes = [2, 8, 16], strides = [1, 1, 1]} : vector<2x8x32xf32> to vector<2x8x16xf32>
    %263 = vector.extract_strided_slice %260 {offsets = [0, 0, 0], sizes = [2, 8, 16], strides = [1, 1, 1]} : vector<2x8x32xf32> to vector<2x8x16xf32>
    %264 = vector.extract_strided_slice %261 {offsets = [0, 0, 0], sizes = [2, 8, 16], strides = [1, 1, 1]} : vector<2x8x32xf32> to vector<2x8x16xf32>
    %265 = arith.truncf %262 : vector<2x8x16xf32> to vector<2x8x16xbf16>
    %266 = arith.truncf %263 : vector<2x8x16xf32> to vector<2x8x16xbf16>
    "tpu.trace_start"() <{level = 10 : i32, message = "bqd,bkd->bqk"}> : () -> ()
    %cst_91 = arith.constant dense<0.000000e+00> : vector<2x8x8xf32>
    %267 = tpu.matmul %265, %266, %cst_91 {dimension_numbers = #tpu.dot_dimension_numbers<[2], [2], [1], [1], [0, 0, 0, 1, 1, 1], [0], [0]>} : vector<2x8x16xbf16>, vector<2x8x16xbf16>, vector<2x8x8xf32> -> vector<2x8x8xf32>
    "tpu.trace_stop"() : () -> ()
    %cst_92 = arith.constant 2.500000e-01 : f32
    %268 = vector.broadcast %cst_92 : f32 to vector<2x8x8xf32>
    %269 = arith.mulf %267, %268 : vector<2x8x8xf32>
    %cst_93 = arith.constant dense<0xFF800000> : vector<2x8xf32>
    %270 = vector.multi_reduction <maximumf>, %269, %cst_93 [2] : vector<2x8x8xf32> to vector<2x8xf32>
    %271 = vector.shape_cast %270 : vector<2x8xf32> to vector<2x8x1xf32>
    %272 = vector.broadcast %271 : vector<2x8x1xf32> to vector<2x8x8xf32>
    %273 = arith.subf %269, %272 : vector<2x8x8xf32>
    %274 = math.exp %273 : vector<2x8x8xf32>
    %cst_94 = arith.constant dense<0.000000e+00> : vector<2x8xf32>
    %275 = vector.multi_reduction <add>, %274, %cst_94 [2] : vector<2x8x8xf32> to vector<2x8xf32>
    %276 = vector.shape_cast %275 : vector<2x8xf32> to vector<2x8x1xf32>
    %277 = vector.broadcast %276 : vector<2x8x1xf32> to vector<2x8x8xf32>
    %278 = arith.divf %274, %277 : vector<2x8x8xf32>
    %279 = arith.truncf %278 : vector<2x8x8xf32> to vector<2x8x8xbf16>
    %280 = arith.truncf %264 : vector<2x8x16xf32> to vector<2x8x16xbf16>
    "tpu.trace_start"() <{level = 10 : i32, message = "bqk,bkd->bqd"}> : () -> ()
    %cst_95 = arith.constant dense<0.000000e+00> : vector<2x8x16xf32>
    %281 = tpu.matmul %279, %280, %cst_95 {dimension_numbers = #tpu.dot_dimension_numbers<[2], [1], [1], [2], [0, 0, 0, 1, 1, 2], [0], [0]>} : vector<2x8x8xbf16>, vector<2x8x16xbf16>, vector<2x8x16xf32> -> vector<2x8x16xf32>
    "tpu.trace_stop"() : () -> ()
    %282 = vector.extract_strided_slice %259 {offsets = [0, 0, 16], sizes = [2, 8, 16], strides = [1, 1, 1]} : vector<2x8x32xf32> to vector<2x8x16xf32>
    %283 = vector.extract_strided_slice %260 {offsets = [0, 0, 16], sizes = [2, 8, 16], strides = [1, 1, 1]} : vector<2x8x32xf32> to vector<2x8x16xf32>
    %284 = vector.extract_strided_slice %261 {offsets = [0, 0, 16], sizes = [2, 8, 16], strides = [1, 1, 1]} : vector<2x8x32xf32> to vector<2x8x16xf32>
    %285 = arith.truncf %282 : vector<2x8x16xf32> to vector<2x8x16xbf16>
    %286 = arith.truncf %283 : vector<2x8x16xf32> to vector<2x8x16xbf16>
    "tpu.trace_start"() <{level = 10 : i32, message = "bqd,bkd->bqk"}> : () -> ()
    %cst_96 = arith.constant dense<0.000000e+00> : vector<2x8x8xf32>
    %287 = tpu.matmul %285, %286, %cst_96 {dimension_numbers = #tpu.dot_dimension_numbers<[2], [2], [1], [1], [0, 0, 0, 1, 1, 1], [0], [0]>} : vector<2x8x16xbf16>, vector<2x8x16xbf16>, vector<2x8x8xf32> -> vector<2x8x8xf32>
    "tpu.trace_stop"() : () -> ()
    %cst_97 = arith.constant 2.500000e-01 : f32
    %288 = vector.broadcast %cst_97 : f32 to vector<2x8x8xf32>
    %289 = arith.mulf %287, %288 : vector<2x8x8xf32>
    %cst_98 = arith.constant dense<0xFF800000> : vector<2x8xf32>
    %290 = vector.multi_reduction <maximumf>, %289, %cst_98 [2] : vector<2x8x8xf32> to vector<2x8xf32>
    %291 = vector.shape_cast %290 : vector<2x8xf32> to vector<2x8x1xf32>
    %292 = vector.broadcast %291 : vector<2x8x1xf32> to vector<2x8x8xf32>
    %293 = arith.subf %289, %292 : vector<2x8x8xf32>
    %294 = math.exp %293 : vector<2x8x8xf32>
    %cst_99 = arith.constant dense<0.000000e+00> : vector<2x8xf32>
    %295 = vector.multi_reduction <add>, %294, %cst_99 [2] : vector<2x8x8xf32> to vector<2x8xf32>
    %296 = vector.shape_cast %295 : vector<2x8xf32> to vector<2x8x1xf32>
    %297 = vector.broadcast %296 : vector<2x8x1xf32> to vector<2x8x8xf32>
    %298 = arith.divf %294, %297 : vector<2x8x8xf32>
    %299 = arith.truncf %298 : vector<2x8x8xf32> to vector<2x8x8xbf16>
    %300 = arith.truncf %284 : vector<2x8x16xf32> to vector<2x8x16xbf16>
    "tpu.trace_start"() <{level = 10 : i32, message = "bqk,bkd->bqd"}> : () -> ()
    %cst_100 = arith.constant dense<0.000000e+00> : vector<2x8x16xf32>
    %301 = tpu.matmul %299, %300, %cst_100 {dimension_numbers = #tpu.dot_dimension_numbers<[2], [1], [1], [2], [0, 0, 0, 1, 1, 2], [0], [0]>} : vector<2x8x8xbf16>, vector<2x8x16xbf16>, vector<2x8x16xf32> -> vector<2x8x16xf32>
    "tpu.trace_stop"() : () -> ()
    %302 = tpu.concatenate %281, %301 in 2 : vector<2x8x16xf32>, vector<2x8x16xf32> -> vector<2x8x32xf32>
    %303 = vector.shape_cast %302 : vector<2x8x32xf32> to vector<16x32xf32>
    %c1_101 = arith.constant 1 : index
    %c0_102 = arith.constant 0 : index
    %c0_103 = arith.constant 0 : index
    %304 = vector.load %arg6[%c1_101, %c0_102, %c0_103] : memref<2x32x32xbf16, #tpu.memory_space<vmem>>, vector<1x32x32xbf16>
    %305 = vector.shape_cast %304 : vector<1x32x32xbf16> to vector<32x32xbf16>
    %306 = arith.truncf %303 : vector<16x32xf32> to vector<16x32xbf16>
    %cst_104 = arith.constant dense<0.000000e+00> : vector<16x32xf32>
    %307 = tpu.matmul %306, %305, %cst_104 {dimension_numbers = #tpu.dot_dimension_numbers<[1], [0], [0], [1], [0, 0, 1, 1], [], []>} : vector<16x32xbf16>, vector<32x32xbf16>, vector<16x32xf32> -> vector<16x32xf32>
    %308 = vector.extract_strided_slice %248 {offsets = [0, 0], sizes = [1, 32], strides = [1, 1]} : vector<9x32xf32> to vector<1x32xf32>
    %309 = vector.broadcast %308 : vector<1x32xf32> to vector<16x32xf32>
    %310 = arith.addf %307, %309 : vector<16x32xf32>
    %311 = arith.addf %244, %310 : vector<16x32xf32>
    %312 = vector.extract_strided_slice %248 {offsets = [3, 0], sizes = [1, 32], strides = [1, 1]} : vector<9x32xf32> to vector<1x32xf32>
    %313 = vector.extract_strided_slice %248 {offsets = [4, 0], sizes = [1, 32], strides = [1, 1]} : vector<9x32xf32> to vector<1x32xf32>
    %cst_105 = arith.constant dense<0.000000e+00> : vector<16xf32>
    %314 = vector.multi_reduction <add>, %311, %cst_105 [1] : vector<16x32xf32> to vector<16xf32>
    %315 = vector.shape_cast %314 : vector<16xf32> to vector<16x1xf32>
    %cst_106 = arith.constant 3.200000e+01 : f32
    %316 = vector.broadcast %cst_106 : f32 to vector<16x1xf32>
    %317 = arith.divf %315, %316 : vector<16x1xf32>
    %318 = vector.broadcast %317 : vector<16x1xf32> to vector<16x32xf32>
    %319 = arith.subf %311, %318 : vector<16x32xf32>
    %320 = arith.mulf %319, %319 : vector<16x32xf32>
    %cst_107 = arith.constant dense<0.000000e+00> : vector<16xf32>
    %321 = vector.multi_reduction <add>, %320, %cst_107 [1] : vector<16x32xf32> to vector<16xf32>
    %322 = vector.shape_cast %321 : vector<16xf32> to vector<16x1xf32>
    %cst_108 = arith.constant 3.200000e+01 : f32
    %323 = vector.broadcast %cst_108 : f32 to vector<16x1xf32>
    %324 = arith.divf %322, %323 : vector<16x1xf32>
    %cst_109 = arith.constant 9.99999974E-6 : f32
    %325 = vector.broadcast %cst_109 : f32 to vector<16x1xf32>
    %326 = arith.addf %324, %325 : vector<16x1xf32>
    %327 = math.rsqrt %326 : vector<16x1xf32>
    %328 = vector.broadcast %327 : vector<16x1xf32> to vector<16x32xf32>
    %329 = arith.mulf %319, %328 : vector<16x32xf32>
    %330 = vector.broadcast %312 : vector<1x32xf32> to vector<16x32xf32>
    %331 = arith.mulf %329, %330 : vector<16x32xf32>
    %332 = vector.broadcast %313 : vector<1x32xf32> to vector<16x32xf32>
    %333 = arith.addf %331, %332 : vector<16x32xf32>
    %c1_110 = arith.constant 1 : index
    %c0_111 = arith.constant 0 : index
    %c0_112 = arith.constant 0 : index
    %334 = vector.load %arg7[%c1_110, %c0_111, %c0_112] : memref<2x32x96xbf16, #tpu.memory_space<vmem>>, vector<1x32x96xbf16>
    %335 = vector.shape_cast %334 : vector<1x32x96xbf16> to vector<32x96xbf16>
    %336 = vector.extract_strided_slice %335 {offsets = [0, 0], sizes = [32, 32], strides = [1, 1]} : vector<32x96xbf16> to vector<32x32xbf16>
    %337 = arith.truncf %333 : vector<16x32xf32> to vector<16x32xbf16>
    %cst_113 = arith.constant dense<0.000000e+00> : vector<16x32xf32>
    %338 = tpu.matmul %337, %336, %cst_113 {dimension_numbers = #tpu.dot_dimension_numbers<[1], [0], [0], [1], [0, 0, 1, 1], [], []>} : vector<16x32xbf16>, vector<32x32xbf16>, vector<16x32xf32> -> vector<16x32xf32>
    %339 = vector.extract_strided_slice %246 {offsets = [1, 0], sizes = [1, 32], strides = [1, 1]} : vector<2x96xf32> to vector<1x32xf32>
    %340 = vector.broadcast %339 : vector<1x32xf32> to vector<16x32xf32>
    %341 = arith.addf %338, %340 : vector<16x32xf32>
    %342 = vector.extract_strided_slice %335 {offsets = [0, 32], sizes = [32, 64], strides = [1, 1]} : vector<32x96xbf16> to vector<32x64xbf16>
    %343 = arith.truncf %19 : vector<8x32xf32> to vector<8x32xbf16>
    %cst_114 = arith.constant dense<0.000000e+00> : vector<8x64xf32>
    %344 = tpu.matmul %343, %342, %cst_114 {dimension_numbers = #tpu.dot_dimension_numbers<[1], [0], [0], [1], [0, 0, 1, 1], [], []>} : vector<8x32xbf16>, vector<32x64xbf16>, vector<8x64xf32> -> vector<8x64xf32>
    %345 = vector.extract_strided_slice %246 {offsets = [1, 32], sizes = [1, 64], strides = [1, 1]} : vector<2x96xf32> to vector<1x64xf32>
    %346 = vector.broadcast %345 : vector<1x64xf32> to vector<8x64xf32>
    %347 = arith.addf %344, %346 : vector<8x64xf32>
    %348 = vector.extract_strided_slice %347 {offsets = [0, 0], sizes = [8, 32], strides = [1, 1]} : vector<8x64xf32> to vector<8x32xf32>
    %349 = vector.extract_strided_slice %347 {offsets = [0, 32], sizes = [8, 32], strides = [1, 1]} : vector<8x64xf32> to vector<8x32xf32>
    %350 = vector.shape_cast %341 : vector<16x32xf32> to vector<2x8x32xf32>
    %351 = vector.shape_cast %348 : vector<8x32xf32> to vector<2x4x32xf32>
    %352 = vector.shape_cast %349 : vector<8x32xf32> to vector<2x4x32xf32>
    %353 = vector.extract_strided_slice %350 {offsets = [0, 0, 0], sizes = [2, 8, 16], strides = [1, 1, 1]} : vector<2x8x32xf32> to vector<2x8x16xf32>
    %354 = vector.extract_strided_slice %351 {offsets = [0, 0, 0], sizes = [2, 4, 16], strides = [1, 1, 1]} : vector<2x4x32xf32> to vector<2x4x16xf32>
    %355 = vector.extract_strided_slice %352 {offsets = [0, 0, 0], sizes = [2, 4, 16], strides = [1, 1, 1]} : vector<2x4x32xf32> to vector<2x4x16xf32>
    %356 = arith.truncf %353 : vector<2x8x16xf32> to vector<2x8x16xbf16>
    %357 = arith.truncf %354 : vector<2x4x16xf32> to vector<2x4x16xbf16>
    "tpu.trace_start"() <{level = 10 : i32, message = "bqd,bkd->bqk"}> : () -> ()
    %cst_115 = arith.constant dense<0.000000e+00> : vector<2x8x4xf32>
    %358 = tpu.matmul %356, %357, %cst_115 {dimension_numbers = #tpu.dot_dimension_numbers<[2], [2], [1], [1], [0, 0, 0, 1, 1, 1], [0], [0]>} : vector<2x8x16xbf16>, vector<2x4x16xbf16>, vector<2x8x4xf32> -> vector<2x8x4xf32>
    "tpu.trace_stop"() : () -> ()
    %cst_116 = arith.constant 2.500000e-01 : f32
    %359 = vector.broadcast %cst_116 : f32 to vector<2x8x4xf32>
    %360 = arith.mulf %358, %359 : vector<2x8x4xf32>
    %cst_117 = arith.constant dense<0xFF800000> : vector<2x8xf32>
    %361 = vector.multi_reduction <maximumf>, %360, %cst_117 [2] : vector<2x8x4xf32> to vector<2x8xf32>
    %362 = vector.shape_cast %361 : vector<2x8xf32> to vector<2x8x1xf32>
    %363 = vector.broadcast %362 : vector<2x8x1xf32> to vector<2x8x4xf32>
    %364 = arith.subf %360, %363 : vector<2x8x4xf32>
    %365 = math.exp %364 : vector<2x8x4xf32>
    %cst_118 = arith.constant dense<0.000000e+00> : vector<2x8xf32>
    %366 = vector.multi_reduction <add>, %365, %cst_118 [2] : vector<2x8x4xf32> to vector<2x8xf32>
    %367 = vector.shape_cast %366 : vector<2x8xf32> to vector<2x8x1xf32>
    %368 = vector.broadcast %367 : vector<2x8x1xf32> to vector<2x8x4xf32>
    %369 = arith.divf %365, %368 : vector<2x8x4xf32>
    %370 = arith.truncf %369 : vector<2x8x4xf32> to vector<2x8x4xbf16>
    %371 = arith.truncf %355 : vector<2x4x16xf32> to vector<2x4x16xbf16>
    "tpu.trace_start"() <{level = 10 : i32, message = "bqk,bkd->bqd"}> : () -> ()
    %cst_119 = arith.constant dense<0.000000e+00> : vector<2x8x16xf32>
    %372 = tpu.matmul %370, %371, %cst_119 {dimension_numbers = #tpu.dot_dimension_numbers<[2], [1], [1], [2], [0, 0, 0, 1, 1, 2], [0], [0]>} : vector<2x8x4xbf16>, vector<2x4x16xbf16>, vector<2x8x16xf32> -> vector<2x8x16xf32>
    "tpu.trace_stop"() : () -> ()
    %373 = vector.extract_strided_slice %350 {offsets = [0, 0, 16], sizes = [2, 8, 16], strides = [1, 1, 1]} : vector<2x8x32xf32> to vector<2x8x16xf32>
    %374 = vector.extract_strided_slice %351 {offsets = [0, 0, 16], sizes = [2, 4, 16], strides = [1, 1, 1]} : vector<2x4x32xf32> to vector<2x4x16xf32>
    %375 = vector.extract_strided_slice %352 {offsets = [0, 0, 16], sizes = [2, 4, 16], strides = [1, 1, 1]} : vector<2x4x32xf32> to vector<2x4x16xf32>
    %376 = arith.truncf %373 : vector<2x8x16xf32> to vector<2x8x16xbf16>
    %377 = arith.truncf %374 : vector<2x4x16xf32> to vector<2x4x16xbf16>
    "tpu.trace_start"() <{level = 10 : i32, message = "bqd,bkd->bqk"}> : () -> ()
    %cst_120 = arith.constant dense<0.000000e+00> : vector<2x8x4xf32>
    %378 = tpu.matmul %376, %377, %cst_120 {dimension_numbers = #tpu.dot_dimension_numbers<[2], [2], [1], [1], [0, 0, 0, 1, 1, 1], [0], [0]>} : vector<2x8x16xbf16>, vector<2x4x16xbf16>, vector<2x8x4xf32> -> vector<2x8x4xf32>
    "tpu.trace_stop"() : () -> ()
    %cst_121 = arith.constant 2.500000e-01 : f32
    %379 = vector.broadcast %cst_121 : f32 to vector<2x8x4xf32>
    %380 = arith.mulf %378, %379 : vector<2x8x4xf32>
    %cst_122 = arith.constant dense<0xFF800000> : vector<2x8xf32>
    %381 = vector.multi_reduction <maximumf>, %380, %cst_122 [2] : vector<2x8x4xf32> to vector<2x8xf32>
    %382 = vector.shape_cast %381 : vector<2x8xf32> to vector<2x8x1xf32>
    %383 = vector.broadcast %382 : vector<2x8x1xf32> to vector<2x8x4xf32>
    %384 = arith.subf %380, %383 : vector<2x8x4xf32>
    %385 = math.exp %384 : vector<2x8x4xf32>
    %cst_123 = arith.constant dense<0.000000e+00> : vector<2x8xf32>
    %386 = vector.multi_reduction <add>, %385, %cst_123 [2] : vector<2x8x4xf32> to vector<2x8xf32>
    %387 = vector.shape_cast %386 : vector<2x8xf32> to vector<2x8x1xf32>
    %388 = vector.broadcast %387 : vector<2x8x1xf32> to vector<2x8x4xf32>
    %389 = arith.divf %385, %388 : vector<2x8x4xf32>
    %390 = arith.truncf %389 : vector<2x8x4xf32> to vector<2x8x4xbf16>
    %391 = arith.truncf %375 : vector<2x4x16xf32> to vector<2x4x16xbf16>
    "tpu.trace_start"() <{level = 10 : i32, message = "bqk,bkd->bqd"}> : () -> ()
    %cst_124 = arith.constant dense<0.000000e+00> : vector<2x8x16xf32>
    %392 = tpu.matmul %390, %391, %cst_124 {dimension_numbers = #tpu.dot_dimension_numbers<[2], [1], [1], [2], [0, 0, 0, 1, 1, 2], [0], [0]>} : vector<2x8x4xbf16>, vector<2x4x16xbf16>, vector<2x8x16xf32> -> vector<2x8x16xf32>
    "tpu.trace_stop"() : () -> ()
    %393 = tpu.concatenate %372, %392 in 2 : vector<2x8x16xf32>, vector<2x8x16xf32> -> vector<2x8x32xf32>
    %394 = vector.shape_cast %393 : vector<2x8x32xf32> to vector<16x32xf32>
    %c1_125 = arith.constant 1 : index
    %c0_126 = arith.constant 0 : index
    %c0_127 = arith.constant 0 : index
    %395 = vector.load %arg8[%c1_125, %c0_126, %c0_127] : memref<2x32x32xbf16, #tpu.memory_space<vmem>>, vector<1x32x32xbf16>
    %396 = vector.shape_cast %395 : vector<1x32x32xbf16> to vector<32x32xbf16>
    %397 = arith.truncf %394 : vector<16x32xf32> to vector<16x32xbf16>
    %cst_128 = arith.constant dense<0.000000e+00> : vector<16x32xf32>
    %398 = tpu.matmul %397, %396, %cst_128 {dimension_numbers = #tpu.dot_dimension_numbers<[1], [0], [0], [1], [0, 0, 1, 1], [], []>} : vector<16x32xbf16>, vector<32x32xbf16>, vector<16x32xf32> -> vector<16x32xf32>
    %399 = vector.extract_strided_slice %248 {offsets = [1, 0], sizes = [1, 32], strides = [1, 1]} : vector<9x32xf32> to vector<1x32xf32>
    %400 = vector.broadcast %399 : vector<1x32xf32> to vector<16x32xf32>
    %401 = arith.addf %398, %400 : vector<16x32xf32>
    %402 = arith.addf %333, %401 : vector<16x32xf32>
    %403 = vector.extract_strided_slice %248 {offsets = [5, 0], sizes = [1, 32], strides = [1, 1]} : vector<9x32xf32> to vector<1x32xf32>
    %404 = vector.extract_strided_slice %248 {offsets = [6, 0], sizes = [1, 32], strides = [1, 1]} : vector<9x32xf32> to vector<1x32xf32>
    %cst_129 = arith.constant dense<0.000000e+00> : vector<16xf32>
    %405 = vector.multi_reduction <add>, %402, %cst_129 [1] : vector<16x32xf32> to vector<16xf32>
    %406 = vector.shape_cast %405 : vector<16xf32> to vector<16x1xf32>
    %cst_130 = arith.constant 3.200000e+01 : f32
    %407 = vector.broadcast %cst_130 : f32 to vector<16x1xf32>
    %408 = arith.divf %406, %407 : vector<16x1xf32>
    %409 = vector.broadcast %408 : vector<16x1xf32> to vector<16x32xf32>
    %410 = arith.subf %402, %409 : vector<16x32xf32>
    %411 = arith.mulf %410, %410 : vector<16x32xf32>
    %cst_131 = arith.constant dense<0.000000e+00> : vector<16xf32>
    %412 = vector.multi_reduction <add>, %411, %cst_131 [1] : vector<16x32xf32> to vector<16xf32>
    %413 = vector.shape_cast %412 : vector<16xf32> to vector<16x1xf32>
    %cst_132 = arith.constant 3.200000e+01 : f32
    %414 = vector.broadcast %cst_132 : f32 to vector<16x1xf32>
    %415 = arith.divf %413, %414 : vector<16x1xf32>
    %cst_133 = arith.constant 9.99999974E-6 : f32
    %416 = vector.broadcast %cst_133 : f32 to vector<16x1xf32>
    %417 = arith.addf %415, %416 : vector<16x1xf32>
    %418 = math.rsqrt %417 : vector<16x1xf32>
    %419 = vector.broadcast %418 : vector<16x1xf32> to vector<16x32xf32>
    %420 = arith.mulf %410, %419 : vector<16x32xf32>
    %421 = vector.broadcast %403 : vector<1x32xf32> to vector<16x32xf32>
    %422 = arith.mulf %420, %421 : vector<16x32xf32>
    %423 = vector.broadcast %404 : vector<1x32xf32> to vector<16x32xf32>
    %424 = arith.addf %422, %423 : vector<16x32xf32>
    %c1_134 = arith.constant 1 : index
    %c0_135 = arith.constant 0 : index
    %c0_136 = arith.constant 0 : index
    %425 = vector.load %arg9[%c1_134, %c0_135, %c0_136] : memref<2x32x64xbf16, #tpu.memory_space<vmem>>, vector<1x32x64xbf16>
    %426 = vector.shape_cast %425 : vector<1x32x64xbf16> to vector<32x64xbf16>
    %427 = arith.truncf %424 : vector<16x32xf32> to vector<16x32xbf16>
    %cst_137 = arith.constant dense<0.000000e+00> : vector<16x64xf32>
    %428 = tpu.matmul %427, %426, %cst_137 {dimension_numbers = #tpu.dot_dimension_numbers<[1], [0], [0], [1], [0, 0, 1, 1], [], []>} : vector<16x32xbf16>, vector<32x64xbf16>, vector<16x64xf32> -> vector<16x64xf32>
    %c1_138 = arith.constant 1 : index
    %c0_139 = arith.constant 0 : index
    %c0_140 = arith.constant 0 : index
    %429 = vector.load %arg13[%c1_138, %c0_139, %c0_140] : memref<2x1x64xf32, #tpu.memory_space<vmem>>, vector<1x1x64xf32>
    %430 = vector.shape_cast %429 : vector<1x1x64xf32> to vector<1x64xf32>
    %431 = vector.broadcast %430 : vector<1x64xf32> to vector<16x64xf32>
    %432 = arith.addf %428, %431 : vector<16x64xf32>
    %cst_141 = arith.constant 0.000000e+00 : f32
    %433 = vector.broadcast %cst_141 : f32 to vector<16x64xf32>
    %434 = arith.maximumf %432, %433 : vector<16x64xf32>
    %c1_142 = arith.constant 1 : index
    %c0_143 = arith.constant 0 : index
    %c0_144 = arith.constant 0 : index
    %435 = vector.load %arg10[%c1_142, %c0_143, %c0_144] : memref<2x64x32xbf16, #tpu.memory_space<vmem>>, vector<1x64x32xbf16>
    %436 = vector.shape_cast %435 : vector<1x64x32xbf16> to vector<64x32xbf16>
    %437 = arith.truncf %434 : vector<16x64xf32> to vector<16x64xbf16>
    %cst_145 = arith.constant dense<0.000000e+00> : vector<16x32xf32>
    %438 = tpu.matmul %437, %436, %cst_145 {dimension_numbers = #tpu.dot_dimension_numbers<[1], [0], [0], [1], [0, 0, 1, 1], [], []>} : vector<16x64xbf16>, vector<64x32xbf16>, vector<16x32xf32> -> vector<16x32xf32>
    %439 = vector.extract_strided_slice %248 {offsets = [2, 0], sizes = [1, 32], strides = [1, 1]} : vector<9x32xf32> to vector<1x32xf32>
    %440 = vector.broadcast %439 : vector<1x32xf32> to vector<16x32xf32>
    %441 = arith.addf %438, %440 : vector<16x32xf32>
    %442 = arith.addf %424, %441 : vector<16x32xf32>
    %443 = vector.extract_strided_slice %248 {offsets = [7, 0], sizes = [1, 32], strides = [1, 1]} : vector<9x32xf32> to vector<1x32xf32>
    %444 = vector.extract_strided_slice %248 {offsets = [8, 0], sizes = [1, 32], strides = [1, 1]} : vector<9x32xf32> to vector<1x32xf32>
    %cst_146 = arith.constant dense<0.000000e+00> : vector<16xf32>
    %445 = vector.multi_reduction <add>, %442, %cst_146 [1] : vector<16x32xf32> to vector<16xf32>
    %446 = vector.shape_cast %445 : vector<16xf32> to vector<16x1xf32>
    %cst_147 = arith.constant 3.200000e+01 : f32
    %447 = vector.broadcast %cst_147 : f32 to vector<16x1xf32>
    %448 = arith.divf %446, %447 : vector<16x1xf32>
    %449 = vector.broadcast %448 : vector<16x1xf32> to vector<16x32xf32>
    %450 = arith.subf %442, %449 : vector<16x32xf32>
    %451 = arith.mulf %450, %450 : vector<16x32xf32>
    %cst_148 = arith.constant dense<0.000000e+00> : vector<16xf32>
    %452 = vector.multi_reduction <add>, %451, %cst_148 [1] : vector<16x32xf32> to vector<16xf32>
    %453 = vector.shape_cast %452 : vector<16xf32> to vector<16x1xf32>
    %cst_149 = arith.constant 3.200000e+01 : f32
    %454 = vector.broadcast %cst_149 : f32 to vector<16x1xf32>
    %455 = arith.divf %453, %454 : vector<16x1xf32>
    %cst_150 = arith.constant 9.99999974E-6 : f32
    %456 = vector.broadcast %cst_150 : f32 to vector<16x1xf32>
    %457 = arith.addf %455, %456 : vector<16x1xf32>
    %458 = math.rsqrt %457 : vector<16x1xf32>
    %459 = vector.broadcast %458 : vector<16x1xf32> to vector<16x32xf32>
    %460 = arith.mulf %450, %459 : vector<16x32xf32>
    %461 = vector.broadcast %443 : vector<1x32xf32> to vector<16x32xf32>
    %462 = arith.mulf %460, %461 : vector<16x32xf32>
    %463 = vector.broadcast %444 : vector<1x32xf32> to vector<16x32xf32>
    %464 = arith.addf %462, %463 : vector<16x32xf32>
    %c0_151 = arith.constant 0 : index
    %c0_152 = arith.constant 0 : index
    %465 = vector.load %arg14[%c0_151, %c0_152] : memref<2x32xf32, #tpu.memory_space<vmem>>, vector<2x32xf32>
    %466 = vector.extract_strided_slice %465 {offsets = [0, 0], sizes = [1, 32], strides = [1, 1]} : vector<2x32xf32> to vector<1x32xf32>
    %467 = vector.extract_strided_slice %465 {offsets = [1, 0], sizes = [1, 32], strides = [1, 1]} : vector<2x32xf32> to vector<1x32xf32>
    %cst_153 = arith.constant dense<0.000000e+00> : vector<16xf32>
    %468 = vector.multi_reduction <add>, %464, %cst_153 [1] : vector<16x32xf32> to vector<16xf32>
    %469 = vector.shape_cast %468 : vector<16xf32> to vector<16x1xf32>
    %cst_154 = arith.constant 3.200000e+01 : f32
    %470 = vector.broadcast %cst_154 : f32 to vector<16x1xf32>
    %471 = arith.divf %469, %470 : vector<16x1xf32>
    %472 = vector.broadcast %471 : vector<16x1xf32> to vector<16x32xf32>
    %473 = arith.subf %464, %472 : vector<16x32xf32>
    %474 = arith.mulf %473, %473 : vector<16x32xf32>
    %cst_155 = arith.constant dense<0.000000e+00> : vector<16xf32>
    %475 = vector.multi_reduction <add>, %474, %cst_155 [1] : vector<16x32xf32> to vector<16xf32>
    %476 = vector.shape_cast %475 : vector<16xf32> to vector<16x1xf32>
    %cst_156 = arith.constant 3.200000e+01 : f32
    %477 = vector.broadcast %cst_156 : f32 to vector<16x1xf32>
    %478 = arith.divf %476, %477 : vector<16x1xf32>
    %cst_157 = arith.constant 9.99999974E-6 : f32
    %479 = vector.broadcast %cst_157 : f32 to vector<16x1xf32>
    %480 = arith.addf %478, %479 : vector<16x1xf32>
    %481 = math.rsqrt %480 : vector<16x1xf32>
    %482 = vector.broadcast %481 : vector<16x1xf32> to vector<16x32xf32>
    %483 = arith.mulf %473, %482 : vector<16x32xf32>
    %484 = vector.broadcast %466 : vector<1x32xf32> to vector<16x32xf32>
    %485 = arith.mulf %483, %484 : vector<16x32xf32>
    %486 = vector.broadcast %467 : vector<1x32xf32> to vector<16x32xf32>
    %487 = arith.addf %485, %486 : vector<16x32xf32>
    %c0_158 = arith.constant 0 : index
    %c0_159 = arith.constant 0 : index
    %488 = vector.load %arg15[%c0_158, %c0_159] : memref<32x8xbf16, #tpu.memory_space<vmem>>, vector<32x8xbf16>
    %489 = arith.truncf %487 : vector<16x32xf32> to vector<16x32xbf16>
    %cst_160 = arith.constant dense<0.000000e+00> : vector<16x8xf32>
    %490 = tpu.matmul %489, %488, %cst_160 {dimension_numbers = #tpu.dot_dimension_numbers<[1], [0], [0], [1], [0, 0, 1, 1], [], []>} : vector<16x32xbf16>, vector<32x8xbf16>, vector<16x8xf32> -> vector<16x8xf32>
    %c0_161 = arith.constant 0 : index
    %c0_162 = arith.constant 0 : index
    %491 = vector.load %arg16[%c0_161, %c0_162] : memref<1x8xf32, #tpu.memory_space<vmem>>, vector<1x8xf32>
    %492 = vector.broadcast %491 : vector<1x8xf32> to vector<16x8xf32>
    %493 = arith.addf %490, %492 : vector<16x8xf32>
    %494 = arith.negf %493 : vector<16x8xf32>
    %495 = math.exp %494 : vector<16x8xf32>
    %cst_163 = arith.constant 1.000000e+00 : f32
    %496 = vector.broadcast %cst_163 : f32 to vector<16x8xf32>
    %497 = arith.addf %496, %495 : vector<16x8xf32>
    %498 = arith.divf %496, %497 : vector<16x8xf32>
    %499 = vector.shape_cast %498 : vector<16x8xf32> to vector<2x8x8xf32>
    %c0_164 = arith.constant 0 : index
    %c0_165 = arith.constant 0 : index
    %c0_166 = arith.constant 0 : index
    %500 = vector.load %arg17[%c0_164, %c0_165, %c0_166] : memref<2x8x8xf32, #tpu.memory_space<vmem>>, vector<2x8x8xf32>
    tpu.vector_store %arg17[%c0_164, %c0_165, %c0_166], %499 {strides = array<i32>} : memref<2x8x8xf32, #tpu.memory_space<vmem>>, vector<2x8x8xf32>,
    return
  }
}

</mosaic_0001>

<llo_original>
// kernel: tpu_custom_call.1
$region0: #{tpu_custom_call.1}
  #allocation0 [shape = 'u32[]', space=smem, size = 0x4, offset = 0x4, fixed_abs, tag = 'smem constant byte address 0x4 - core index']
  #allocation1 [shape = 'u32[144,128]{1,0:T(1,128)}', space=vmem, size = 0x12000, scoped, tag = 'internal scratch']
  %s0 = inlined_call_operand.hbm [shape: f32[2,4,32], index: 0, kind: input, shape index: {}]
  %s1 = inlined_call_operand.vmem [shape: f32[2,1,32], index: 1, kind: input, shape index: {}]
  %s2 = inlined_call_operand.vmem [shape: f32[8,32], index: 2, kind: input, shape index: {}]
  %s3 = inlined_call_operand.vmem [shape: bf16[64,32], index: 3, kind: input, shape index: {}]
  %s4 = inlined_call_operand.hbm [shape: f32[1,32], index: 4, kind: input, shape index: {}]
  %s5 = inlined_call_operand.vmem [shape: bf16[2,32,96], index: 5, kind: input, shape index: {}]
  %s6 = inlined_call_operand.vmem [shape: bf16[2,32,32], index: 6, kind: input, shape index: {}]
  %s7 = inlined_call_operand.vmem [shape: bf16[2,32,96], index: 7, kind: input, shape index: {}]
  %s8 = inlined_call_operand.vmem [shape: bf16[2,32,32], index: 8, kind: input, shape index: {}]
  %s9 = inlined_call_operand.vmem [shape: bf16[2,32,64], index: 9, kind: input, shape index: {}]
  %s10 = inlined_call_operand.vmem [shape: bf16[2,64,32], index: 10, kind: input, shape index: {}]
  %s11 = inlined_call_operand.vmem [shape: f32[2,2,96], index: 11, kind: input, shape index: {}]
  %s12 = inlined_call_operand.vmem [shape: f32[2,9,32], index: 12, kind: input, shape index: {}]
  %s13 = inlined_call_operand.vmem [shape: f32[2,1,64], index: 13, kind: input, shape index: {}]
  %s14 = inlined_call_operand.vmem [shape: f32[2,32], index: 14, kind: input, shape index: {}]
  %s15 = inlined_call_operand.vmem [shape: bf16[32,8], index: 15, kind: input, shape index: {}]
  %s16 = inlined_call_operand.vmem [shape: f32[1,8], index: 16, kind: input, shape index: {}]
  %s17 = inlined_call_operand.hbm [shape: f32[2,8,8], index: 17, kind: output, shape index: {}]
  %s18 = sld [smem:[#allocation0]]
  $region86: #{tpu_custom_call.1} parent=0
    _
  %s20 = ssub.s32 1, %s18
  %s21 = scalar_select 0, %s20, %s18
  $region1: #{tpu_custom_call.1} parent=0
    #allocation2 [shape = 'u8[4096]{0}', space=vmem, size = 0x1000, scoped, tag = 'input window, operand 0, single buffered']
    #allocation3 [shape = 's32[1]{0}', space=sflag, size = 0x4, scoped, tag = 'scoped memory for tpu_custom_call.1']
    #allocation4 [shape = 's32[1]{0}', space=sflag, size = 0x4, scoped, tag = 'scoped memory for tpu_custom_call.1']
    #allocation5 [shape = 'u8[512]{0}', space=vmem, size = 0x400, scoped, tag = 'input window, operand 4, single buffered']
    #allocation6 [shape = 's32[1]{0}', space=sflag, size = 0x4, scoped, tag = 'scoped memory for tpu_custom_call.1']
    #allocation7 [shape = 'u8[8192]{0}', space=vmem, size = 0x2000, scoped, tag = 'output window, operand 0, single buffered']
    %22 = vsyncpa [#allocation3], 0
    %23 = vsyncpa [#allocation6], 0
    %24 = vsyncpa [#allocation4], 0
    // Predicated region
    $region2: #{tpu_custom_call.1} parent=1 // pred_check
      _
    $region3: #{tpu_custom_call.1} parent=1 // pred_check_branch
      %26 = sbr.rel (0) target = $region5
    $region4: #{tpu_custom_call.1} parent=1 // pred_region
      %s28 = ssub.s32 128, 128
      %29 = vsyncadd [#allocation3], %s28
      %s30 = sshll.u32 [#allocation2], 4
      %s31 = int_to_ptr.vmem [resolvable:$true] %s30
      %36 = dma.hbm_to_vmem [thread:$0]  %s0, 128, %s31, [#allocation3], 64, 64, 4
    $region5: #{tpu_custom_call.1} parent=1 // pred_fallthru
      _
    // Predicated region
    $region6: #{tpu_custom_call.1} parent=1 // pred_check
      _
    $region7: #{tpu_custom_call.1} parent=1 // pred_check_branch
      %38 = sbr.rel (0) target = $region9
    $region8: #{tpu_custom_call.1} parent=1 // pred_region
      _
    $region9: #{tpu_custom_call.1} parent=1 // pred_fallthru
      _
    // Predicated region
    $region10: #{tpu_custom_call.1} parent=1 // pred_check
      _
    $region11: #{tpu_custom_call.1} parent=1 // pred_check_branch
      %40 = sbr.rel (0) target = $region13
    $region12: #{tpu_custom_call.1} parent=1 // pred_region
      _
    $region13: #{tpu_custom_call.1} parent=1 // pred_fallthru
      _
    // Predicated region
    $region14: #{tpu_custom_call.1} parent=1 // pred_check
      _
    $region15: #{tpu_custom_call.1} parent=1 // pred_check_branch
      %42 = sbr.rel (0) target = $region17
    $region16: #{tpu_custom_call.1} parent=1 // pred_region
      _
    $region17: #{tpu_custom_call.1} parent=1 // pred_fallthru
      _
    // Predicated region
    $region18: #{tpu_custom_call.1} parent=1 // pred_check
      _
    $region19: #{tpu_custom_call.1} parent=1 // pred_check_branch
      %44 = sbr.rel (0) target = $region21
    $region20: #{tpu_custom_call.1} parent=1 // pred_region
      %s46 = ssub.s32 16, 16
      %47 = vsyncadd [#allocation6], %s46
      %s49 = sshll.u32 [#allocation5], 4
      %s50 = int_to_ptr.vmem [resolvable:$true] %s49
      %52 = dma.hbm_to_vmem [thread:$0]  %s4, 16, %s50, [#allocation6]
    $region21: #{tpu_custom_call.1} parent=1 // pred_fallthru
      _
    // Predicated region
    $region22: #{tpu_custom_call.1} parent=1 // pred_check
      _
    $region23: #{tpu_custom_call.1} parent=1 // pred_check_branch
      %54 = sbr.rel (0) target = $region25
    $region24: #{tpu_custom_call.1} parent=1 // pred_region
      _
    $region25: #{tpu_custom_call.1} parent=1 // pred_fallthru
      _
    // Predicated region
    $region26: #{tpu_custom_call.1} parent=1 // pred_check
      _
    $region27: #{tpu_custom_call.1} parent=1 // pred_check_branch
      %56 = sbr.rel (0) target = $region29
    $region28: #{tpu_custom_call.1} parent=1 // pred_region
      _
    $region29: #{tpu_custom_call.1} parent=1 // pred_fallthru
      _
    // Predicated region
    $region30: #{tpu_custom_call.1} parent=1 // pred_check
      _
    $region31: #{tpu_custom_call.1} parent=1 // pred_check_branch
      %58 = sbr.rel (0) target = $region33
    $region32: #{tpu_custom_call.1} parent=1 // pred_region
      _
    $region33: #{tpu_custom_call.1} parent=1 // pred_fallthru
      _
    // Predicated region
    $region34: #{tpu_custom_call.1} parent=1 // pred_check
      _
    $region35: #{tpu_custom_call.1} parent=1 // pred_check_branch
      %60 = sbr.rel (0) target = $region37
    $region36: #{tpu_custom_call.1} parent=1 // pred_region
      _
    $region37: #{tpu_custom_call.1} parent=1 // pred_fallthru
      _
    // Predicated region
    $region38: #{tpu_custom_call.1} parent=1 // pred_check
      _
    $region39: #{tpu_custom_call.1} parent=1 // pred_check_branch
      %62 = sbr.rel (0) target = $region41
    $region40: #{tpu_custom_call.1} parent=1 // pred_region
      _
    $region41: #{tpu_custom_call.1} parent=1 // pred_fallthru
      _
    // Predicated region
    $region42: #{tpu_custom_call.1} parent=1 // pred_check
      _
    $region43: #{tpu_custom_call.1} parent=1 // pred_check_branch
      %64 = sbr.rel (0) target = $region45
    $region44: #{tpu_custom_call.1} parent=1 // pred_region
      _
    $region45: #{tpu_custom_call.1} parent=1 // pred_fallthru
      _
    // Predicated region
    $region46: #{tpu_custom_call.1} parent=1 // pred_check
      _
    $region47: #{tpu_custom_call.1} parent=1 // pred_check_branch
      %66 = sbr.rel (0) target = $region49
    $region48: #{tpu_custom_call.1} parent=1 // pred_region
      _
    $region49: #{tpu_custom_call.1} parent=1 // pred_fallthru
      _
    // Predicated region
    $region50: #{tpu_custom_call.1} parent=1 // pred_check
      _
    $region51: #{tpu_custom_call.1} parent=1 // pred_check_branch
      %68 = sbr.rel (0) target = $region53
    $region52: #{tpu_custom_call.1} parent=1 // pred_region
      _
    $region53: #{tpu_custom_call.1} parent=1 // pred_fallthru
      _
    // Predicated region
    $region54: #{tpu_custom_call.1} parent=1 // pred_check
      _
    $region55: #{tpu_custom_call.1} parent=1 // pred_check_branch
      %70 = sbr.rel (0) target = $region57
    $region56: #{tpu_custom_call.1} parent=1 // pred_region
      _
    $region57: #{tpu_custom_call.1} parent=1 // pred_fallthru
      _
    // Predicated region
    $region58: #{tpu_custom_call.1} parent=1 // pred_check
      _
    $region59: #{tpu_custom_call.1} parent=1 // pred_check_branch
      %72 = sbr.rel (0) target = $region61
    $region60: #{tpu_custom_call.1} parent=1 // pred_region
      _
    $region61: #{tpu_custom_call.1} parent=1 // pred_fallthru
      _
    // Predicated region
    $region62: #{tpu_custom_call.1} parent=1 // pred_check
      _
    $region63: #{tpu_custom_call.1} parent=1 // pred_check_branch
      %74 = sbr.rel (0) target = $region65
    $region64: #{tpu_custom_call.1} parent=1 // pred_region
      _
    $region65: #{tpu_custom_call.1} parent=1 // pred_fallthru
      _
    // Predicated region
    $region66: #{tpu_custom_call.1} parent=1 // pred_check
      _
    $region67: #{tpu_custom_call.1} parent=1 // pred_check_branch
      %76 = sbr.rel (0) target = $region69
    $region68: #{tpu_custom_call.1} parent=1 // pred_region
      _
    $region69: #{tpu_custom_call.1} parent=1 // pred_fallthru
      _
    // Predicated region
    $region70: #{tpu_custom_call.1} parent=1 // pred_check
      _
    $region71: #{tpu_custom_call.1} parent=1 // pred_check_branch
      %78 = sbr.rel (0) target = $region73
    $region72: #{tpu_custom_call.1} parent=1 // pred_region
      %79 = dma.done [#allocation3], 128
    $region73: #{tpu_custom_call.1} parent=1 // pred_fallthru
      _
    // Predicated region
    $region74: #{tpu_custom_call.1} parent=1 // pred_check
      _
    $region75: #{tpu_custom_call.1} parent=1 // pred_check_branch
      %81 = sbr.rel (0) target = $region77
    $region76: #{tpu_custom_call.1} parent=1 // pred_region
      %82 = dma.done [#allocation6], 16
    $region77: #{tpu_custom_call.1} parent=1 // pred_fallthru
      _
    %v84 = vld [vmem:[%s3] sm:$0xf]
    %v85 = vld [vmem:[%s3 + $0x4] sm:$0xf]
    %v86 = vld [vmem:[%s3 + $0x8] sm:$0xf]
    %v87 = vld [vmem:[%s3 + $0xc] sm:$0xf]
    %v88 = vld [vmem:[%s3 + $0x10] sm:$0xf]
    %v89 = vld [vmem:[%s3 + $0x14] sm:$0xf]
    %v90 = vld [vmem:[%s3 + $0x18] sm:$0xf]
    %v91 = vld [vmem:[%s3 + $0x1c] sm:$0xf]
    %v92 = vld [vmem:[#allocation2] sm:$0xf]
    %v93 = vld [vmem:[#allocation2 + $0x4] sm:$0xf]
    %v96 = vcombine.low %v92, %v93
    %v98 = vpack.c.bf16 %v96, %v96
    %v103 = vunpack.c.l.b16 %v84
    %v104 = vunpack.c.l.b16 %v85
    %v105 = vunpack.c.l.b16 %v86
    %v106 = vunpack.c.l.b16 %v87
    %v107 = vpack.c.b16 %v104, %v103
    %v108 = vpack.c.b16 %v106, %v105
    %vm111 = vcmask 261120
    %v113 = vsel %vm111, %v98, 0
    %115 = vmatprep.subr.bf16.mxu0 0
    %116 = vmatpush1.bf16.msra.mxu0 %v107
    %117 = vmatprep.subr.bf16.mxu0 0
    %118 = vmatpush1.bf16.msra.mxu0 %v108
    %119 = vmatprep.subr.bf16.mxu0 0
    %120 = vmatpush1.bf16.msra.mxu0 0
    %121 = vmatprep.subr.bf16.mxu0 0
    %122 = vmatpush1.bf16.msra.mxu0 0
    %123 = vmatprep.subr.bf16.mxu0 0
    %124 = vmatpush1.bf16.msra.mxu0 0
    %125 = vmatprep.subr.bf16.mxu0 0
    %126 = vmatpush1.bf16.msra.mxu0 0
    %127 = vmatprep.subr.bf16.mxu0 0
    %128 = vmatpush1.bf16.msra.mxu0 0
    %129 = vmatprep.subr.bf16.mxu0 0
    %130 = vmatpush1.bf16.msra.mxu0 0
    %131 = vmatprep.subr.bf16.mxu0 0
    %132 = vmatpush1.bf16.msra.mxu0 0
    %133 = vmatprep.subr.bf16.mxu0 0
    %134 = vmatpush1.bf16.msra.mxu0 0
    %135 = vmatprep.subr.bf16.mxu0 0
    %136 = vmatpush1.bf16.msra.mxu0 0
    %137 = vmatprep.subr.bf16.mxu0 0
    %138 = vmatpush1.bf16.msra.mxu0 0
    %139 = vmatprep.subr.bf16.mxu0 0
    %140 = vmatpush1.bf16.msra.mxu0 0
    %141 = vmatprep.subr.bf16.mxu0 0
    %142 = vmatpush1.bf16.msra.mxu0 0
    %143 = vmatprep.subr.bf16.mxu0 0
    %144 = vmatpush1.bf16.msra.mxu0 0
    %145 = vmatprep.subr.bf16.mxu0 0
    %146 = vmatpush1.bf16.msra.mxu0 0
    %147 = vmatprep.mubr.bf16.mxu0 0
    %148 = vmatmul.mubr.bf16.gmra.mrb[0].mxu0 %v113
    %v149 = vpop.f32.mrb[0].mxu0
    %v150 = vadd.f32 0.0, %v149
    %v151 = vpop.f32.mrb[0].mxu0
    %v152 = vpop.f32.mrb[0].mxu0
    %v153 = vpop.f32.mrb[0].mxu0
    %154 = vdwg.mxu0
    %v156 = vcombine.high %v150, %v150
    %v158 = vld [vmem:[%s1] sm:$0x1]
    %v159 = vld [vmem:[%s1 + $0x1] sm:$0x1]
    %v160 = vpack.c.bf16 %v158, %v158
    %v161 = vpack.c.bf16 %v159, %v159
    %v164 = vunpack.c.l.b16 %v160
    %v165 = vunpack.c.l.b16 %v161
    %v166 = vrot.slane %v165, 7
    %vm167 = vcmask 1041409
    %v168 = vsel %vm167, %v166, %v164
    %v169 = vpack.c.b16 %v168, %v168
    %v174 = vunpack.c.l.b16 %v88
    %v175 = vunpack.c.l.b16 %v89
    %v176 = vunpack.c.l.b16 %v90
    %v177 = vunpack.c.l.b16 %v91
    %v178 = vpack.c.b16 %v175, %v174
    %v179 = vpack.c.b16 %v177, %v176
    %v183 = vsel %vm111, %v169, 0
    %185 = vmatprep.subr.bf16.mxu0 0
    %186 = vmatpush1.bf16.msra.mxu0 %v178
    %187 = vmatprep.subr.bf16.mxu0 0
    %188 = vmatpush1.bf16.msra.mxu0 %v179
    %189 = vmatprep.subr.bf16.mxu0 0
    %190 = vmatpush1.bf16.msra.mxu0 0
    %191 = vmatprep.subr.bf16.mxu0 0
    %192 = vmatpush1.bf16.msra.mxu0 0
    %193 = vmatprep.subr.bf16.mxu0 0
    %194 = vmatpush1.bf16.msra.mxu0 0
    %195 = vmatprep.subr.bf16.mxu0 0
    %196 = vmatpush1.bf16.msra.mxu0 0
    %197 = vmatprep.subr.bf16.mxu0 0
    %198 = vmatpush1.bf16.msra.mxu0 0
    %199 = vmatprep.subr.bf16.mxu0 0
    %200 = vmatpush1.bf16.msra.mxu0 0
    %201 = vmatprep.subr.bf16.mxu0 0
    %202 = vmatpush1.bf16.msra.mxu0 0
    %203 = vmatprep.subr.bf16.mxu0 0
    %204 = vmatpush1.bf16.msra.mxu0 0
    %205 = vmatprep.subr.bf16.mxu0 0
    %206 = vmatpush1.bf16.msra.mxu0 0
    %207 = vmatprep.subr.bf16.mxu0 0
    %208 = vmatpush1.bf16.msra.mxu0 0
    %209 = vmatprep.subr.bf16.mxu0 0
    %210 = vmatpush1.bf16.msra.mxu0 0
    %211 = vmatprep.subr.bf16.mxu0 0
    %212 = vmatpush1.bf16.msra.mxu0 0
    %213 = vmatprep.subr.bf16.mxu0 0
    %214 = vmatpush1.bf16.msra.mxu0 0
    %215 = vmatprep.subr.bf16.mxu0 0
    %216 = vmatpush1.bf16.msra.mxu0 0
    %217 = vmatprep.mubr.bf16.mxu0 0
    %218 = vmatmul.mubr.bf16.gmra.mrb[0].mxu0 %v183
    %v219 = vpop.f32.mrb[0].mxu0
    %v220 = vadd.f32 0.0, %v219
    %v221 = vpop.f32.mrb[0].mxu0
    %v222 = vpop.f32.mrb[0].mxu0
    %v223 = vpop.f32.mrb[0].mxu0
    %224 = vdwg.mxu0
    %v227 = vunpack.c.l.s4 1966171168
    %v228 = vunpack.c.0.s8 %v227
    %v229 = vlaneseq
    %v230 = vshrl.u32 %v229, 7
    %v231 = vsub.s32 %v228, %v230
    %v232 = vrot.slane %v220, %v231
    %v233 = vcombine.high %v232, %v232
    %v235 = vunpack.c.l.s4 1966171168
    %v236 = vunpack.c.0.s8 %v235
    %v237 = vlaneseq
    %v238 = vshrl.u32 %v237, 7
    %v239 = vsub.s32 %v236, %v238
    %v240 = vrot.slane %v232, %v239
    %v242 = vunpack.c.l.s4 1966171168
    %v243 = vunpack.c.0.s8 %v242
    %v244 = vlaneseq
    %v245 = vshrl.u32 %v244, 7
    %v246 = vsub.s32 %v243, %v245
    %v247 = vrot.slane %v233, %v246
    %v248 = vlaneseq
    %v249 = vshrl.u32 %v248, 7
    %v250 = vsub.s32 0, %v249
    %v251 = vrot.slane %v240, %v250
    %v252 = vlaneseq
    %v253 = vshrl.u32 %v252, 7
    %v254 = vsub.s32 0, %v253
    %v255 = vrot.slane %v247, %v254
    %v258 = vadd.f32 %v150, %v251
    %v259 = vadd.f32 %v156, %v255
    %v260 = vld [vmem:[#allocation5] sm:$0x1]
    %v262 = vlaneseq
    %v263 = vshrl.u32 %v262, 7
    %v264 = vsub.s32 0, %v263
    %v265 = vrot.slane %v260, %v264
    %v267 = vadd.f32 %v258, %v265
    %v268 = vadd.f32 %v259, %v265
    %v269 = vld [vmem:[%s2] sm:$0xff]
    %v270 = vld [vmem:[%s11] sm:$0x3]
    %v271 = vld [vmem:[%s12] sm:$0xff]
    %v272 = vld [vmem:[%s12 + $0x8] sm:$0x1]
    %v273 = vld [vmem:[%s5] sm:$0xf]
    %v274 = vld [vmem:[%s5 + $0x4] sm:$0xf]
    %v275 = vld [vmem:[%s5 + $0x8] sm:$0xf]
    %v276 = vld [vmem:[%s5 + $0xc] sm:$0xf]
    %v277 = vpack.c.bf16 %v269, %v269
    %v278 = vlaneseq
    %v279 = vshrl.u32 %v278, 7
    %v280 = vsub.s32 0, %v279
    %v281 = vrot.slane %v270, %v280
    %v286 = vunpack.c.l.b16 %v273
    %v287 = vunpack.c.l.b16 %v274
    %v288 = vunpack.c.l.b16 %v275
    %v289 = vunpack.c.l.b16 %v276
    %v290 = vpack.c.b16 %v287, %v286
    %v291 = vpack.c.b16 %v289, %v288
    %v295 = vsel %vm111, %v277, 0
    %297 = vmatprep.subr.bf16.mxu0 0
    %298 = vmatpush1.bf16.msra.mxu0 %v290
    %299 = vmatprep.subr.bf16.mxu0 0
    %300 = vmatpush1.bf16.msra.mxu0 %v291
    %301 = vmatprep.subr.bf16.mxu0 0
    %302 = vmatpush1.bf16.msra.mxu0 0
    %303 = vmatprep.subr.bf16.mxu0 0
    %304 = vmatpush1.bf16.msra.mxu0 0
    %305 = vmatprep.subr.bf16.mxu0 0
    %306 = vmatpush1.bf16.msra.mxu0 0
    %307 = vmatprep.subr.bf16.mxu0 0
    %308 = vmatpush1.bf16.msra.mxu0 0
    %309 = vmatprep.subr.bf16.mxu0 0
    %310 = vmatpush1.bf16.msra.mxu0 0
    %311 = vmatprep.subr.bf16.mxu0 0
    %312 = vmatpush1.bf16.msra.mxu0 0
    %313 = vmatprep.subr.bf16.mxu0 0
    %314 = vmatpush1.bf16.msra.mxu0 0
    %315 = vmatprep.subr.bf16.mxu0 0
    %316 = vmatpush1.bf16.msra.mxu0 0
    %317 = vmatprep.subr.bf16.mxu0 0
    %318 = vmatpush1.bf16.msra.mxu0 0
    %319 = vmatprep.subr.bf16.mxu0 0
    %320 = vmatpush1.bf16.msra.mxu0 0
    %321 = vmatprep.subr.bf16.mxu0 0
    %322 = vmatpush1.bf16.msra.mxu0 0
    %323 = vmatprep.subr.bf16.mxu0 0
    %324 = vmatpush1.bf16.msra.mxu0 0
    %325 = vmatprep.subr.bf16.mxu0 0
    %326 = vmatpush1.bf16.msra.mxu0 0
    %327 = vmatprep.subr.bf16.mxu0 0
    %328 = vmatpush1.bf16.msra.mxu0 0
    %329 = vmatprep.mubr.bf16.mxu0 0
    %330 = vmatmul.mubr.bf16.gmra.mrb[0].mxu0 %v295
    %v331 = vpop.f32.mrb[0].mxu0
    %v332 = vadd.f32 %v281, %v331
    %v333 = vpop.f32.mrb[0].mxu0
    %v334 = vpop.f32.mrb[0].mxu0
    %v335 = vadd.f32 %v281, %v334
    %v336 = vpop.f32.mrb[0].mxu0
    %337 = vdwg.mxu0
    %v338 = vpack.c.bf16 %v332, %v332
    %v339 = vpack.c.bf16 %v335, %v335
    %341 = vrot.lane.b32.xlu0 %v338, 96
    %v342 = vpop.permute.xlu0 %341
    %vm343 = vcmask 130048
    %v345 = vsel %vm343, %v338, 0
    %v348 = vsel %vm343, %v342, 0
    %350 = vmatprep.subr.bf16.mxu0 0
    %351 = vmatpush1.bf16.xpose.msra.mxu0 %v348
    %352 = vmatprep.subr.bf16.mxu0 0
    %353 = vmatpush1.bf16.xpose.msra.mxu0 0
    %354 = vmatprep.subr.bf16.mxu0 0
    %355 = vmatpush1.bf16.xpose.msra.mxu0 0
    %356 = vmatprep.subr.bf16.mxu0 0
    %357 = vmatpush1.bf16.xpose.msra.mxu0 0
    %358 = vmatprep.subr.bf16.mxu0 0
    %359 = vmatpush1.bf16.xpose.msra.mxu0 0
    %360 = vmatprep.subr.bf16.mxu0 0
    %361 = vmatpush1.bf16.xpose.msra.mxu0 0
    %362 = vmatprep.subr.bf16.mxu0 0
    %363 = vmatpush1.bf16.xpose.msra.mxu0 0
    %364 = vmatprep.subr.bf16.mxu0 0
    %365 = vmatpush1.bf16.xpose.msra.mxu0 0
    %366 = vmatprep.subr.bf16.mxu0 0
    %367 = vmatpush1.bf16.xpose.msra.mxu0 0
    %368 = vmatprep.subr.bf16.mxu0 0
    %369 = vmatpush1.bf16.xpose.msra.mxu0 0
    %370 = vmatprep.subr.bf16.mxu0 0
    %371 = vmatpush1.bf16.xpose.msra.mxu0 0
    %372 = vmatprep.subr.bf16.mxu0 0
    %373 = vmatpush1.bf16.xpose.msra.mxu0 0
    %374 = vmatprep.subr.bf16.mxu0 0
    %375 = vmatpush1.bf16.xpose.msra.mxu0 0
    %376 = vmatprep.subr.bf16.mxu0 0
    %377 = vmatpush1.bf16.xpose.msra.mxu0 0
    %378 = vmatprep.subr.bf16.mxu0 0
    %379 = vmatpush1.bf16.xpose.msra.mxu0 0
    %380 = vmatprep.subr.bf16.mxu0 0
    %381 = vmatpush1.bf16.xpose.msra.mxu0 0
    %382 = vmatprep.mubr.bf16.mxu0 0
    %383 = vmatmul.mubr.bf16.gmra.mrb[0].mxu0 %v345
    %v384 = vpop.f32.mrb[0].mxu0
    %v385 = vadd.f32 0.0, %v384
    %v386 = vpop.f32.mrb[0].mxu0
    %v387 = vpop.f32.mrb[0].mxu0
    %v388 = vpop.f32.mrb[0].mxu0
    %389 = vdwg.mxu0
    %391 = vrot.lane.b32.xlu0 %v339, 96
    %v392 = vpop.permute.xlu0 %391
    %v394 = vsel %vm343, %v339, 0
    %v397 = vsel %vm343, %v392, 0
    %399 = vmatprep.subr.bf16.mxu0 0
    %400 = vmatpush1.bf16.xpose.msra.mxu0 %v397
    %401 = vmatprep.subr.bf16.mxu0 0
    %402 = vmatpush1.bf16.xpose.msra.mxu0 0
    %403 = vmatprep.subr.bf16.mxu0 0
    %404 = vmatpush1.bf16.xpose.msra.mxu0 0
    %405 = vmatprep.subr.bf16.mxu0 0
    %406 = vmatpush1.bf16.xpose.msra.mxu0 0
    %407 = vmatprep.subr.bf16.mxu0 0
    %408 = vmatpush1.bf16.xpose.msra.mxu0 0
    %409 = vmatprep.subr.bf16.mxu0 0
    %410 = vmatpush1.bf16.xpose.msra.mxu0 0
    %411 = vmatprep.subr.bf16.mxu0 0
    %412 = vmatpush1.bf16.xpose.msra.mxu0 0
    %413 = vmatprep.subr.bf16.mxu0 0
    %414 = vmatpush1.bf16.xpose.msra.mxu0 0
    %415 = vmatprep.subr.bf16.mxu0 0
    %416 = vmatpush1.bf16.xpose.msra.mxu0 0
    %417 = vmatprep.subr.bf16.mxu0 0
    %418 = vmatpush1.bf16.xpose.msra.mxu0 0
    %419 = vmatprep.subr.bf16.mxu0 0
    %420 = vmatpush1.bf16.xpose.msra.mxu0 0
    %421 = vmatprep.subr.bf16.mxu0 0
    %422 = vmatpush1.bf16.xpose.msra.mxu0 0
    %423 = vmatprep.subr.bf16.mxu0 0
    %424 = vmatpush1.bf16.xpose.msra.mxu0 0
    %425 = vmatprep.subr.bf16.mxu0 0
    %426 = vmatpush1.bf16.xpose.msra.mxu0 0
    %427 = vmatprep.subr.bf16.mxu0 0
    %428 = vmatpush1.bf16.xpose.msra.mxu0 0
    %429 = vmatprep.subr.bf16.mxu0 0
    %430 = vmatpush1.bf16.xpose.msra.mxu0 0
    %431 = vmatprep.mubr.bf16.mxu0 0
    %432 = vmatmul.mubr.bf16.gmra.mrb[0].mxu0 %v394
    %v433 = vpop.f32.mrb[0].mxu0
    %v434 = vadd.f32 0.0, %v433
    %v435 = vpop.f32.mrb[0].mxu0
    %v436 = vpop.f32.mrb[0].mxu0
    %v437 = vpop.f32.mrb[0].mxu0
    %438 = vdwg.mxu0
    %v439 = vmul.f32 %v385, 0.25
    %v440 = vmul.f32 %v434, 0.25
    %vm441 = vcmask 64512
    %v442 = vsel %vm441, %v439, -inf
    %443 = vmax.xlane.f32.xlu0 %v442
    %v444 = vpop.xlane.xlu0 %443
    %v445 = vsel %vm441, %v440, -inf
    %446 = vmax.xlane.f32.xlu0 %v445
    %v447 = vpop.xlane.xlu0 %446
    %v448 = vsub.f32 %v439, %v444
    %v449 = vsub.f32 %v440, %v447
    %v450 = vmul.f32 %v448, 1.442695
    %v451 = vpow.pop %v450
    %v452 = vmul.f32 %v449, 1.442695
    %v453 = vpow.pop %v452
    %v454 = vsel %vm441, %v451, 0.0
    %455 = vadd.xlane.f32.xlu0 %v454
    %v456 = vpop.xlane.xlu0 %455
    %v457 = vsel %vm441, %v453, 0.0
    %458 = vadd.xlane.f32.xlu0 %v457
    %v459 = vpop.xlane.xlu0 %458
    %v460 = vrcp.pop %v456
    %v461 = vmul.f32 %v451, %v460
    %v462 = vrcp.pop %v459
    %v463 = vmul.f32 %v453, %v462
    %v464 = vpack.c.bf16 %v461, %v461
    %v465 = vpack.c.bf16 %v463, %v463
    %466 = vrot.lane.b32.xlu0 %v338, 64
    %v467 = vpop.permute.xlu0 %466
    %v469 = vsel %vm441, %v464, 0
    %vm471 = vcmask 1043456
    %v473 = vsel %vm471, %v467, 0
    %475 = vmatprep.subr.bf16.mxu0 0
    %476 = vmatpush1.bf16.msra.mxu0 %v473
    %477 = vmatprep.subr.bf16.mxu0 0
    %478 = vmatpush1.bf16.msra.mxu0 0
    %479 = vmatprep.subr.bf16.mxu0 0
    %480 = vmatpush1.bf16.msra.mxu0 0
    %481 = vmatprep.subr.bf16.mxu0 0
    %482 = vmatpush1.bf16.msra.mxu0 0
    %483 = vmatprep.subr.bf16.mxu0 0
    %484 = vmatpush1.bf16.msra.mxu0 0
    %485 = vmatprep.subr.bf16.mxu0 0
    %486 = vmatpush1.bf16.msra.mxu0 0
    %487 = vmatprep.subr.bf16.mxu0 0
    %488 = vmatpush1.bf16.msra.mxu0 0
    %489 = vmatprep.subr.bf16.mxu0 0
    %490 = vmatpush1.bf16.msra.mxu0 0
    %491 = vmatprep.subr.bf16.mxu0 0
    %492 = vmatpush1.bf16.msra.mxu0 0
    %493 = vmatprep.subr.bf16.mxu0 0
    %494 = vmatpush1.bf16.msra.mxu0 0
    %495 = vmatprep.subr.bf16.mxu0 0
    %496 = vmatpush1.bf16.msra.mxu0 0
    %497 = vmatprep.subr.bf16.mxu0 0
    %498 = vmatpush1.bf16.msra.mxu0 0
    %499 = vmatprep.subr.bf16.mxu0 0
    %500 = vmatpush1.bf16.msra.mxu0 0
    %501 = vmatprep.subr.bf16.mxu0 0
    %502 = vmatpush1.bf16.msra.mxu0 0
    %503 = vmatprep.subr.bf16.mxu0 0
    %504 = vmatpush1.bf16.msra.mxu0 0
    %505 = vmatprep.subr.bf16.mxu0 0
    %506 = vmatpush1.bf16.msra.mxu0 0
    %507 = vmatprep.mubr.bf16.mxu0 0
    %508 = vmatmul.mubr.bf16.gmra.mrb[0].mxu0 %v469
    %v509 = vpop.f32.mrb[0].mxu0
    %v510 = vadd.f32 0.0, %v509
    %v511 = vpop.f32.mrb[0].mxu0
    %v512 = vpop.f32.mrb[0].mxu0
    %v513 = vpop.f32.mrb[0].mxu0
    %514 = vdwg.mxu0
    %515 = vrot.lane.b32.xlu0 %v339, 64
    %v516 = vpop.permute.xlu0 %515
    %v518 = vsel %vm441, %v465, 0
    %v521 = vsel %vm471, %v516, 0
    %523 = vmatprep.subr.bf16.mxu0 0
    %524 = vmatpush1.bf16.msra.mxu0 %v521
    %525 = vmatprep.subr.bf16.mxu0 0
    %526 = vmatpush1.bf16.msra.mxu0 0
    %527 = vmatprep.subr.bf16.mxu0 0
    %528 = vmatpush1.bf16.msra.mxu0 0
    %529 = vmatprep.subr.bf16.mxu0 0
    %530 = vmatpush1.bf16.msra.mxu0 0
    %531 = vmatprep.subr.bf16.mxu0 0
    %532 = vmatpush1.bf16.msra.mxu0 0
    %533 = vmatprep.subr.bf16.mxu0 0
    %534 = vmatpush1.bf16.msra.mxu0 0
    %535 = vmatprep.subr.bf16.mxu0 0
    %536 = vmatpush1.bf16.msra.mxu0 0
    %537 = vmatprep.subr.bf16.mxu0 0
    %538 = vmatpush1.bf16.msra.mxu0 0
    %539 = vmatprep.subr.bf16.mxu0 0
    %540 = vmatpush1.bf16.msra.mxu0 0
    %541 = vmatprep.subr.bf16.mxu0 0
    %542 = vmatpush1.bf16.msra.mxu0 0
    %543 = vmatprep.subr.bf16.mxu0 0
    %544 = vmatpush1.bf16.msra.mxu0 0
    %545 = vmatprep.subr.bf16.mxu0 0
    %546 = vmatpush1.bf16.msra.mxu0 0
    %547 = vmatprep.subr.bf16.mxu0 0
    %548 = vmatpush1.bf16.msra.mxu0 0
    %549 = vmatprep.subr.bf16.mxu0 0
    %550 = vmatpush1.bf16.msra.mxu0 0
    %551 = vmatprep.subr.bf16.mxu0 0
    %552 = vmatpush1.bf16.msra.mxu0 0
    %553 = vmatprep.subr.bf16.mxu0 0
    %554 = vmatpush1.bf16.msra.mxu0 0
    %555 = vmatprep.mubr.bf16.mxu0 0
    %556 = vmatmul.mubr.bf16.gmra.mrb[0].mxu0 %v518
    %v557 = vpop.f32.mrb[0].mxu0
    %v558 = vadd.f32 0.0, %v557
    %v559 = vpop.f32.mrb[0].mxu0
    %v560 = vpop.f32.mrb[0].mxu0
    %v561 = vpop.f32.mrb[0].mxu0
    %562 = vdwg.mxu0
    %563 = vrot.lane.b32.xlu0 %v338, 112
    %v564 = vpop.permute.xlu0 %563
    %565 = vrot.lane.b32.xlu0 %v338, 80
    %v566 = vpop.permute.xlu0 %565
    %v568 = vsel %vm343, %v564, 0
    %v571 = vsel %vm343, %v566, 0
    %573 = vmatprep.subr.bf16.mxu0 0
    %574 = vmatpush1.bf16.xpose.msra.mxu0 %v571
    %575 = vmatprep.subr.bf16.mxu0 0
    %576 = vmatpush1.bf16.xpose.msra.mxu0 0
    %577 = vmatprep.subr.bf16.mxu0 0
    %578 = vmatpush1.bf16.xpose.msra.mxu0 0
    %579 = vmatprep.subr.bf16.mxu0 0
    %580 = vmatpush1.bf16.xpose.msra.mxu0 0
    %581 = vmatprep.subr.bf16.mxu0 0
    %582 = vmatpush1.bf16.xpose.msra.mxu0 0
    %583 = vmatprep.subr.bf16.mxu0 0
    %584 = vmatpush1.bf16.xpose.msra.mxu0 0
    %585 = vmatprep.subr.bf16.mxu0 0
    %586 = vmatpush1.bf16.xpose.msra.mxu0 0
    %587 = vmatprep.subr.bf16.mxu0 0
    %588 = vmatpush1.bf16.xpose.msra.mxu0 0
    %589 = vmatprep.subr.bf16.mxu0 0
    %590 = vmatpush1.bf16.xpose.msra.mxu0 0
    %591 = vmatprep.subr.bf16.mxu0 0
    %592 = vmatpush1.bf16.xpose.msra.mxu0 0
    %593 = vmatprep.subr.bf16.mxu0 0
    %594 = vmatpush1.bf16.xpose.msra.mxu0 0
    %595 = vmatprep.subr.bf16.mxu0 0
    %596 = vmatpush1.bf16.xpose.msra.mxu0 0
    %597 = vmatprep.subr.bf16.mxu0 0
    %598 = vmatpush1.bf16.xpose.msra.mxu0 0
    %599 = vmatprep.subr.bf16.mxu0 0
    %600 = vmatpush1.bf16.xpose.msra.mxu0 0
    %601 = vmatprep.subr.bf16.mxu0 0
    %602 = vmatpush1.bf16.xpose.msra.mxu0 0
    %603 = vmatprep.subr.bf16.mxu0 0
    %604 = vmatpush1.bf16.xpose.msra.mxu0 0
    %605 = vmatprep.mubr.bf16.mxu0 0
    %606 = vmatmul.mubr.bf16.gmra.mrb[0].mxu0 %v568
    %v607 = vpop.f32.mrb[0].mxu0
    %v608 = vadd.f32 0.0, %v607
    %v609 = vpop.f32.mrb[0].mxu0
    %v610 = vpop.f32.mrb[0].mxu0
    %v611 = vpop.f32.mrb[0].mxu0
    %612 = vdwg.mxu0
    %613 = vrot.lane.b32.xlu0 %v339, 112
    %v614 = vpop.permute.xlu0 %613
    %615 = vrot.lane.b32.xlu0 %v339, 80
    %v616 = vpop.permute.xlu0 %615
    %v618 = vsel %vm343, %v614, 0
    %v621 = vsel %vm343, %v616, 0
    %623 = vmatprep.subr.bf16.mxu0 0
    %624 = vmatpush1.bf16.xpose.msra.mxu0 %v621
    %625 = vmatprep.subr.bf16.mxu0 0
    %626 = vmatpush1.bf16.xpose.msra.mxu0 0
    %627 = vmatprep.subr.bf16.mxu0 0
    %628 = vmatpush1.bf16.xpose.msra.mxu0 0
    %629 = vmatprep.subr.bf16.mxu0 0
    %630 = vmatpush1.bf16.xpose.msra.mxu0 0
    %631 = vmatprep.subr.bf16.mxu0 0
    %632 = vmatpush1.bf16.xpose.msra.mxu0 0
    %633 = vmatprep.subr.bf16.mxu0 0
    %634 = vmatpush1.bf16.xpose.msra.mxu0 0
    %635 = vmatprep.subr.bf16.mxu0 0
    %636 = vmatpush1.bf16.xpose.msra.mxu0 0
    %637 = vmatprep.subr.bf16.mxu0 0
    %638 = vmatpush1.bf16.xpose.msra.mxu0 0
    %639 = vmatprep.subr.bf16.mxu0 0
    %640 = vmatpush1.bf16.xpose.msra.mxu0 0
    %641 = vmatprep.subr.bf16.mxu0 0
    %642 = vmatpush1.bf16.xpose.msra.mxu0 0
    %643 = vmatprep.subr.bf16.mxu0 0
    %644 = vmatpush1.bf16.xpose.msra.mxu0 0
    %645 = vmatprep.subr.bf16.mxu0 0
    %646 = vmatpush1.bf16.xpose.msra.mxu0 0
    %647 = vmatprep.subr.bf16.mxu0 0
    %648 = vmatpush1.bf16.xpose.msra.mxu0 0
    %649 = vmatprep.subr.bf16.mxu0 0
    %650 = vmatpush1.bf16.xpose.msra.mxu0 0
    %651 = vmatprep.subr.bf16.mxu0 0
    %652 = vmatpush1.bf16.xpose.msra.mxu0 0
    %653 = vmatprep.subr.bf16.mxu0 0
    %654 = vmatpush1.bf16.xpose.msra.mxu0 0
    %655 = vmatprep.mubr.bf16.mxu0 0
    %656 = vmatmul.mubr.bf16.gmra.mrb[0].mxu0 %v618
    %v657 = vpop.f32.mrb[0].mxu0
    %v658 = vadd.f32 0.0, %v657
    %v659 = vpop.f32.mrb[0].mxu0
    %v660 = vpop.f32.mrb[0].mxu0
    %v661 = vpop.f32.mrb[0].mxu0
    %662 = vdwg.mxu0
    %v663 = vmul.f32 %v608, 0.25
    %v664 = vmul.f32 %v658, 0.25
    %v665 = vsel %vm441, %v663, -inf
    %666 = vmax.xlane.f32.xlu0 %v665
    %v667 = vpop.xlane.xlu0 %666
    %v668 = vsel %vm441, %v664, -inf
    %669 = vmax.xlane.f32.xlu0 %v668
    %v670 = vpop.xlane.xlu0 %669
    %v671 = vsub.f32 %v663, %v667
    %v672 = vsub.f32 %v664, %v670
    %v673 = vmul.f32 %v671, 1.442695
    %v674 = vpow.pop %v673
    %v675 = vmul.f32 %v672, 1.442695
    %v676 = vpow.pop %v675
    %v677 = vsel %vm441, %v674, 0.0
    %678 = vadd.xlane.f32.xlu0 %v677
    %v679 = vpop.xlane.xlu0 %678
    %v680 = vsel %vm441, %v676, 0.0
    %681 = vadd.xlane.f32.xlu0 %v680
    %v682 = vpop.xlane.xlu0 %681
    %v683 = vrcp.pop %v679
    %v684 = vmul.f32 %v674, %v683
    %v685 = vrcp.pop %v682
    %v686 = vmul.f32 %v676, %v685
    %v687 = vpack.c.bf16 %v684, %v684
    %v688 = vpack.c.bf16 %v686, %v686
    %689 = vrot.lane.b32.xlu0 %v338, 48
    %v690 = vpop.permute.xlu0 %689
    %v692 = vsel %vm441, %v687, 0
    %v695 = vsel %vm471, %v690, 0
    %697 = vmatprep.subr.bf16.mxu0 0
    %698 = vmatpush1.bf16.msra.mxu0 %v695
    %699 = vmatprep.subr.bf16.mxu0 0
    %700 = vmatpush1.bf16.msra.mxu0 0
    %701 = vmatprep.subr.bf16.mxu0 0
    %702 = vmatpush1.bf16.msra.mxu0 0
    %703 = vmatprep.subr.bf16.mxu0 0
    %704 = vmatpush1.bf16.msra.mxu0 0
    %705 = vmatprep.subr.bf16.mxu0 0
    %706 = vmatpush1.bf16.msra.mxu0 0
    %707 = vmatprep.subr.bf16.mxu0 0
    %708 = vmatpush1.bf16.msra.mxu0 0
    %709 = vmatprep.subr.bf16.mxu0 0
    %710 = vmatpush1.bf16.msra.mxu0 0
    %711 = vmatprep.subr.bf16.mxu0 0
    %712 = vmatpush1.bf16.msra.mxu0 0
    %713 = vmatprep.subr.bf16.mxu0 0
    %714 = vmatpush1.bf16.msra.mxu0 0
    %715 = vmatprep.subr.bf16.mxu0 0
    %716 = vmatpush1.bf16.msra.mxu0 0
    %717 = vmatprep.subr.bf16.mxu0 0
    %718 = vmatpush1.bf16.msra.mxu0 0
    %719 = vmatprep.subr.bf16.mxu0 0
    %720 = vmatpush1.bf16.msra.mxu0 0
    %721 = vmatprep.subr.bf16.mxu0 0
    %722 = vmatpush1.bf16.msra.mxu0 0
    %723 = vmatprep.subr.bf16.mxu0 0
    %724 = vmatpush1.bf16.msra.mxu0 0
    %725 = vmatprep.subr.bf16.mxu0 0
    %726 = vmatpush1.bf16.msra.mxu0 0
    %727 = vmatprep.subr.bf16.mxu0 0
    %728 = vmatpush1.bf16.msra.mxu0 0
    %729 = vmatprep.mubr.bf16.mxu0 0
    %730 = vmatmul.mubr.bf16.gmra.mrb[0].mxu0 %v692
    %v731 = vpop.f32.mrb[0].mxu0
    %v732 = vadd.f32 0.0, %v731
    %v733 = vpop.f32.mrb[0].mxu0
    %v734 = vpop.f32.mrb[0].mxu0
    %v735 = vpop.f32.mrb[0].mxu0
    %736 = vdwg.mxu0
    %737 = vrot.lane.b32.xlu0 %v339, 48
    %v738 = vpop.permute.xlu0 %737
    %v740 = vsel %vm441, %v688, 0
    %v743 = vsel %vm471, %v738, 0
    %745 = vmatprep.subr.bf16.mxu0 0
    %746 = vmatpush1.bf16.msra.mxu0 %v743
    %747 = vmatprep.subr.bf16.mxu0 0
    %748 = vmatpush1.bf16.msra.mxu0 0
    %749 = vmatprep.subr.bf16.mxu0 0
    %750 = vmatpush1.bf16.msra.mxu0 0
    %751 = vmatprep.subr.bf16.mxu0 0
    %752 = vmatpush1.bf16.msra.mxu0 0
    %753 = vmatprep.subr.bf16.mxu0 0
    %754 = vmatpush1.bf16.msra.mxu0 0
    %755 = vmatprep.subr.bf16.mxu0 0
    %756 = vmatpush1.bf16.msra.mxu0 0
    %757 = vmatprep.subr.bf16.mxu0 0
    %758 = vmatpush1.bf16.msra.mxu0 0
    %759 = vmatprep.subr.bf16.mxu0 0
    %760 = vmatpush1.bf16.msra.mxu0 0
    %761 = vmatprep.subr.bf16.mxu0 0
    %762 = vmatpush1.bf16.msra.mxu0 0
    %763 = vmatprep.subr.bf16.mxu0 0
    %764 = vmatpush1.bf16.msra.mxu0 0
    %765 = vmatprep.subr.bf16.mxu0 0
    %766 = vmatpush1.bf16.msra.mxu0 0
    %767 = vmatprep.subr.bf16.mxu0 0
    %768 = vmatpush1.bf16.msra.mxu0 0
    %769 = vmatprep.subr.bf16.mxu0 0
    %770 = vmatpush1.bf16.msra.mxu0 0
    %771 = vmatprep.subr.bf16.mxu0 0
    %772 = vmatpush1.bf16.msra.mxu0 0
    %773 = vmatprep.subr.bf16.mxu0 0
    %774 = vmatpush1.bf16.msra.mxu0 0
    %775 = vmatprep.subr.bf16.mxu0 0
    %776 = vmatpush1.bf16.msra.mxu0 0
    %777 = vmatprep.mubr.bf16.mxu0 0
    %778 = vmatmul.mubr.bf16.gmra.mrb[0].mxu0 %v740
    %v779 = vpop.f32.mrb[0].mxu0
    %v780 = vadd.f32 0.0, %v779
    %v781 = vpop.f32.mrb[0].mxu0
    %v782 = vpop.f32.mrb[0].mxu0
    %v783 = vpop.f32.mrb[0].mxu0
    %784 = vdwg.mxu0
    %787 = vrot.lane.b32.xlu0 %v732, 16
    %v788 = vpop.permute.xlu0 %787
    %789 = vrot.lane.b32.xlu0 %v780, 16
    %v790 = vpop.permute.xlu0 %789
    %v793 = vsel %vm343, %v510, %v788
    %v794 = vsel %vm343, %v558, %v790
    %v795 = vld [vmem:[%s6] sm:$0xf]
    %v796 = vld [vmem:[%s6 + $0x4] sm:$0xf]
    %v797 = vld [vmem:[%s6 + $0x8] sm:$0xf]
    %v798 = vld [vmem:[%s6 + $0xc] sm:$0xf]
    %v799 = vpack.c.bf16 %v794, %v793
    %v800 = vlaneseq
    %v801 = vshrl.u32 %v800, 7
    %v802 = vsub.s32 0, %v801
    %v803 = vrot.slane %v271, %v802
    %v808 = vunpack.c.l.b16 %v795
    %v809 = vunpack.c.l.b16 %v796
    %v810 = vunpack.c.l.b16 %v797
    %v811 = vunpack.c.l.b16 %v798
    %v812 = vpack.c.b16 %v809, %v808
    %v813 = vpack.c.b16 %v811, %v810
    %v817 = vsel %vm111, %v799, 0
    %819 = vmatprep.subr.bf16.mxu0 0
    %820 = vmatpush1.bf16.msra.mxu0 %v812
    %821 = vmatprep.subr.bf16.mxu0 0
    %822 = vmatpush1.bf16.msra.mxu0 %v813
    %823 = vmatprep.subr.bf16.mxu0 0
    %824 = vmatpush1.bf16.msra.mxu0 0
    %825 = vmatprep.subr.bf16.mxu0 0
    %826 = vmatpush1.bf16.msra.mxu0 0
    %827 = vmatprep.subr.bf16.mxu0 0
    %828 = vmatpush1.bf16.msra.mxu0 0
    %829 = vmatprep.subr.bf16.mxu0 0
    %830 = vmatpush1.bf16.msra.mxu0 0
    %831 = vmatprep.subr.bf16.mxu0 0
    %832 = vmatpush1.bf16.msra.mxu0 0
    %833 = vmatprep.subr.bf16.mxu0 0
    %834 = vmatpush1.bf16.msra.mxu0 0
    %835 = vmatprep.subr.bf16.mxu0 0
    %836 = vmatpush1.bf16.msra.mxu0 0
    %837 = vmatprep.subr.bf16.mxu0 0
    %838 = vmatpush1.bf16.msra.mxu0 0
    %839 = vmatprep.subr.bf16.mxu0 0
    %840 = vmatpush1.bf16.msra.mxu0 0
    %841 = vmatprep.subr.bf16.mxu0 0
    %842 = vmatpush1.bf16.msra.mxu0 0
    %843 = vmatprep.subr.bf16.mxu0 0
    %844 = vmatpush1.bf16.msra.mxu0 0
    %845 = vmatprep.subr.bf16.mxu0 0
    %846 = vmatpush1.bf16.msra.mxu0 0
    %847 = vmatprep.subr.bf16.mxu0 0
    %848 = vmatpush1.bf16.msra.mxu0 0
    %849 = vmatprep.subr.bf16.mxu0 0
    %850 = vmatpush1.bf16.msra.mxu0 0
    %851 = vmatprep.mubr.bf16.mxu0 0
    %852 = vmatmul.mubr.bf16.gmra.mrb[0].mxu0 %v817
    %v853 = vpop.f32.mrb[0].mxu0
    %v854 = vadd.f32 %v803, %v853
    %v855 = vpop.f32.mrb[0].mxu0
    %v856 = vpop.f32.mrb[0].mxu0
    %v857 = vadd.f32 %v803, %v856
    %v858 = vpop.f32.mrb[0].mxu0
    %859 = vdwg.mxu0
    %v860 = vadd.f32 %v269, %v854
    %v861 = vadd.f32 %v269, %v857
    %v862 = vsel %vm111, %v860, 0.0
    %863 = vadd.xlane.f32.xlu0 %v862
    %v864 = vpop.xlane.xlu0 %863
    %v865 = vsel %vm111, %v861, 0.0
    %866 = vadd.xlane.f32.xlu0 %v865
    %v867 = vpop.xlane.xlu0 %866
    %v868 = vrcp.pop 32.0
    %v869 = vmul.f32 %v864, %v868
    %v870 = vmul.f32 %v867, %v868
    %v871 = vsub.f32 %v860, %v869
    %v872 = vsub.f32 %v861, %v870
    %v873 = vmul.f32 %v871, %v871
    %v874 = vmul.f32 %v872, %v872
    %v875 = vsel %vm111, %v873, 0.0
    %876 = vadd.xlane.f32.xlu0 %v875
    %v877 = vpop.xlane.xlu0 %876
    %v878 = vsel %vm111, %v874, 0.0
    %879 = vadd.xlane.f32.xlu0 %v878
    %v880 = vpop.xlane.xlu0 %879
    %v881 = vmul.f32 %v877, %v868
    %v882 = vmul.f32 %v880, %v868
    %v883 = vadd.f32 %v881, 1e-05
    %v884 = vadd.f32 %v882, 1e-05
    %v885 = vrsqrt.pop %v883
    %v886 = vrsqrt.pop %v884
    %v887 = vmul.f32 %v871, %v885
    %v888 = vmul.f32 %v872, %v886
    %v889 = vlaneseq
    %v890 = vshrl.u32 %v889, 7
    %v891 = vsub.s32 3, %v890
    %v892 = vrot.slane %v271, %v891
    %v893 = vmul.f32 %v887, %v892
    %v894 = vmul.f32 %v888, %v892
    %v895 = vlaneseq
    %v896 = vshrl.u32 %v895, 7
    %v897 = vsub.s32 4, %v896
    %v898 = vrot.slane %v271, %v897
    %v899 = vadd.f32 %v893, %v898
    %v900 = vadd.f32 %v894, %v898
    %v901 = vld [vmem:[%s7] sm:$0xf]
    %v902 = vld [vmem:[%s7 + $0x4] sm:$0xf]
    %v903 = vld [vmem:[%s7 + $0x8] sm:$0xf]
    %v904 = vld [vmem:[%s7 + $0xc] sm:$0xf]
    %v905 = vpack.c.bf16 %v900, %v899
    %v906 = vlaneseq
    %v907 = vshrl.u32 %v906, 7
    %v908 = vsub.s32 1, %v907
    %v909 = vrot.slane %v270, %v908
    %v914 = vunpack.c.l.b16 %v901
    %v915 = vunpack.c.l.b16 %v902
    %v916 = vunpack.c.l.b16 %v903
    %v917 = vunpack.c.l.b16 %v904
    %v918 = vpack.c.b16 %v915, %v914
    %v919 = vpack.c.b16 %v917, %v916
    %v923 = vsel %vm111, %v905, 0
    %925 = vmatprep.subr.bf16.mxu0 0
    %926 = vmatpush1.bf16.msra.mxu0 %v918
    %927 = vmatprep.subr.bf16.mxu0 0
    %928 = vmatpush1.bf16.msra.mxu0 %v919
    %929 = vmatprep.subr.bf16.mxu0 0
    %930 = vmatpush1.bf16.msra.mxu0 0
    %931 = vmatprep.subr.bf16.mxu0 0
    %932 = vmatpush1.bf16.msra.mxu0 0
    %933 = vmatprep.subr.bf16.mxu0 0
    %934 = vmatpush1.bf16.msra.mxu0 0
    %935 = vmatprep.subr.bf16.mxu0 0
    %936 = vmatpush1.bf16.msra.mxu0 0
    %937 = vmatprep.subr.bf16.mxu0 0
    %938 = vmatpush1.bf16.msra.mxu0 0
    %939 = vmatprep.subr.bf16.mxu0 0
    %940 = vmatpush1.bf16.msra.mxu0 0
    %941 = vmatprep.subr.bf16.mxu0 0
    %942 = vmatpush1.bf16.msra.mxu0 0
    %943 = vmatprep.subr.bf16.mxu0 0
    %944 = vmatpush1.bf16.msra.mxu0 0
    %945 = vmatprep.subr.bf16.mxu0 0
    %946 = vmatpush1.bf16.msra.mxu0 0
    %947 = vmatprep.subr.bf16.mxu0 0
    %948 = vmatpush1.bf16.msra.mxu0 0
    %949 = vmatprep.subr.bf16.mxu0 0
    %950 = vmatpush1.bf16.msra.mxu0 0
    %951 = vmatprep.subr.bf16.mxu0 0
    %952 = vmatpush1.bf16.msra.mxu0 0
    %953 = vmatprep.subr.bf16.mxu0 0
    %954 = vmatpush1.bf16.msra.mxu0 0
    %955 = vmatprep.subr.bf16.mxu0 0
    %956 = vmatpush1.bf16.msra.mxu0 0
    %957 = vmatprep.mubr.bf16.mxu0 0
    %958 = vmatmul.mubr.bf16.gmra.mrb[0].mxu0 %v923
    %v959 = vpop.f32.mrb[0].mxu0
    %v960 = vadd.f32 %v909, %v959
    %v961 = vpop.f32.mrb[0].mxu0
    %v962 = vpop.f32.mrb[0].mxu0
    %v963 = vadd.f32 %v909, %v962
    %v964 = vpop.f32.mrb[0].mxu0
    %965 = vdwg.mxu0
    %v968 = vcombine.low %v267, %v268
    %v970 = vpack.c.bf16 %v968, %v968
    %971 = vrot.lane.b32.xlu0 %v918, 96
    %v972 = vpop.permute.xlu0 %971
    %973 = vrot.lane.b32.xlu0 %v919, 96
    %v974 = vpop.permute.xlu0 %973
    %978 = vrot.lane.b32.xlu0 %v909, 96
    %v979 = vpop.permute.xlu0 %978
    %v982 = vsel %vm111, %v970, 0
    %984 = vmatprep.subr.bf16.mxu0 0
    %985 = vmatpush1.bf16.msra.mxu0 %v972
    %986 = vmatprep.subr.bf16.mxu0 0
    %987 = vmatpush1.bf16.msra.mxu0 %v974
    %988 = vmatprep.subr.bf16.mxu0 0
    %989 = vmatpush1.bf16.msra.mxu0 0
    %990 = vmatprep.subr.bf16.mxu0 0
    %991 = vmatpush1.bf16.msra.mxu0 0
    %992 = vmatprep.subr.bf16.mxu0 0
    %993 = vmatpush1.bf16.msra.mxu0 0
    %994 = vmatprep.subr.bf16.mxu0 0
    %995 = vmatpush1.bf16.msra.mxu0 0
    %996 = vmatprep.subr.bf16.mxu0 0
    %997 = vmatpush1.bf16.msra.mxu0 0
    %998 = vmatprep.subr.bf16.mxu0 0
    %999 = vmatpush1.bf16.msra.mxu0 0
    %1000 = vmatprep.subr.bf16.mxu0 0
    %1001 = vmatpush1.bf16.msra.mxu0 0
    %1002 = vmatprep.subr.bf16.mxu0 0
    %1003 = vmatpush1.bf16.msra.mxu0 0
    %1004 = vmatprep.subr.bf16.mxu0 0
    %1005 = vmatpush1.bf16.msra.mxu0 0
    %1006 = vmatprep.subr.bf16.mxu0 0
    %1007 = vmatpush1.bf16.msra.mxu0 0
    %1008 = vmatprep.subr.bf16.mxu0 0
    %1009 = vmatpush1.bf16.msra.mxu0 0
    %1010 = vmatprep.subr.bf16.mxu0 0
    %1011 = vmatpush1.bf16.msra.mxu0 0
    %1012 = vmatprep.subr.bf16.mxu0 0
    %1013 = vmatpush1.bf16.msra.mxu0 0
    %1014 = vmatprep.subr.bf16.mxu0 0
    %1015 = vmatpush1.bf16.msra.mxu0 0
    %1016 = vmatprep.mubr.bf16.mxu0 0
    %1017 = vmatmul.mubr.bf16.gmra.mrb[0].mxu0 %v982
    %v1018 = vpop.f32.mrb[0].mxu0
    %v1019 = vadd.f32 %v979, %v1018
    %v1020 = vpop.f32.mrb[0].mxu0
    %v1021 = vpop.f32.mrb[0].mxu0
    %v1022 = vpop.f32.mrb[0].mxu0
    %1023 = vdwg.mxu0
    %v1025 = vcombine.high %v1019, %v1019
    %v1027 = vpack.c.bf16 %v960, %v960
    %v1028 = vpack.c.bf16 %v963, %v963
    %v1029 = vpack.c.bf16 %v1019, %v1019
    %v1030 = vpack.c.bf16 %v1025, %v1025
    %v1032 = vsel %vm343, %v1027, 0
    %v1035 = vsel %vm343, %v1029, 0
    %1037 = vmatprep.subr.bf16.mxu0 0
    %1038 = vmatpush1.bf16.xpose.msra.mxu0 %v1035
    %1039 = vmatprep.subr.bf16.mxu0 0
    %1040 = vmatpush1.bf16.xpose.msra.mxu0 0
    %1041 = vmatprep.subr.bf16.mxu0 0
    %1042 = vmatpush1.bf16.xpose.msra.mxu0 0
    %1043 = vmatprep.subr.bf16.mxu0 0
    %1044 = vmatpush1.bf16.xpose.msra.mxu0 0
    %1045 = vmatprep.subr.bf16.mxu0 0
    %1046 = vmatpush1.bf16.xpose.msra.mxu0 0
    %1047 = vmatprep.subr.bf16.mxu0 0
    %1048 = vmatpush1.bf16.xpose.msra.mxu0 0
    %1049 = vmatprep.subr.bf16.mxu0 0
    %1050 = vmatpush1.bf16.xpose.msra.mxu0 0
    %1051 = vmatprep.subr.bf16.mxu0 0
    %1052 = vmatpush1.bf16.xpose.msra.mxu0 0
    %1053 = vmatprep.subr.bf16.mxu0 0
    %1054 = vmatpush1.bf16.xpose.msra.mxu0 0
    %1055 = vmatprep.subr.bf16.mxu0 0
    %1056 = vmatpush1.bf16.xpose.msra.mxu0 0
    %1057 = vmatprep.subr.bf16.mxu0 0
    %1058 = vmatpush1.bf16.xpose.msra.mxu0 0
    %1059 = vmatprep.subr.bf16.mxu0 0
    %1060 = vmatpush1.bf16.xpose.msra.mxu0 0
    %1061 = vmatprep.subr.bf16.mxu0 0
    %1062 = vmatpush1.bf16.xpose.msra.mxu0 0
    %1063 = vmatprep.subr.bf16.mxu0 0
    %1064 = vmatpush1.bf16.xpose.msra.mxu0 0
    %1065 = vmatprep.subr.bf16.mxu0 0
    %1066 = vmatpush1.bf16.xpose.msra.mxu0 0
    %1067 = vmatprep.subr.bf16.mxu0 0
    %1068 = vmatpush1.bf16.xpose.msra.mxu0 0
    %1069 = vmatprep.mubr.bf16.mxu0 0
    %1070 = vmatmul.mubr.bf16.gmra.mrb[0].mxu0 %v1032
    %v1071 = vpop.f32.mrb[0].mxu0
    %v1072 = vadd.f32 0.0, %v1071
    %v1073 = vpop.f32.mrb[0].mxu0
    %v1074 = vpop.f32.mrb[0].mxu0
    %v1075 = vpop.f32.mrb[0].mxu0
    %1076 = vdwg.mxu0
    %v1078 = vsel %vm343, %v1028, 0
    %v1081 = vsel %vm343, %v1030, 0
    %1083 = vmatprep.subr.bf16.mxu0 0
    %1084 = vmatpush1.bf16.xpose.msra.mxu0 %v1081
    %1085 = vmatprep.subr.bf16.mxu0 0
    %1086 = vmatpush1.bf16.xpose.msra.mxu0 0
    %1087 = vmatprep.subr.bf16.mxu0 0
    %1088 = vmatpush1.bf16.xpose.msra.mxu0 0
    %1089 = vmatprep.subr.bf16.mxu0 0
    %1090 = vmatpush1.bf16.xpose.msra.mxu0 0
    %1091 = vmatprep.subr.bf16.mxu0 0
    %1092 = vmatpush1.bf16.xpose.msra.mxu0 0
    %1093 = vmatprep.subr.bf16.mxu0 0
    %1094 = vmatpush1.bf16.xpose.msra.mxu0 0
    %1095 = vmatprep.subr.bf16.mxu0 0
    %1096 = vmatpush1.bf16.xpose.msra.mxu0 0
    %1097 = vmatprep.subr.bf16.mxu0 0
    %1098 = vmatpush1.bf16.xpose.msra.mxu0 0
    %1099 = vmatprep.subr.bf16.mxu0 0
    %1100 = vmatpush1.bf16.xpose.msra.mxu0 0
    %1101 = vmatprep.subr.bf16.mxu0 0
    %1102 = vmatpush1.bf16.xpose.msra.mxu0 0
    %1103 = vmatprep.subr.bf16.mxu0 0
    %1104 = vmatpush1.bf16.xpose.msra.mxu0 0
    %1105 = vmatprep.subr.bf16.mxu0 0
    %1106 = vmatpush1.bf16.xpose.msra.mxu0 0
    %1107 = vmatprep.subr.bf16.mxu0 0
    %1108 = vmatpush1.bf16.xpose.msra.mxu0 0
    %1109 = vmatprep.subr.bf16.mxu0 0
    %1110 = vmatpush1.bf16.xpose.msra.mxu0 0
    %1111 = vmatprep.subr.bf16.mxu0 0
    %1112 = vmatpush1.bf16.xpose.msra.mxu0 0
    %1113 = vmatprep.subr.bf16.mxu0 0
    %1114 = vmatpush1.bf16.xpose.msra.mxu0 0
    %1115 = vmatprep.mubr.bf16.mxu0 0
    %1116 = vmatmul.mubr.bf16.gmra.mrb[0].mxu0 %v1078
    %v1117 = vpop.f32.mrb[0].mxu0
    %v1118 = vadd.f32 0.0, %v1117
    %v1119 = vpop.f32.mrb[0].mxu0
    %v1120 = vpop.f32.mrb[0].mxu0
    %v1121 = vpop.f32.mrb[0].mxu0
    %1122 = vdwg.mxu0
    %v1123 = vmul.f32 %v1072, 0.25
    %v1124 = vmul.f32 %v1118, 0.25
    %vm1125 = vcmask 31744
    %v1126 = vsel %vm1125, %v1123, -inf
    %1127 = vmax.xlane.f32.xlu0 %v1126
    %v1128 = vpop.xlane.xlu0 %1127
    %v1129 = vsel %vm1125, %v1124, -inf
    %1130 = vmax.xlane.f32.xlu0 %v1129
    %v1131 = vpop.xlane.xlu0 %1130
    %v1132 = vsub.f32 %v1123, %v1128
    %v1133 = vsub.f32 %v1124, %v1131
    %v1134 = vmul.f32 %v1132, 1.442695
    %v1135 = vpow.pop %v1134
    %v1136 = vmul.f32 %v1133, 1.442695
    %v1137 = vpow.pop %v1136
    %v1138 = vsel %vm1125, %v1135, 0.0
    %1139 = vadd.xlane.f32.xlu0 %v1138
    %v1140 = vpop.xlane.xlu0 %1139
    %v1141 = vsel %vm1125, %v1137, 0.0
    %1142 = vadd.xlane.f32.xlu0 %v1141
    %v1143 = vpop.xlane.xlu0 %1142
    %v1144 = vrcp.pop %v1140
    %v1145 = vmul.f32 %v1135, %v1144
    %v1146 = vrcp.pop %v1143
    %v1147 = vmul.f32 %v1137, %v1146
    %v1148 = vpack.c.bf16 %v1145, %v1145
    %v1149 = vpack.c.bf16 %v1147, %v1147
    %1151 = vrot.lane.b32.xlu0 %v1029, 96
    %v1152 = vpop.permute.xlu0 %1151
    %v1154 = vsel %vm1125, %v1148, 0
    %vm1156 = vcmask 1041408
    %v1158 = vsel %vm1156, %v1152, 0
    %1160 = vmatprep.subr.bf16.mxu0 0
    %1161 = vmatpush1.bf16.msra.mxu0 %v1158
    %1162 = vmatprep.subr.bf16.mxu0 0
    %1163 = vmatpush1.bf16.msra.mxu0 0
    %1164 = vmatprep.subr.bf16.mxu0 0
    %1165 = vmatpush1.bf16.msra.mxu0 0
    %1166 = vmatprep.subr.bf16.mxu0 0
    %1167 = vmatpush1.bf16.msra.mxu0 0
    %1168 = vmatprep.subr.bf16.mxu0 0
    %1169 = vmatpush1.bf16.msra.mxu0 0
    %1170 = vmatprep.subr.bf16.mxu0 0
    %1171 = vmatpush1.bf16.msra.mxu0 0
    %1172 = vmatprep.subr.bf16.mxu0 0
    %1173 = vmatpush1.bf16.msra.mxu0 0
    %1174 = vmatprep.subr.bf16.mxu0 0
    %1175 = vmatpush1.bf16.msra.mxu0 0
    %1176 = vmatprep.subr.bf16.mxu0 0
    %1177 = vmatpush1.bf16.msra.mxu0 0
    %1178 = vmatprep.subr.bf16.mxu0 0
    %1179 = vmatpush1.bf16.msra.mxu0 0
    %1180 = vmatprep.subr.bf16.mxu0 0
    %1181 = vmatpush1.bf16.msra.mxu0 0
    %1182 = vmatprep.subr.bf16.mxu0 0
    %1183 = vmatpush1.bf16.msra.mxu0 0
    %1184 = vmatprep.subr.bf16.mxu0 0
    %1185 = vmatpush1.bf16.msra.mxu0 0
    %1186 = vmatprep.subr.bf16.mxu0 0
    %1187 = vmatpush1.bf16.msra.mxu0 0
    %1188 = vmatprep.subr.bf16.mxu0 0
    %1189 = vmatpush1.bf16.msra.mxu0 0
    %1190 = vmatprep.subr.bf16.mxu0 0
    %1191 = vmatpush1.bf16.msra.mxu0 0
    %1192 = vmatprep.mubr.bf16.mxu0 0
    %1193 = vmatmul.mubr.bf16.gmra.mrb[0].mxu0 %v1154
    %v1194 = vpop.f32.mrb[0].mxu0
    %v1195 = vadd.f32 0.0, %v1194
    %v1196 = vpop.f32.mrb[0].mxu0
    %v1197 = vpop.f32.mrb[0].mxu0
    %v1198 = vpop.f32.mrb[0].mxu0
    %1199 = vdwg.mxu0
    %1201 = vrot.lane.b32.xlu0 %v1030, 96
    %v1202 = vpop.permute.xlu0 %1201
    %v1204 = vsel %vm1125, %v1149, 0
    %v1207 = vsel %vm1156, %v1202, 0
    %1209 = vmatprep.subr.bf16.mxu0 0
    %1210 = vmatpush1.bf16.msra.mxu0 %v1207
    %1211 = vmatprep.subr.bf16.mxu0 0
    %1212 = vmatpush1.bf16.msra.mxu0 0
    %1213 = vmatprep.subr.bf16.mxu0 0
    %1214 = vmatpush1.bf16.msra.mxu0 0
    %1215 = vmatprep.subr.bf16.mxu0 0
    %1216 = vmatpush1.bf16.msra.mxu0 0
    %1217 = vmatprep.subr.bf16.mxu0 0
    %1218 = vmatpush1.bf16.msra.mxu0 0
    %1219 = vmatprep.subr.bf16.mxu0 0
    %1220 = vmatpush1.bf16.msra.mxu0 0
    %1221 = vmatprep.subr.bf16.mxu0 0
    %1222 = vmatpush1.bf16.msra.mxu0 0
    %1223 = vmatprep.subr.bf16.mxu0 0
    %1224 = vmatpush1.bf16.msra.mxu0 0
    %1225 = vmatprep.subr.bf16.mxu0 0
    %1226 = vmatpush1.bf16.msra.mxu0 0
    %1227 = vmatprep.subr.bf16.mxu0 0
    %1228 = vmatpush1.bf16.msra.mxu0 0
    %1229 = vmatprep.subr.bf16.mxu0 0
    %1230 = vmatpush1.bf16.msra.mxu0 0
    %1231 = vmatprep.subr.bf16.mxu0 0
    %1232 = vmatpush1.bf16.msra.mxu0 0
    %1233 = vmatprep.subr.bf16.mxu0 0
    %1234 = vmatpush1.bf16.msra.mxu0 0
    %1235 = vmatprep.subr.bf16.mxu0 0
    %1236 = vmatpush1.bf16.msra.mxu0 0
    %1237 = vmatprep.subr.bf16.mxu0 0
    %1238 = vmatpush1.bf16.msra.mxu0 0
    %1239 = vmatprep.subr.bf16.mxu0 0
    %1240 = vmatpush1.bf16.msra.mxu0 0
    %1241 = vmatprep.mubr.bf16.mxu0 0
    %1242 = vmatmul.mubr.bf16.gmra.mrb[0].mxu0 %v1204
    %v1243 = vpop.f32.mrb[0].mxu0
    %v1244 = vadd.f32 0.0, %v1243
    %v1245 = vpop.f32.mrb[0].mxu0
    %v1246 = vpop.f32.mrb[0].mxu0
    %v1247 = vpop.f32.mrb[0].mxu0
    %1248 = vdwg.mxu0
    %1250 = vrot.lane.b32.xlu0 %v1027, 112
    %v1251 = vpop.permute.xlu0 %1250
    %1252 = vrot.lane.b32.xlu0 %v1029, 112
    %v1253 = vpop.permute.xlu0 %1252
    %v1255 = vsel %vm343, %v1251, 0
    %v1258 = vsel %vm343, %v1253, 0
    %1260 = vmatprep.subr.bf16.mxu0 0
    %1261 = vmatpush1.bf16.xpose.msra.mxu0 %v1258
    %1262 = vmatprep.subr.bf16.mxu0 0
    %1263 = vmatpush1.bf16.xpose.msra.mxu0 0
    %1264 = vmatprep.subr.bf16.mxu0 0
    %1265 = vmatpush1.bf16.xpose.msra.mxu0 0
    %1266 = vmatprep.subr.bf16.mxu0 0
    %1267 = vmatpush1.bf16.xpose.msra.mxu0 0
    %1268 = vmatprep.subr.bf16.mxu0 0
    %1269 = vmatpush1.bf16.xpose.msra.mxu0 0
    %1270 = vmatprep.subr.bf16.mxu0 0
    %1271 = vmatpush1.bf16.xpose.msra.mxu0 0
    %1272 = vmatprep.subr.bf16.mxu0 0
    %1273 = vmatpush1.bf16.xpose.msra.mxu0 0
    %1274 = vmatprep.subr.bf16.mxu0 0
    %1275 = vmatpush1.bf16.xpose.msra.mxu0 0
    %1276 = vmatprep.subr.bf16.mxu0 0
    %1277 = vmatpush1.bf16.xpose.msra.mxu0 0
    %1278 = vmatprep.subr.bf16.mxu0 0
    %1279 = vmatpush1.bf16.xpose.msra.mxu0 0
    %1280 = vmatprep.subr.bf16.mxu0 0
    %1281 = vmatpush1.bf16.xpose.msra.mxu0 0
    %1282 = vmatprep.subr.bf16.mxu0 0
    %1283 = vmatpush1.bf16.xpose.msra.mxu0 0
    %1284 = vmatprep.subr.bf16.mxu0 0
    %1285 = vmatpush1.bf16.xpose.msra.mxu0 0
    %1286 = vmatprep.subr.bf16.mxu0 0
    %1287 = vmatpush1.bf16.xpose.msra.mxu0 0
    %1288 = vmatprep.subr.bf16.mxu0 0
    %1289 = vmatpush1.bf16.xpose.msra.mxu0 0
    %1290 = vmatprep.subr.bf16.mxu0 0
    %1291 = vmatpush1.bf16.xpose.msra.mxu0 0
    %1292 = vmatprep.mubr.bf16.mxu0 0
    %1293 = vmatmul.mubr.bf16.gmra.mrb[0].mxu0 %v1255
    %v1294 = vpop.f32.mrb[0].mxu0
    %v1295 = vadd.f32 0.0, %v1294
    %v1296 = vpop.f32.mrb[0].mxu0
    %v1297 = vpop.f32.mrb[0].mxu0
    %v1298 = vpop.f32.mrb[0].mxu0
    %1299 = vdwg.mxu0
    %1301 = vrot.lane.b32.xlu0 %v1028, 112
    %v1302 = vpop.permute.xlu0 %1301
    %1303 = vrot.lane.b32.xlu0 %v1030, 112
    %v1304 = vpop.permute.xlu0 %1303
    %v1306 = vsel %vm343, %v1302, 0
    %v1309 = vsel %vm343, %v1304, 0
    %1311 = vmatprep.subr.bf16.mxu0 0
    %1312 = vmatpush1.bf16.xpose.msra.mxu0 %v1309
    %1313 = vmatprep.subr.bf16.mxu0 0
    %1314 = vmatpush1.bf16.xpose.msra.mxu0 0
    %1315 = vmatprep.subr.bf16.mxu0 0
    %1316 = vmatpush1.bf16.xpose.msra.mxu0 0
    %1317 = vmatprep.subr.bf16.mxu0 0
    %1318 = vmatpush1.bf16.xpose.msra.mxu0 0
    %1319 = vmatprep.subr.bf16.mxu0 0
    %1320 = vmatpush1.bf16.xpose.msra.mxu0 0
    %1321 = vmatprep.subr.bf16.mxu0 0
    %1322 = vmatpush1.bf16.xpose.msra.mxu0 0
    %1323 = vmatprep.subr.bf16.mxu0 0
    %1324 = vmatpush1.bf16.xpose.msra.mxu0 0
    %1325 = vmatprep.subr.bf16.mxu0 0
    %1326 = vmatpush1.bf16.xpose.msra.mxu0 0
    %1327 = vmatprep.subr.bf16.mxu0 0
    %1328 = vmatpush1.bf16.xpose.msra.mxu0 0
    %1329 = vmatprep.subr.bf16.mxu0 0
    %1330 = vmatpush1.bf16.xpose.msra.mxu0 0
    %1331 = vmatprep.subr.bf16.mxu0 0
    %1332 = vmatpush1.bf16.xpose.msra.mxu0 0
    %1333 = vmatprep.subr.bf16.mxu0 0
    %1334 = vmatpush1.bf16.xpose.msra.mxu0 0
    %1335 = vmatprep.subr.bf16.mxu0 0
    %1336 = vmatpush1.bf16.xpose.msra.mxu0 0
    %1337 = vmatprep.subr.bf16.mxu0 0
    %1338 = vmatpush1.bf16.xpose.msra.mxu0 0
    %1339 = vmatprep.subr.bf16.mxu0 0
    %1340 = vmatpush1.bf16.xpose.msra.mxu0 0
    %1341 = vmatprep.subr.bf16.mxu0 0
    %1342 = vmatpush1.bf16.xpose.msra.mxu0 0
    %1343 = vmatprep.mubr.bf16.mxu0 0
    %1344 = vmatmul.mubr.bf16.gmra.mrb[0].mxu0 %v1306
    %v1345 = vpop.f32.mrb[0].mxu0
    %v1346 = vadd.f32 0.0, %v1345
    %v1347 = vpop.f32.mrb[0].mxu0
    %v1348 = vpop.f32.mrb[0].mxu0
    %v1349 = vpop.f32.mrb[0].mxu0
    %1350 = vdwg.mxu0
    %v1351 = vmul.f32 %v1295, 0.25
    %v1352 = vmul.f32 %v1346, 0.25
    %v1353 = vsel %vm1125, %v1351, -inf
    %1354 = vmax.xlane.f32.xlu0 %v1353
    %v1355 = vpop.xlane.xlu0 %1354
    %v1356 = vsel %vm1125, %v1352, -inf
    %1357 = vmax.xlane.f32.xlu0 %v1356
    %v1358 = vpop.xlane.xlu0 %1357
    %v1359 = vsub.f32 %v1351, %v1355
    %v1360 = vsub.f32 %v1352, %v1358
    %v1361 = vmul.f32 %v1359, 1.442695
    %v1362 = vpow.pop %v1361
    %v1363 = vmul.f32 %v1360, 1.442695
    %v1364 = vpow.pop %v1363
    %v1365 = vsel %vm1125, %v1362, 0.0
    %1366 = vadd.xlane.f32.xlu0 %v1365
    %v1367 = vpop.xlane.xlu0 %1366
    %v1368 = vsel %vm1125, %v1364, 0.0
    %1369 = vadd.xlane.f32.xlu0 %v1368
    %v1370 = vpop.xlane.xlu0 %1369
    %v1371 = vrcp.pop %v1367
    %v1372 = vmul.f32 %v1362, %v1371
    %v1373 = vrcp.pop %v1370
    %v1374 = vmul.f32 %v1364, %v1373
    %v1375 = vpack.c.bf16 %v1372, %v1372
    %v1376 = vpack.c.bf16 %v1374, %v1374
    %1377 = vrot.lane.b32.xlu0 %v1029, 80
    %v1378 = vpop.permute.xlu0 %1377
    %v1380 = vsel %vm1125, %v1375, 0
    %v1383 = vsel %vm1156, %v1378, 0
    %1385 = vmatprep.subr.bf16.mxu0 0
    %1386 = vmatpush1.bf16.msra.mxu0 %v1383
    %1387 = vmatprep.subr.bf16.mxu0 0
    %1388 = vmatpush1.bf16.msra.mxu0 0
    %1389 = vmatprep.subr.bf16.mxu0 0
    %1390 = vmatpush1.bf16.msra.mxu0 0
    %1391 = vmatprep.subr.bf16.mxu0 0
    %1392 = vmatpush1.bf16.msra.mxu0 0
    %1393 = vmatprep.subr.bf16.mxu0 0
    %1394 = vmatpush1.bf16.msra.mxu0 0
    %1395 = vmatprep.subr.bf16.mxu0 0
    %1396 = vmatpush1.bf16.msra.mxu0 0
    %1397 = vmatprep.subr.bf16.mxu0 0
    %1398 = vmatpush1.bf16.msra.mxu0 0
    %1399 = vmatprep.subr.bf16.mxu0 0
    %1400 = vmatpush1.bf16.msra.mxu0 0
    %1401 = vmatprep.subr.bf16.mxu0 0
    %1402 = vmatpush1.bf16.msra.mxu0 0
    %1403 = vmatprep.subr.bf16.mxu0 0
    %1404 = vmatpush1.bf16.msra.mxu0 0
    %1405 = vmatprep.subr.bf16.mxu0 0
    %1406 = vmatpush1.bf16.msra.mxu0 0
    %1407 = vmatprep.subr.bf16.mxu0 0
    %1408 = vmatpush1.bf16.msra.mxu0 0
    %1409 = vmatprep.subr.bf16.mxu0 0
    %1410 = vmatpush1.bf16.msra.mxu0 0
    %1411 = vmatprep.subr.bf16.mxu0 0
    %1412 = vmatpush1.bf16.msra.mxu0 0
    %1413 = vmatprep.subr.bf16.mxu0 0
    %1414 = vmatpush1.bf16.msra.mxu0 0
    %1415 = vmatprep.subr.bf16.mxu0 0
    %1416 = vmatpush1.bf16.msra.mxu0 0
    %1417 = vmatprep.mubr.bf16.mxu0 0
    %1418 = vmatmul.mubr.bf16.gmra.mrb[0].mxu0 %v1380
    %v1419 = vpop.f32.mrb[0].mxu0
    %v1420 = vadd.f32 0.0, %v1419
    %v1421 = vpop.f32.mrb[0].mxu0
    %v1422 = vpop.f32.mrb[0].mxu0
    %v1423 = vpop.f32.mrb[0].mxu0
    %1424 = vdwg.mxu0
    %1425 = vrot.lane.b32.xlu0 %v1030, 80
    %v1426 = vpop.permute.xlu0 %1425
    %v1428 = vsel %vm1125, %v1376, 0
    %v1431 = vsel %vm1156, %v1426, 0
    %1433 = vmatprep.subr.bf16.mxu0 0
    %1434 = vmatpush1.bf16.msra.mxu0 %v1431
    %1435 = vmatprep.subr.bf16.mxu0 0
    %1436 = vmatpush1.bf16.msra.mxu0 0
    %1437 = vmatprep.subr.bf16.mxu0 0
    %1438 = vmatpush1.bf16.msra.mxu0 0
    %1439 = vmatprep.subr.bf16.mxu0 0
    %1440 = vmatpush1.bf16.msra.mxu0 0
    %1441 = vmatprep.subr.bf16.mxu0 0
    %1442 = vmatpush1.bf16.msra.mxu0 0
    %1443 = vmatprep.subr.bf16.mxu0 0
    %1444 = vmatpush1.bf16.msra.mxu0 0
    %1445 = vmatprep.subr.bf16.mxu0 0
    %1446 = vmatpush1.bf16.msra.mxu0 0
    %1447 = vmatprep.subr.bf16.mxu0 0
    %1448 = vmatpush1.bf16.msra.mxu0 0
    %1449 = vmatprep.subr.bf16.mxu0 0
    %1450 = vmatpush1.bf16.msra.mxu0 0
    %1451 = vmatprep.subr.bf16.mxu0 0
    %1452 = vmatpush1.bf16.msra.mxu0 0
    %1453 = vmatprep.subr.bf16.mxu0 0
    %1454 = vmatpush1.bf16.msra.mxu0 0
    %1455 = vmatprep.subr.bf16.mxu0 0
    %1456 = vmatpush1.bf16.msra.mxu0 0
    %1457 = vmatprep.subr.bf16.mxu0 0
    %1458 = vmatpush1.bf16.msra.mxu0 0
    %1459 = vmatprep.subr.bf16.mxu0 0
    %1460 = vmatpush1.bf16.msra.mxu0 0
    %1461 = vmatprep.subr.bf16.mxu0 0
    %1462 = vmatpush1.bf16.msra.mxu0 0
    %1463 = vmatprep.subr.bf16.mxu0 0
    %1464 = vmatpush1.bf16.msra.mxu0 0
    %1465 = vmatprep.mubr.bf16.mxu0 0
    %1466 = vmatmul.mubr.bf16.gmra.mrb[0].mxu0 %v1428
    %v1467 = vpop.f32.mrb[0].mxu0
    %v1468 = vadd.f32 0.0, %v1467
    %v1469 = vpop.f32.mrb[0].mxu0
    %v1470 = vpop.f32.mrb[0].mxu0
    %v1471 = vpop.f32.mrb[0].mxu0
    %1472 = vdwg.mxu0
    %1475 = vrot.lane.b32.xlu0 %v1420, 16
    %v1476 = vpop.permute.xlu0 %1475
    %1477 = vrot.lane.b32.xlu0 %v1468, 16
    %v1478 = vpop.permute.xlu0 %1477
    %v1481 = vsel %vm343, %v1195, %v1476
    %v1482 = vsel %vm343, %v1244, %v1478
    %v1483 = vld [vmem:[%s8] sm:$0xf]
    %v1484 = vld [vmem:[%s8 + $0x4] sm:$0xf]
    %v1485 = vld [vmem:[%s8 + $0x8] sm:$0xf]
    %v1486 = vld [vmem:[%s8 + $0xc] sm:$0xf]
    %v1487 = vpack.c.bf16 %v1482, %v1481
    %v1488 = vlaneseq
    %v1489 = vshrl.u32 %v1488, 7
    %v1490 = vsub.s32 1, %v1489
    %v1491 = vrot.slane %v271, %v1490
    %v1496 = vunpack.c.l.b16 %v1483
    %v1497 = vunpack.c.l.b16 %v1484
    %v1498 = vunpack.c.l.b16 %v1485
    %v1499 = vunpack.c.l.b16 %v1486
    %v1500 = vpack.c.b16 %v1497, %v1496
    %v1501 = vpack.c.b16 %v1499, %v1498
    %v1505 = vsel %vm111, %v1487, 0
    %1507 = vmatprep.subr.bf16.mxu0 0
    %1508 = vmatpush1.bf16.msra.mxu0 %v1500
    %1509 = vmatprep.subr.bf16.mxu0 0
    %1510 = vmatpush1.bf16.msra.mxu0 %v1501
    %1511 = vmatprep.subr.bf16.mxu0 0
    %1512 = vmatpush1.bf16.msra.mxu0 0
    %1513 = vmatprep.subr.bf16.mxu0 0
    %1514 = vmatpush1.bf16.msra.mxu0 0
    %1515 = vmatprep.subr.bf16.mxu0 0
    %1516 = vmatpush1.bf16.msra.mxu0 0
    %1517 = vmatprep.subr.bf16.mxu0 0
    %1518 = vmatpush1.bf16.msra.mxu0 0
    %1519 = vmatprep.subr.bf16.mxu0 0
    %1520 = vmatpush1.bf16.msra.mxu0 0
    %1521 = vmatprep.subr.bf16.mxu0 0
    %1522 = vmatpush1.bf16.msra.mxu0 0
    %1523 = vmatprep.subr.bf16.mxu0 0
    %1524 = vmatpush1.bf16.msra.mxu0 0
    %1525 = vmatprep.subr.bf16.mxu0 0
    %1526 = vmatpush1.bf16.msra.mxu0 0
    %1527 = vmatprep.subr.bf16.mxu0 0
    %1528 = vmatpush1.bf16.msra.mxu0 0
    %1529 = vmatprep.subr.bf16.mxu0 0
    %1530 = vmatpush1.bf16.msra.mxu0 0
    %1531 = vmatprep.subr.bf16.mxu0 0
    %1532 = vmatpush1.bf16.msra.mxu0 0
    %1533 = vmatprep.subr.bf16.mxu0 0
    %1534 = vmatpush1.bf16.msra.mxu0 0
    %1535 = vmatprep.subr.bf16.mxu0 0
    %1536 = vmatpush1.bf16.msra.mxu0 0
    %1537 = vmatprep.subr.bf16.mxu0 0
    %1538 = vmatpush1.bf16.msra.mxu0 0
    %1539 = vmatprep.mubr.bf16.mxu0 0
    %1540 = vmatmul.mubr.bf16.gmra.mrb[0].mxu0 %v1505
    %v1541 = vpop.f32.mrb[0].mxu0
    %v1542 = vadd.f32 %v1491, %v1541
    %v1543 = vpop.f32.mrb[0].mxu0
    %v1544 = vpop.f32.mrb[0].mxu0
    %v1545 = vadd.f32 %v1491, %v1544
    %v1546 = vpop.f32.mrb[0].mxu0
    %1547 = vdwg.mxu0
    %v1548 = vadd.f32 %v899, %v1542
    %v1549 = vadd.f32 %v900, %v1545
    %v1550 = vsel %vm111, %v1548, 0.0
    %1551 = vadd.xlane.f32.xlu0 %v1550
    %v1552 = vpop.xlane.xlu0 %1551
    %v1553 = vsel %vm111, %v1549, 0.0
    %1554 = vadd.xlane.f32.xlu0 %v1553
    %v1555 = vpop.xlane.xlu0 %1554
    %v1556 = vmul.f32 %v1552, %v868
    %v1557 = vmul.f32 %v1555, %v868
    %v1558 = vsub.f32 %v1548, %v1556
    %v1559 = vsub.f32 %v1549, %v1557
    %v1560 = vmul.f32 %v1558, %v1558
    %v1561 = vmul.f32 %v1559, %v1559
    %v1562 = vsel %vm111, %v1560, 0.0
    %1563 = vadd.xlane.f32.xlu0 %v1562
    %v1564 = vpop.xlane.xlu0 %1563
    %v1565 = vsel %vm111, %v1561, 0.0
    %1566 = vadd.xlane.f32.xlu0 %v1565
    %v1567 = vpop.xlane.xlu0 %1566
    %v1568 = vmul.f32 %v1564, %v868
    %v1569 = vmul.f32 %v1567, %v868
    %v1570 = vadd.f32 %v1568, 1e-05
    %v1571 = vadd.f32 %v1569, 1e-05
    %v1572 = vrsqrt.pop %v1570
    %v1573 = vrsqrt.pop %v1571
    %v1574 = vmul.f32 %v1558, %v1572
    %v1575 = vmul.f32 %v1559, %v1573
    %v1576 = vlaneseq
    %v1577 = vshrl.u32 %v1576, 7
    %v1578 = vsub.s32 5, %v1577
    %v1579 = vrot.slane %v271, %v1578
    %v1580 = vmul.f32 %v1574, %v1579
    %v1581 = vmul.f32 %v1575, %v1579
    %v1582 = vlaneseq
    %v1583 = vshrl.u32 %v1582, 7
    %v1584 = vsub.s32 6, %v1583
    %v1585 = vrot.slane %v271, %v1584
    %v1586 = vadd.f32 %v1580, %v1585
    %v1587 = vadd.f32 %v1581, %v1585
    %v1588 = vld [vmem:[%s9] sm:$0xf]
    %v1589 = vld [vmem:[%s9 + $0x4] sm:$0xf]
    %v1590 = vld [vmem:[%s9 + $0x8] sm:$0xf]
    %v1591 = vld [vmem:[%s9 + $0xc] sm:$0xf]
    %v1592 = vpack.c.bf16 %v1587, %v1586
    %v1593 = vld [vmem:[%s13] sm:$0x1]
    %v1595 = vlaneseq
    %v1596 = vshrl.u32 %v1595, 7
    %v1597 = vsub.s32 0, %v1596
    %v1598 = vrot.slane %v1593, %v1597
    %v1604 = vunpack.c.l.b16 %v1588
    %v1605 = vunpack.c.l.b16 %v1589
    %v1606 = vunpack.c.l.b16 %v1590
    %v1607 = vunpack.c.l.b16 %v1591
    %v1608 = vpack.c.b16 %v1605, %v1604
    %v1609 = vpack.c.b16 %v1607, %v1606
    %v1613 = vsel %vm111, %v1592, 0
    %1615 = vmatprep.subr.bf16.mxu0 0
    %1616 = vmatpush1.bf16.msra.mxu0 %v1608
    %1617 = vmatprep.subr.bf16.mxu0 0
    %1618 = vmatpush1.bf16.msra.mxu0 %v1609
    %1619 = vmatprep.subr.bf16.mxu0 0
    %1620 = vmatpush1.bf16.msra.mxu0 0
    %1621 = vmatprep.subr.bf16.mxu0 0
    %1622 = vmatpush1.bf16.msra.mxu0 0
    %1623 = vmatprep.subr.bf16.mxu0 0
    %1624 = vmatpush1.bf16.msra.mxu0 0
    %1625 = vmatprep.subr.bf16.mxu0 0
    %1626 = vmatpush1.bf16.msra.mxu0 0
    %1627 = vmatprep.subr.bf16.mxu0 0
    %1628 = vmatpush1.bf16.msra.mxu0 0
    %1629 = vmatprep.subr.bf16.mxu0 0
    %1630 = vmatpush1.bf16.msra.mxu0 0
    %1631 = vmatprep.subr.bf16.mxu0 0
    %1632 = vmatpush1.bf16.msra.mxu0 0
    %1633 = vmatprep.subr.bf16.mxu0 0
    %1634 = vmatpush1.bf16.msra.mxu0 0
    %1635 = vmatprep.subr.bf16.mxu0 0
    %1636 = vmatpush1.bf16.msra.mxu0 0
    %1637 = vmatprep.subr.bf16.mxu0 0
    %1638 = vmatpush1.bf16.msra.mxu0 0
    %1639 = vmatprep.subr.bf16.mxu0 0
    %1640 = vmatpush1.bf16.msra.mxu0 0
    %1641 = vmatprep.subr.bf16.mxu0 0
    %1642 = vmatpush1.bf16.msra.mxu0 0
    %1643 = vmatprep.subr.bf16.mxu0 0
    %1644 = vmatpush1.bf16.msra.mxu0 0
    %1645 = vmatprep.subr.bf16.mxu0 0
    %1646 = vmatpush1.bf16.msra.mxu0 0
    %1647 = vmatprep.mubr.bf16.mxu0 0
    %1648 = vmatmul.mubr.bf16.gmra.mrb[0].mxu0 %v1613
    %v1649 = vpop.f32.mrb[0].mxu0
    %v1650 = vadd.f32 %v1598, %v1649
    %v1651 = vpop.f32.mrb[0].mxu0
    %v1652 = vpop.f32.mrb[0].mxu0
    %v1653 = vadd.f32 %v1598, %v1652
    %v1654 = vpop.f32.mrb[0].mxu0
    %1655 = vdwg.mxu0
    %v1656 = vmax.f32 %v1650, 0.0
    %v1657 = vmax.f32 %v1653, 0.0
    %v1658 = vld [vmem:[%s10] sm:$0xf]
    %v1659 = vld [vmem:[%s10 + $0x4] sm:$0xf]
    %v1660 = vld [vmem:[%s10 + $0x8] sm:$0xf]
    %v1661 = vld [vmem:[%s10 + $0xc] sm:$0xf]
    %v1662 = vld [vmem:[%s10 + $0x10] sm:$0xf]
    %v1663 = vld [vmem:[%s10 + $0x14] sm:$0xf]
    %v1664 = vld [vmem:[%s10 + $0x18] sm:$0xf]
    %v1665 = vld [vmem:[%s10 + $0x1c] sm:$0xf]
    %v1666 = vpack.c.bf16 %v1657, %v1656
    %v1667 = vlaneseq
    %v1668 = vshrl.u32 %v1667, 7
    %v1669 = vsub.s32 2, %v1668
    %v1670 = vrot.slane %v271, %v1669
    %v1679 = vunpack.c.l.b16 %v1658
    %v1680 = vunpack.c.l.b16 %v1659
    %v1681 = vunpack.c.l.b16 %v1660
    %v1682 = vunpack.c.l.b16 %v1661
    %v1683 = vunpack.c.l.b16 %v1662
    %v1684 = vunpack.c.l.b16 %v1663
    %v1685 = vunpack.c.l.b16 %v1664
    %v1686 = vunpack.c.l.b16 %v1665
    %v1687 = vpack.c.b16 %v1680, %v1679
    %v1688 = vpack.c.b16 %v1682, %v1681
    %v1689 = vpack.c.b16 %v1684, %v1683
    %v1690 = vpack.c.b16 %v1686, %v1685
    %vm1695 = vcmask 523264
    %v1697 = vsel %vm1695, %v1666, 0
    %1699 = vmatprep.subr.bf16.mxu0 0
    %1700 = vmatpush1.bf16.msra.mxu0 %v1687
    %1701 = vmatprep.subr.bf16.mxu0 0
    %1702 = vmatpush1.bf16.msra.mxu0 %v1688
    %1703 = vmatprep.subr.bf16.mxu0 0
    %1704 = vmatpush1.bf16.msra.mxu0 %v1689
    %1705 = vmatprep.subr.bf16.mxu0 0
    %1706 = vmatpush1.bf16.msra.mxu0 %v1690
    %1707 = vmatprep.subr.bf16.mxu0 0
    %1708 = vmatpush1.bf16.msra.mxu0 0
    %1709 = vmatprep.subr.bf16.mxu0 0
    %1710 = vmatpush1.bf16.msra.mxu0 0
    %1711 = vmatprep.subr.bf16.mxu0 0
    %1712 = vmatpush1.bf16.msra.mxu0 0
    %1713 = vmatprep.subr.bf16.mxu0 0
    %1714 = vmatpush1.bf16.msra.mxu0 0
    %1715 = vmatprep.subr.bf16.mxu0 0
    %1716 = vmatpush1.bf16.msra.mxu0 0
    %1717 = vmatprep.subr.bf16.mxu0 0
    %1718 = vmatpush1.bf16.msra.mxu0 0
    %1719 = vmatprep.subr.bf16.mxu0 0
    %1720 = vmatpush1.bf16.msra.mxu0 0
    %1721 = vmatprep.subr.bf16.mxu0 0
    %1722 = vmatpush1.bf16.msra.mxu0 0
    %1723 = vmatprep.subr.bf16.mxu0 0
    %1724 = vmatpush1.bf16.msra.mxu0 0
    %1725 = vmatprep.subr.bf16.mxu0 0
    %1726 = vmatpush1.bf16.msra.mxu0 0
    %1727 = vmatprep.subr.bf16.mxu0 0
    %1728 = vmatpush1.bf16.msra.mxu0 0
    %1729 = vmatprep.subr.bf16.mxu0 0
    %1730 = vmatpush1.bf16.msra.mxu0 0
    %1731 = vmatprep.mubr.bf16.mxu0 0
    %1732 = vmatmul.mubr.bf16.gmra.mrb[0].mxu0 %v1697
    %v1733 = vpop.f32.mrb[0].mxu0
    %v1734 = vadd.f32 %v1670, %v1733
    %v1735 = vpop.f32.mrb[0].mxu0
    %v1736 = vpop.f32.mrb[0].mxu0
    %v1737 = vadd.f32 %v1670, %v1736
    %v1738 = vpop.f32.mrb[0].mxu0
    %1739 = vdwg.mxu0
    %v1740 = vadd.f32 %v1586, %v1734
    %v1741 = vadd.f32 %v1587, %v1737
    %v1742 = vsel %vm111, %v1740, 0.0
    %1743 = vadd.xlane.f32.xlu0 %v1742
    %v1744 = vpop.xlane.xlu0 %1743
    %v1745 = vsel %vm111, %v1741, 0.0
    %1746 = vadd.xlane.f32.xlu0 %v1745
    %v1747 = vpop.xlane.xlu0 %1746
    %v1748 = vmul.f32 %v1744, %v868
    %v1749 = vmul.f32 %v1747, %v868
    %v1750 = vsub.f32 %v1740, %v1748
    %v1751 = vsub.f32 %v1741, %v1749
    %v1752 = vmul.f32 %v1750, %v1750
    %v1753 = vmul.f32 %v1751, %v1751
    %v1754 = vsel %vm111, %v1752, 0.0
    %1755 = vadd.xlane.f32.xlu0 %v1754
    %v1756 = vpop.xlane.xlu0 %1755
    %v1757 = vsel %vm111, %v1753, 0.0
    %1758 = vadd.xlane.f32.xlu0 %v1757
    %v1759 = vpop.xlane.xlu0 %1758
    %v1760 = vmul.f32 %v1756, %v868
    %v1761 = vmul.f32 %v1759, %v868
    %v1762 = vadd.f32 %v1760, 1e-05
    %v1763 = vadd.f32 %v1761, 1e-05
    %v1764 = vrsqrt.pop %v1762
    %v1765 = vrsqrt.pop %v1763
    %v1766 = vmul.f32 %v1750, %v1764
    %v1767 = vmul.f32 %v1751, %v1765
    %v1768 = vlaneseq
    %v1769 = vshrl.u32 %v1768, 7
    %v1770 = vsub.s32 7, %v1769
    %v1771 = vrot.slane %v271, %v1770
    %v1772 = vmul.f32 %v1766, %v1771
    %v1773 = vmul.f32 %v1767, %v1771
    %v1774 = vlaneseq
    %v1775 = vshrl.u32 %v1774, 7
    %v1776 = vsub.s32 0, %v1775
    %v1777 = vrot.slane %v272, %v1776
    %v1778 = vadd.f32 %v1772, %v1777
    %v1779 = vadd.f32 %v1773, %v1777
    %s1780 = scalar_lea.vmem %s11, 2
    %v1781 = vld [vmem:[%s1780] sm:$0x3]
    %s1782 = scalar_lea.vmem %s12, 16
    %v1783 = vld [vmem:[%s1782] sm:$0xff]
    %v1784 = vld [vmem:[%s1782 + $0x8] sm:$0x1]
    %s1785 = scalar_lea.vmem %s5, 16
    %v1786 = vld [vmem:[%s1785] sm:$0xf]
    %v1787 = vld [vmem:[%s1785 + $0x4] sm:$0xf]
    %v1788 = vld [vmem:[%s1785 + $0x8] sm:$0xf]
    %v1789 = vld [vmem:[%s1785 + $0xc] sm:$0xf]
    %v1790 = vpack.c.bf16 %v1779, %v1778
    %v1791 = vlaneseq
    %v1792 = vshrl.u32 %v1791, 7
    %v1793 = vsub.s32 0, %v1792
    %v1794 = vrot.slane %v1781, %v1793
    %v1799 = vunpack.c.l.b16 %v1786
    %v1800 = vunpack.c.l.b16 %v1787
    %v1801 = vunpack.c.l.b16 %v1788
    %v1802 = vunpack.c.l.b16 %v1789
    %v1803 = vpack.c.b16 %v1800, %v1799
    %v1804 = vpack.c.b16 %v1802, %v1801
    %v1808 = vsel %vm111, %v1790, 0
    %1810 = vmatprep.subr.bf16.mxu0 0
    %1811 = vmatpush1.bf16.msra.mxu0 %v1803
    %1812 = vmatprep.subr.bf16.mxu0 0
    %1813 = vmatpush1.bf16.msra.mxu0 %v1804
    %1814 = vmatprep.subr.bf16.mxu0 0
    %1815 = vmatpush1.bf16.msra.mxu0 0
    %1816 = vmatprep.subr.bf16.mxu0 0
    %1817 = vmatpush1.bf16.msra.mxu0 0
    %1818 = vmatprep.subr.bf16.mxu0 0
    %1819 = vmatpush1.bf16.msra.mxu0 0
    %1820 = vmatprep.subr.bf16.mxu0 0
    %1821 = vmatpush1.bf16.msra.mxu0 0
    %1822 = vmatprep.subr.bf16.mxu0 0
    %1823 = vmatpush1.bf16.msra.mxu0 0
    %1824 = vmatprep.subr.bf16.mxu0 0
    %1825 = vmatpush1.bf16.msra.mxu0 0
    %1826 = vmatprep.subr.bf16.mxu0 0
    %1827 = vmatpush1.bf16.msra.mxu0 0
    %1828 = vmatprep.subr.bf16.mxu0 0
    %1829 = vmatpush1.bf16.msra.mxu0 0
    %1830 = vmatprep.subr.bf16.mxu0 0
    %1831 = vmatpush1.bf16.msra.mxu0 0
    %1832 = vmatprep.subr.bf16.mxu0 0
    %1833 = vmatpush1.bf16.msra.mxu0 0
    %1834 = vmatprep.subr.bf16.mxu0 0
    %1835 = vmatpush1.bf16.msra.mxu0 0
    %1836 = vmatprep.subr.bf16.mxu0 0
    %1837 = vmatpush1.bf16.msra.mxu0 0
    %1838 = vmatprep.subr.bf16.mxu0 0
    %1839 = vmatpush1.bf16.msra.mxu0 0
    %1840 = vmatprep.subr.bf16.mxu0 0
    %1841 = vmatpush1.bf16.msra.mxu0 0
    %1842 = vmatprep.mubr.bf16.mxu0 0
    %1843 = vmatmul.mubr.bf16.gmra.mrb[0].mxu0 %v1808
    %v1844 = vpop.f32.mrb[0].mxu0
    %v1845 = vadd.f32 %v1794, %v1844
    %v1846 = vpop.f32.mrb[0].mxu0
    %v1847 = vpop.f32.mrb[0].mxu0
    %v1848 = vadd.f32 %v1794, %v1847
    %v1849 = vpop.f32.mrb[0].mxu0
    %1850 = vdwg.mxu0
    %v1851 = vpack.c.bf16 %v1845, %v1845
    %v1852 = vpack.c.bf16 %v1848, %v1848
    %1854 = vrot.lane.b32.xlu0 %v1851, 96
    %v1855 = vpop.permute.xlu0 %1854
    %v1857 = vsel %vm343, %v1851, 0
    %v1860 = vsel %vm343, %v1855, 0
    %1862 = vmatprep.subr.bf16.mxu0 0
    %1863 = vmatpush1.bf16.xpose.msra.mxu0 %v1860
    %1864 = vmatprep.subr.bf16.mxu0 0
    %1865 = vmatpush1.bf16.xpose.msra.mxu0 0
    %1866 = vmatprep.subr.bf16.mxu0 0
    %1867 = vmatpush1.bf16.xpose.msra.mxu0 0
    %1868 = vmatprep.subr.bf16.mxu0 0
    %1869 = vmatpush1.bf16.xpose.msra.mxu0 0
    %1870 = vmatprep.subr.bf16.mxu0 0
    %1871 = vmatpush1.bf16.xpose.msra.mxu0 0
    %1872 = vmatprep.subr.bf16.mxu0 0
    %1873 = vmatpush1.bf16.xpose.msra.mxu0 0
    %1874 = vmatprep.subr.bf16.mxu0 0
    %1875 = vmatpush1.bf16.xpose.msra.mxu0 0
    %1876 = vmatprep.subr.bf16.mxu0 0
    %1877 = vmatpush1.bf16.xpose.msra.mxu0 0
    %1878 = vmatprep.subr.bf16.mxu0 0
    %1879 = vmatpush1.bf16.xpose.msra.mxu0 0
    %1880 = vmatprep.subr.bf16.mxu0 0
    %1881 = vmatpush1.bf16.xpose.msra.mxu0 0
    %1882 = vmatprep.subr.bf16.mxu0 0
    %1883 = vmatpush1.bf16.xpose.msra.mxu0 0
    %1884 = vmatprep.subr.bf16.mxu0 0
    %1885 = vmatpush1.bf16.xpose.msra.mxu0 0
    %1886 = vmatprep.subr.bf16.mxu0 0
    %1887 = vmatpush1.bf16.xpose.msra.mxu0 0
    %1888 = vmatprep.subr.bf16.mxu0 0
    %1889 = vmatpush1.bf16.xpose.msra.mxu0 0
    %1890 = vmatprep.subr.bf16.mxu0 0
    %1891 = vmatpush1.bf16.xpose.msra.mxu0 0
    %1892 = vmatprep.subr.bf16.mxu0 0
    %1893 = vmatpush1.bf16.xpose.msra.mxu0 0
    %1894 = vmatprep.mubr.bf16.mxu0 0
    %1895 = vmatmul.mubr.bf16.gmra.mrb[0].mxu0 %v1857
    %v1896 = vpop.f32.mrb[0].mxu0
    %v1897 = vadd.f32 0.0, %v1896
    %v1898 = vpop.f32.mrb[0].mxu0
    %v1899 = vpop.f32.mrb[0].mxu0
    %v1900 = vpop.f32.mrb[0].mxu0
    %1901 = vdwg.mxu0
    %1903 = vrot.lane.b32.xlu0 %v1852, 96
    %v1904 = vpop.permute.xlu0 %1903
    %v1906 = vsel %vm343, %v1852, 0
    %v1909 = vsel %vm343, %v1904, 0
    %1911 = vmatprep.subr.bf16.mxu0 0
    %1912 = vmatpush1.bf16.xpose.msra.mxu0 %v1909
    %1913 = vmatprep.subr.bf16.mxu0 0
    %1914 = vmatpush1.bf16.xpose.msra.mxu0 0
    %1915 = vmatprep.subr.bf16.mxu0 0
    %1916 = vmatpush1.bf16.xpose.msra.mxu0 0
    %1917 = vmatprep.subr.bf16.mxu0 0
    %1918 = vmatpush1.bf16.xpose.msra.mxu0 0
    %1919 = vmatprep.subr.bf16.mxu0 0
    %1920 = vmatpush1.bf16.xpose.msra.mxu0 0
    %1921 = vmatprep.subr.bf16.mxu0 0
    %1922 = vmatpush1.bf16.xpose.msra.mxu0 0
    %1923 = vmatprep.subr.bf16.mxu0 0
    %1924 = vmatpush1.bf16.xpose.msra.mxu0 0
    %1925 = vmatprep.subr.bf16.mxu0 0
    %1926 = vmatpush1.bf16.xpose.msra.mxu0 0
    %1927 = vmatprep.subr.bf16.mxu0 0
    %1928 = vmatpush1.bf16.xpose.msra.mxu0 0
    %1929 = vmatprep.subr.bf16.mxu0 0
    %1930 = vmatpush1.bf16.xpose.msra.mxu0 0
    %1931 = vmatprep.subr.bf16.mxu0 0
    %1932 = vmatpush1.bf16.xpose.msra.mxu0 0
    %1933 = vmatprep.subr.bf16.mxu0 0
    %1934 = vmatpush1.bf16.xpose.msra.mxu0 0
    %1935 = vmatprep.subr.bf16.mxu0 0
    %1936 = vmatpush1.bf16.xpose.msra.mxu0 0
    %1937 = vmatprep.subr.bf16.mxu0 0
    %1938 = vmatpush1.bf16.xpose.msra.mxu0 0
    %1939 = vmatprep.subr.bf16.mxu0 0
    %1940 = vmatpush1.bf16.xpose.msra.mxu0 0
    %1941 = vmatprep.subr.bf16.mxu0 0
    %1942 = vmatpush1.bf16.xpose.msra.mxu0 0
    %1943 = vmatprep.mubr.bf16.mxu0 0
    %1944 = vmatmul.mubr.bf16.gmra.mrb[0].mxu0 %v1906
    %v1945 = vpop.f32.mrb[0].mxu0
    %v1946 = vadd.f32 0.0, %v1945
    %v1947 = vpop.f32.mrb[0].mxu0
    %v1948 = vpop.f32.mrb[0].mxu0
    %v1949 = vpop.f32.mrb[0].mxu0
    %1950 = vdwg.mxu0
    %v1951 = vmul.f32 %v1897, 0.25
    %v1952 = vmul.f32 %v1946, 0.25
    %v1953 = vsel %vm441, %v1951, -inf
    %1954 = vmax.xlane.f32.xlu0 %v1953
    %v1955 = vpop.xlane.xlu0 %1954
    %v1956 = vsel %vm441, %v1952, -inf
    %1957 = vmax.xlane.f32.xlu0 %v1956
    %v1958 = vpop.xlane.xlu0 %1957
    %v1959 = vsub.f32 %v1951, %v1955
    %v1960 = vsub.f32 %v1952, %v1958
    %v1961 = vmul.f32 %v1959, 1.442695
    %v1962 = vpow.pop %v1961
    %v1963 = vmul.f32 %v1960, 1.442695
    %v1964 = vpow.pop %v1963
    %v1965 = vsel %vm441, %v1962, 0.0
    %1966 = vadd.xlane.f32.xlu0 %v1965
    %v1967 = vpop.xlane.xlu0 %1966
    %v1968 = vsel %vm441, %v1964, 0.0
    %1969 = vadd.xlane.f32.xlu0 %v1968
    %v1970 = vpop.xlane.xlu0 %1969
    %v1971 = vrcp.pop %v1967
    %v1972 = vmul.f32 %v1962, %v1971
    %v1973 = vrcp.pop %v1970
    %v1974 = vmul.f32 %v1964, %v1973
    %v1975 = vpack.c.bf16 %v1972, %v1972
    %v1976 = vpack.c.bf16 %v1974, %v1974
    %1977 = vrot.lane.b32.xlu0 %v1851, 64
    %v1978 = vpop.permute.xlu0 %1977
    %v1980 = vsel %vm441, %v1975, 0
    %v1983 = vsel %vm471, %v1978, 0
    %1985 = vmatprep.subr.bf16.mxu0 0
    %1986 = vmatpush1.bf16.msra.mxu0 %v1983
    %1987 = vmatprep.subr.bf16.mxu0 0
    %1988 = vmatpush1.bf16.msra.mxu0 0
    %1989 = vmatprep.subr.bf16.mxu0 0
    %1990 = vmatpush1.bf16.msra.mxu0 0
    %1991 = vmatprep.subr.bf16.mxu0 0
    %1992 = vmatpush1.bf16.msra.mxu0 0
    %1993 = vmatprep.subr.bf16.mxu0 0
    %1994 = vmatpush1.bf16.msra.mxu0 0
    %1995 = vmatprep.subr.bf16.mxu0 0
    %1996 = vmatpush1.bf16.msra.mxu0 0
    %1997 = vmatprep.subr.bf16.mxu0 0
    %1998 = vmatpush1.bf16.msra.mxu0 0
    %1999 = vmatprep.subr.bf16.mxu0 0
    %2000 = vmatpush1.bf16.msra.mxu0 0
    %2001 = vmatprep.subr.bf16.mxu0 0
    %2002 = vmatpush1.bf16.msra.mxu0 0
    %2003 = vmatprep.subr.bf16.mxu0 0
    %2004 = vmatpush1.bf16.msra.mxu0 0
    %2005 = vmatprep.subr.bf16.mxu0 0
    %2006 = vmatpush1.bf16.msra.mxu0 0
    %2007 = vmatprep.subr.bf16.mxu0 0
    %2008 = vmatpush1.bf16.msra.mxu0 0
    %2009 = vmatprep.subr.bf16.mxu0 0
    %2010 = vmatpush1.bf16.msra.mxu0 0
    %2011 = vmatprep.subr.bf16.mxu0 0
    %2012 = vmatpush1.bf16.msra.mxu0 0
    %2013 = vmatprep.subr.bf16.mxu0 0
    %2014 = vmatpush1.bf16.msra.mxu0 0
    %2015 = vmatprep.subr.bf16.mxu0 0
    %2016 = vmatpush1.bf16.msra.mxu0 0
    %2017 = vmatprep.mubr.bf16.mxu0 0
    %2018 = vmatmul.mubr.bf16.gmra.mrb[0].mxu0 %v1980
    %v2019 = vpop.f32.mrb[0].mxu0
    %v2020 = vadd.f32 0.0, %v2019
    %v2021 = vpop.f32.mrb[0].mxu0
    %v2022 = vpop.f32.mrb[0].mxu0
    %v2023 = vpop.f32.mrb[0].mxu0
    %2024 = vdwg.mxu0
    %2025 = vrot.lane.b32.xlu0 %v1852, 64
    %v2026 = vpop.permute.xlu0 %2025
    %v2028 = vsel %vm441, %v1976, 0
    %v2031 = vsel %vm471, %v2026, 0
    %2033 = vmatprep.subr.bf16.mxu0 0
    %2034 = vmatpush1.bf16.msra.mxu0 %v2031
    %2035 = vmatprep.subr.bf16.mxu0 0
    %2036 = vmatpush1.bf16.msra.mxu0 0
    %2037 = vmatprep.subr.bf16.mxu0 0
    %2038 = vmatpush1.bf16.msra.mxu0 0
    %2039 = vmatprep.subr.bf16.mxu0 0
    %2040 = vmatpush1.bf16.msra.mxu0 0
    %2041 = vmatprep.subr.bf16.mxu0 0
    %2042 = vmatpush1.bf16.msra.mxu0 0
    %2043 = vmatprep.subr.bf16.mxu0 0
    %2044 = vmatpush1.bf16.msra.mxu0 0
    %2045 = vmatprep.subr.bf16.mxu0 0
    %2046 = vmatpush1.bf16.msra.mxu0 0
    %2047 = vmatprep.subr.bf16.mxu0 0
    %2048 = vmatpush1.bf16.msra.mxu0 0
    %2049 = vmatprep.subr.bf16.mxu0 0
    %2050 = vmatpush1.bf16.msra.mxu0 0
    %2051 = vmatprep.subr.bf16.mxu0 0
    %2052 = vmatpush1.bf16.msra.mxu0 0
    %2053 = vmatprep.subr.bf16.mxu0 0
    %2054 = vmatpush1.bf16.msra.mxu0 0
    %2055 = vmatprep.subr.bf16.mxu0 0
    %2056 = vmatpush1.bf16.msra.mxu0 0
    %2057 = vmatprep.subr.bf16.mxu0 0
    %2058 = vmatpush1.bf16.msra.mxu0 0
    %2059 = vmatprep.subr.bf16.mxu0 0
    %2060 = vmatpush1.bf16.msra.mxu0 0
    %2061 = vmatprep.subr.bf16.mxu0 0
    %2062 = vmatpush1.bf16.msra.mxu0 0
    %2063 = vmatprep.subr.bf16.mxu0 0
    %2064 = vmatpush1.bf16.msra.mxu0 0
    %2065 = vmatprep.mubr.bf16.mxu0 0
    %2066 = vmatmul.mubr.bf16.gmra.mrb[0].mxu0 %v2028
    %v2067 = vpop.f32.mrb[0].mxu0
    %v2068 = vadd.f32 0.0, %v2067
    %v2069 = vpop.f32.mrb[0].mxu0
    %v2070 = vpop.f32.mrb[0].mxu0
    %v2071 = vpop.f32.mrb[0].mxu0
    %2072 = vdwg.mxu0
    %2073 = vrot.lane.b32.xlu0 %v1851, 112
    %v2074 = vpop.permute.xlu0 %2073
    %2075 = vrot.lane.b32.xlu0 %v1851, 80
    %v2076 = vpop.permute.xlu0 %2075
    %v2078 = vsel %vm343, %v2074, 0
    %v2081 = vsel %vm343, %v2076, 0
    %2083 = vmatprep.subr.bf16.mxu0 0
    %2084 = vmatpush1.bf16.xpose.msra.mxu0 %v2081
    %2085 = vmatprep.subr.bf16.mxu0 0
    %2086 = vmatpush1.bf16.xpose.msra.mxu0 0
    %2087 = vmatprep.subr.bf16.mxu0 0
    %2088 = vmatpush1.bf16.xpose.msra.mxu0 0
    %2089 = vmatprep.subr.bf16.mxu0 0
    %2090 = vmatpush1.bf16.xpose.msra.mxu0 0
    %2091 = vmatprep.subr.bf16.mxu0 0
    %2092 = vmatpush1.bf16.xpose.msra.mxu0 0
    %2093 = vmatprep.subr.bf16.mxu0 0
    %2094 = vmatpush1.bf16.xpose.msra.mxu0 0
    %2095 = vmatprep.subr.bf16.mxu0 0
    %2096 = vmatpush1.bf16.xpose.msra.mxu0 0
    %2097 = vmatprep.subr.bf16.mxu0 0
    %2098 = vmatpush1.bf16.xpose.msra.mxu0 0
    %2099 = vmatprep.subr.bf16.mxu0 0
    %2100 = vmatpush1.bf16.xpose.msra.mxu0 0
    %2101 = vmatprep.subr.bf16.mxu0 0
    %2102 = vmatpush1.bf16.xpose.msra.mxu0 0
    %2103 = vmatprep.subr.bf16.mxu0 0
    %2104 = vmatpush1.bf16.xpose.msra.mxu0 0
    %2105 = vmatprep.subr.bf16.mxu0 0
    %2106 = vmatpush1.bf16.xpose.msra.mxu0 0
    %2107 = vmatprep.subr.bf16.mxu0 0
    %2108 = vmatpush1.bf16.xpose.msra.mxu0 0
    %2109 = vmatprep.subr.bf16.mxu0 0
    %2110 = vmatpush1.bf16.xpose.msra.mxu0 0
    %2111 = vmatprep.subr.bf16.mxu0 0
    %2112 = vmatpush1.bf16.xpose.msra.mxu0 0
    %2113 = vmatprep.subr.bf16.mxu0 0
    %2114 = vmatpush1.bf16.xpose.msra.mxu0 0
    %2115 = vmatprep.mubr.bf16.mxu0 0
    %2116 = vmatmul.mubr.bf16.gmra.mrb[0].mxu0 %v2078
    %v2117 = vpop.f32.mrb[0].mxu0
    %v2118 = vadd.f32 0.0, %v2117
    %v2119 = vpop.f32.mrb[0].mxu0
    %v2120 = vpop.f32.mrb[0].mxu0
    %v2121 = vpop.f32.mrb[0].mxu0
    %2122 = vdwg.mxu0
    %2123 = vrot.lane.b32.xlu0 %v1852, 112
    %v2124 = vpop.permute.xlu0 %2123
    %2125 = vrot.lane.b32.xlu0 %v1852, 80
    %v2126 = vpop.permute.xlu0 %2125
    %v2128 = vsel %vm343, %v2124, 0
    %v2131 = vsel %vm343, %v2126, 0
    %2133 = vmatprep.subr.bf16.mxu0 0
    %2134 = vmatpush1.bf16.xpose.msra.mxu0 %v2131
    %2135 = vmatprep.subr.bf16.mxu0 0
    %2136 = vmatpush1.bf16.xpose.msra.mxu0 0
    %2137 = vmatprep.subr.bf16.mxu0 0
    %2138 = vmatpush1.bf16.xpose.msra.mxu0 0
    %2139 = vmatprep.subr.bf16.mxu0 0
    %2140 = vmatpush1.bf16.xpose.msra.mxu0 0
    %2141 = vmatprep.subr.bf16.mxu0 0
    %2142 = vmatpush1.bf16.xpose.msra.mxu0 0
    %2143 = vmatprep.subr.bf16.mxu0 0
    %2144 = vmatpush1.bf16.xpose.msra.mxu0 0
    %2145 = vmatprep.subr.bf16.mxu0 0
    %2146 = vmatpush1.bf16.xpose.msra.mxu0 0
    %2147 = vmatprep.subr.bf16.mxu0 0
    %2148 = vmatpush1.bf16.xpose.msra.mxu0 0
    %2149 = vmatprep.subr.bf16.mxu0 0
    %2150 = vmatpush1.bf16.xpose.msra.mxu0 0
    %2151 = vmatprep.subr.bf16.mxu0 0
    %2152 = vmatpush1.bf16.xpose.msra.mxu0 0
    %2153 = vmatprep.subr.bf16.mxu0 0
    %2154 = vmatpush1.bf16.xpose.msra.mxu0 0
    %2155 = vmatprep.subr.bf16.mxu0 0
    %2156 = vmatpush1.bf16.xpose.msra.mxu0 0
    %2157 = vmatprep.subr.bf16.mxu0 0
    %2158 = vmatpush1.bf16.xpose.msra.mxu0 0
    %2159 = vmatprep.subr.bf16.mxu0 0
    %2160 = vmatpush1.bf16.xpose.msra.mxu0 0
    %2161 = vmatprep.subr.bf16.mxu0 0
    %2162 = vmatpush1.bf16.xpose.msra.mxu0 0
    %2163 = vmatprep.subr.bf16.mxu0 0
    %2164 = vmatpush1.bf16.xpose.msra.mxu0 0
    %2165 = vmatprep.mubr.bf16.mxu0 0
    %2166 = vmatmul.mubr.bf16.gmra.mrb[0].mxu0 %v2128
    %v2167 = vpop.f32.mrb[0].mxu0
    %v2168 = vadd.f32 0.0, %v2167
    %v2169 = vpop.f32.mrb[0].mxu0
    %v2170 = vpop.f32.mrb[0].mxu0
    %v2171 = vpop.f32.mrb[0].mxu0
    %2172 = vdwg.mxu0
    %v2173 = vmul.f32 %v2118, 0.25
    %v2174 = vmul.f32 %v2168, 0.25
    %v2175 = vsel %vm441, %v2173, -inf
    %2176 = vmax.xlane.f32.xlu0 %v2175
    %v2177 = vpop.xlane.xlu0 %2176
    %v2178 = vsel %vm441, %v2174, -inf
    %2179 = vmax.xlane.f32.xlu0 %v2178
    %v2180 = vpop.xlane.xlu0 %2179
    %v2181 = vsub.f32 %v2173, %v2177
    %v2182 = vsub.f32 %v2174, %v2180
    %v2183 = vmul.f32 %v2181, 1.442695
    %v2184 = vpow.pop %v2183
    %v2185 = vmul.f32 %v2182, 1.442695
    %v2186 = vpow.pop %v2185
    %v2187 = vsel %vm441, %v2184, 0.0
    %2188 = vadd.xlane.f32.xlu0 %v2187
    %v2189 = vpop.xlane.xlu0 %2188
    %v2190 = vsel %vm441, %v2186, 0.0
    %2191 = vadd.xlane.f32.xlu0 %v2190
    %v2192 = vpop.xlane.xlu0 %2191
    %v2193 = vrcp.pop %v2189
    %v2194 = vmul.f32 %v2184, %v2193
    %v2195 = vrcp.pop %v2192
    %v2196 = vmul.f32 %v2186, %v2195
    %v2197 = vpack.c.bf16 %v2194, %v2194
    %v2198 = vpack.c.bf16 %v2196, %v2196
    %2199 = vrot.lane.b32.xlu0 %v1851, 48
    %v2200 = vpop.permute.xlu0 %2199
    %v2202 = vsel %vm441, %v2197, 0
    %v2205 = vsel %vm471, %v2200, 0
    %2207 = vmatprep.subr.bf16.mxu0 0
    %2208 = vmatpush1.bf16.msra.mxu0 %v2205
    %2209 = vmatprep.subr.bf16.mxu0 0
    %2210 = vmatpush1.bf16.msra.mxu0 0
    %2211 = vmatprep.subr.bf16.mxu0 0
    %2212 = vmatpush1.bf16.msra.mxu0 0
    %2213 = vmatprep.subr.bf16.mxu0 0
    %2214 = vmatpush1.bf16.msra.mxu0 0
    %2215 = vmatprep.subr.bf16.mxu0 0
    %2216 = vmatpush1.bf16.msra.mxu0 0
    %2217 = vmatprep.subr.bf16.mxu0 0
    %2218 = vmatpush1.bf16.msra.mxu0 0
    %2219 = vmatprep.subr.bf16.mxu0 0
    %2220 = vmatpush1.bf16.msra.mxu0 0
    %2221 = vmatprep.subr.bf16.mxu0 0
    %2222 = vmatpush1.bf16.msra.mxu0 0
    %2223 = vmatprep.subr.bf16.mxu0 0
    %2224 = vmatpush1.bf16.msra.mxu0 0
    %2225 = vmatprep.subr.bf16.mxu0 0
    %2226 = vmatpush1.bf16.msra.mxu0 0
    %2227 = vmatprep.subr.bf16.mxu0 0
    %2228 = vmatpush1.bf16.msra.mxu0 0
    %2229 = vmatprep.subr.bf16.mxu0 0
    %2230 = vmatpush1.bf16.msra.mxu0 0
    %2231 = vmatprep.subr.bf16.mxu0 0
    %2232 = vmatpush1.bf16.msra.mxu0 0
    %2233 = vmatprep.subr.bf16.mxu0 0
    %2234 = vmatpush1.bf16.msra.mxu0 0
    %2235 = vmatprep.subr.bf16.mxu0 0
    %2236 = vmatpush1.bf16.msra.mxu0 0
    %2237 = vmatprep.subr.bf16.mxu0 0
    %2238 = vmatpush1.bf16.msra.mxu0 0
    %2239 = vmatprep.mubr.bf16.mxu0 0
    %2240 = vmatmul.mubr.bf16.gmra.mrb[0].mxu0 %v2202
    %v2241 = vpop.f32.mrb[0].mxu0
    %v2242 = vadd.f32 0.0, %v2241
    %v2243 = vpop.f32.mrb[0].mxu0
    %v2244 = vpop.f32.mrb[0].mxu0
    %v2245 = vpop.f32.mrb[0].mxu0
    %2246 = vdwg.mxu0
    %2247 = vrot.lane.b32.xlu0 %v1852, 48
    %v2248 = vpop.permute.xlu0 %2247
    %v2250 = vsel %vm441, %v2198, 0
    %v2253 = vsel %vm471, %v2248, 0
    %2255 = vmatprep.subr.bf16.mxu0 0
    %2256 = vmatpush1.bf16.msra.mxu0 %v2253
    %2257 = vmatprep.subr.bf16.mxu0 0
    %2258 = vmatpush1.bf16.msra.mxu0 0
    %2259 = vmatprep.subr.bf16.mxu0 0
    %2260 = vmatpush1.bf16.msra.mxu0 0
    %2261 = vmatprep.subr.bf16.mxu0 0
    %2262 = vmatpush1.bf16.msra.mxu0 0
    %2263 = vmatprep.subr.bf16.mxu0 0
    %2264 = vmatpush1.bf16.msra.mxu0 0
    %2265 = vmatprep.subr.bf16.mxu0 0
    %2266 = vmatpush1.bf16.msra.mxu0 0
    %2267 = vmatprep.subr.bf16.mxu0 0
    %2268 = vmatpush1.bf16.msra.mxu0 0
    %2269 = vmatprep.subr.bf16.mxu0 0
    %2270 = vmatpush1.bf16.msra.mxu0 0
    %2271 = vmatprep.subr.bf16.mxu0 0
    %2272 = vmatpush1.bf16.msra.mxu0 0
    %2273 = vmatprep.subr.bf16.mxu0 0
    %2274 = vmatpush1.bf16.msra.mxu0 0
    %2275 = vmatprep.subr.bf16.mxu0 0
    %2276 = vmatpush1.bf16.msra.mxu0 0
    %2277 = vmatprep.subr.bf16.mxu0 0
    %2278 = vmatpush1.bf16.msra.mxu0 0
    %2279 = vmatprep.subr.bf16.mxu0 0
    %2280 = vmatpush1.bf16.msra.mxu0 0
    %2281 = vmatprep.subr.bf16.mxu0 0
    %2282 = vmatpush1.bf16.msra.mxu0 0
    %2283 = vmatprep.subr.bf16.mxu0 0
    %2284 = vmatpush1.bf16.msra.mxu0 0
    %2285 = vmatprep.subr.bf16.mxu0 0
    %2286 = vmatpush1.bf16.msra.mxu0 0
    %2287 = vmatprep.mubr.bf16.mxu0 0
    %2288 = vmatmul.mubr.bf16.gmra.mrb[0].mxu0 %v2250
    %v2289 = vpop.f32.mrb[0].mxu0
    %v2290 = vadd.f32 0.0, %v2289
    %v2291 = vpop.f32.mrb[0].mxu0
    %v2292 = vpop.f32.mrb[0].mxu0
    %v2293 = vpop.f32.mrb[0].mxu0
    %2294 = vdwg.mxu0
    %2297 = vrot.lane.b32.xlu0 %v2242, 16
    %v2298 = vpop.permute.xlu0 %2297
    %2299 = vrot.lane.b32.xlu0 %v2290, 16
    %v2300 = vpop.permute.xlu0 %2299
    %v2303 = vsel %vm343, %v2020, %v2298
    %v2304 = vsel %vm343, %v2068, %v2300
    %s2305 = scalar_lea.vmem %s6, 16
    %v2306 = vld [vmem:[%s2305] sm:$0xf]
    %v2307 = vld [vmem:[%s2305 + $0x4] sm:$0xf]
    %v2308 = vld [vmem:[%s2305 + $0x8] sm:$0xf]
    %v2309 = vld [vmem:[%s2305 + $0xc] sm:$0xf]
    %v2310 = vpack.c.bf16 %v2304, %v2303
    %v2311 = vlaneseq
    %v2312 = vshrl.u32 %v2311, 7
    %v2313 = vsub.s32 0, %v2312
    %v2314 = vrot.slane %v1783, %v2313
    %v2319 = vunpack.c.l.b16 %v2306
    %v2320 = vunpack.c.l.b16 %v2307
    %v2321 = vunpack.c.l.b16 %v2308
    %v2322 = vunpack.c.l.b16 %v2309
    %v2323 = vpack.c.b16 %v2320, %v2319
    %v2324 = vpack.c.b16 %v2322, %v2321
    %v2328 = vsel %vm111, %v2310, 0
    %2330 = vmatprep.subr.bf16.mxu0 0
    %2331 = vmatpush1.bf16.msra.mxu0 %v2323
    %2332 = vmatprep.subr.bf16.mxu0 0
    %2333 = vmatpush1.bf16.msra.mxu0 %v2324
    %2334 = vmatprep.subr.bf16.mxu0 0
    %2335 = vmatpush1.bf16.msra.mxu0 0
    %2336 = vmatprep.subr.bf16.mxu0 0
    %2337 = vmatpush1.bf16.msra.mxu0 0
    %2338 = vmatprep.subr.bf16.mxu0 0
    %2339 = vmatpush1.bf16.msra.mxu0 0
    %2340 = vmatprep.subr.bf16.mxu0 0
    %2341 = vmatpush1.bf16.msra.mxu0 0
    %2342 = vmatprep.subr.bf16.mxu0 0
    %2343 = vmatpush1.bf16.msra.mxu0 0
    %2344 = vmatprep.subr.bf16.mxu0 0
    %2345 = vmatpush1.bf16.msra.mxu0 0
    %2346 = vmatprep.subr.bf16.mxu0 0
    %2347 = vmatpush1.bf16.msra.mxu0 0
    %2348 = vmatprep.subr.bf16.mxu0 0
    %2349 = vmatpush1.bf16.msra.mxu0 0
    %2350 = vmatprep.subr.bf16.mxu0 0
    %2351 = vmatpush1.bf16.msra.mxu0 0
    %2352 = vmatprep.subr.bf16.mxu0 0
    %2353 = vmatpush1.bf16.msra.mxu0 0
    %2354 = vmatprep.subr.bf16.mxu0 0
    %2355 = vmatpush1.bf16.msra.mxu0 0
    %2356 = vmatprep.subr.bf16.mxu0 0
    %2357 = vmatpush1.bf16.msra.mxu0 0
    %2358 = vmatprep.subr.bf16.mxu0 0
    %2359 = vmatpush1.bf16.msra.mxu0 0
    %2360 = vmatprep.subr.bf16.mxu0 0
    %2361 = vmatpush1.bf16.msra.mxu0 0
    %2362 = vmatprep.mubr.bf16.mxu0 0
    %2363 = vmatmul.mubr.bf16.gmra.mrb[0].mxu0 %v2328
    %v2364 = vpop.f32.mrb[0].mxu0
    %v2365 = vadd.f32 %v2314, %v2364
    %v2366 = vpop.f32.mrb[0].mxu0
    %v2367 = vpop.f32.mrb[0].mxu0
    %v2368 = vadd.f32 %v2314, %v2367
    %v2369 = vpop.f32.mrb[0].mxu0
    %2370 = vdwg.mxu0
    %v2371 = vadd.f32 %v1778, %v2365
    %v2372 = vadd.f32 %v1779, %v2368
    %v2373 = vsel %vm111, %v2371, 0.0
    %2374 = vadd.xlane.f32.xlu0 %v2373
    %v2375 = vpop.xlane.xlu0 %2374
    %v2376 = vsel %vm111, %v2372, 0.0
    %2377 = vadd.xlane.f32.xlu0 %v2376
    %v2378 = vpop.xlane.xlu0 %2377
    %v2379 = vmul.f32 %v2375, %v868
    %v2380 = vmul.f32 %v2378, %v868
    %v2381 = vsub.f32 %v2371, %v2379
    %v2382 = vsub.f32 %v2372, %v2380
    %v2383 = vmul.f32 %v2381, %v2381
    %v2384 = vmul.f32 %v2382, %v2382
    %v2385 = vsel %vm111, %v2383, 0.0
    %2386 = vadd.xlane.f32.xlu0 %v2385
    %v2387 = vpop.xlane.xlu0 %2386
    %v2388 = vsel %vm111, %v2384, 0.0
    %2389 = vadd.xlane.f32.xlu0 %v2388
    %v2390 = vpop.xlane.xlu0 %2389
    %v2391 = vmul.f32 %v2387, %v868
    %v2392 = vmul.f32 %v2390, %v868
    %v2393 = vadd.f32 %v2391, 1e-05
    %v2394 = vadd.f32 %v2392, 1e-05
    %v2395 = vrsqrt.pop %v2393
    %v2396 = vrsqrt.pop %v2394
    %v2397 = vmul.f32 %v2381, %v2395
    %v2398 = vmul.f32 %v2382, %v2396
    %v2399 = vlaneseq
    %v2400 = vshrl.u32 %v2399, 7
    %v2401 = vsub.s32 3, %v2400
    %v2402 = vrot.slane %v1783, %v2401
    %v2403 = vmul.f32 %v2397, %v2402
    %v2404 = vmul.f32 %v2398, %v2402
    %v2405 = vlaneseq
    %v2406 = vshrl.u32 %v2405, 7
    %v2407 = vsub.s32 4, %v2406
    %v2408 = vrot.slane %v1783, %v2407
    %v2409 = vadd.f32 %v2403, %v2408
    %v2410 = vadd.f32 %v2404, %v2408
    %s2411 = scalar_lea.vmem %s7, 16
    %v2412 = vld [vmem:[%s2411] sm:$0xf]
    %v2413 = vld [vmem:[%s2411 + $0x4] sm:$0xf]
    %v2414 = vld [vmem:[%s2411 + $0x8] sm:$0xf]
    %v2415 = vld [vmem:[%s2411 + $0xc] sm:$0xf]
    %v2416 = vpack.c.bf16 %v2410, %v2409
    %v2417 = vlaneseq
    %v2418 = vshrl.u32 %v2417, 7
    %v2419 = vsub.s32 1, %v2418
    %v2420 = vrot.slane %v1781, %v2419
    %v2425 = vunpack.c.l.b16 %v2412
    %v2426 = vunpack.c.l.b16 %v2413
    %v2427 = vunpack.c.l.b16 %v2414
    %v2428 = vunpack.c.l.b16 %v2415
    %v2429 = vpack.c.b16 %v2426, %v2425
    %v2430 = vpack.c.b16 %v2428, %v2427
    %v2434 = vsel %vm111, %v2416, 0
    %2436 = vmatprep.subr.bf16.mxu0 0
    %2437 = vmatpush1.bf16.msra.mxu0 %v2429
    %2438 = vmatprep.subr.bf16.mxu0 0
    %2439 = vmatpush1.bf16.msra.mxu0 %v2430
    %2440 = vmatprep.subr.bf16.mxu0 0
    %2441 = vmatpush1.bf16.msra.mxu0 0
    %2442 = vmatprep.subr.bf16.mxu0 0
    %2443 = vmatpush1.bf16.msra.mxu0 0
    %2444 = vmatprep.subr.bf16.mxu0 0
    %2445 = vmatpush1.bf16.msra.mxu0 0
    %2446 = vmatprep.subr.bf16.mxu0 0
    %2447 = vmatpush1.bf16.msra.mxu0 0
    %2448 = vmatprep.subr.bf16.mxu0 0
    %2449 = vmatpush1.bf16.msra.mxu0 0
    %2450 = vmatprep.subr.bf16.mxu0 0
    %2451 = vmatpush1.bf16.msra.mxu0 0
    %2452 = vmatprep.subr.bf16.mxu0 0
    %2453 = vmatpush1.bf16.msra.mxu0 0
    %2454 = vmatprep.subr.bf16.mxu0 0
    %2455 = vmatpush1.bf16.msra.mxu0 0
    %2456 = vmatprep.subr.bf16.mxu0 0
    %2457 = vmatpush1.bf16.msra.mxu0 0
    %2458 = vmatprep.subr.bf16.mxu0 0
    %2459 = vmatpush1.bf16.msra.mxu0 0
    %2460 = vmatprep.subr.bf16.mxu0 0
    %2461 = vmatpush1.bf16.msra.mxu0 0
    %2462 = vmatprep.subr.bf16.mxu0 0
    %2463 = vmatpush1.bf16.msra.mxu0 0
    %2464 = vmatprep.subr.bf16.mxu0 0
    %2465 = vmatpush1.bf16.msra.mxu0 0
    %2466 = vmatprep.subr.bf16.mxu0 0
    %2467 = vmatpush1.bf16.msra.mxu0 0
    %2468 = vmatprep.mubr.bf16.mxu0 0
    %2469 = vmatmul.mubr.bf16.gmra.mrb[0].mxu0 %v2434
    %v2470 = vpop.f32.mrb[0].mxu0
    %v2471 = vadd.f32 %v2420, %v2470
    %v2472 = vpop.f32.mrb[0].mxu0
    %v2473 = vpop.f32.mrb[0].mxu0
    %v2474 = vadd.f32 %v2420, %v2473
    %v2475 = vpop.f32.mrb[0].mxu0
    %2476 = vdwg.mxu0
    %2477 = vrot.lane.b32.xlu0 %v2429, 96
    %v2478 = vpop.permute.xlu0 %2477
    %2479 = vrot.lane.b32.xlu0 %v2430, 96
    %v2480 = vpop.permute.xlu0 %2479
    %2484 = vrot.lane.b32.xlu0 %v2420, 96
    %v2485 = vpop.permute.xlu0 %2484
    %2487 = vmatprep.subr.bf16.mxu0 0
    %2488 = vmatpush1.bf16.msra.mxu0 %v2478
    %2489 = vmatprep.subr.bf16.mxu0 0
    %2490 = vmatpush1.bf16.msra.mxu0 %v2480
    %2491 = vmatprep.subr.bf16.mxu0 0
    %2492 = vmatpush1.bf16.msra.mxu0 0
    %2493 = vmatprep.subr.bf16.mxu0 0
    %2494 = vmatpush1.bf16.msra.mxu0 0
    %2495 = vmatprep.subr.bf16.mxu0 0
    %2496 = vmatpush1.bf16.msra.mxu0 0
    %2497 = vmatprep.subr.bf16.mxu0 0
    %2498 = vmatpush1.bf16.msra.mxu0 0
    %2499 = vmatprep.subr.bf16.mxu0 0
    %2500 = vmatpush1.bf16.msra.mxu0 0
    %2501 = vmatprep.subr.bf16.mxu0 0
    %2502 = vmatpush1.bf16.msra.mxu0 0
    %2503 = vmatprep.subr.bf16.mxu0 0
    %2504 = vmatpush1.bf16.msra.mxu0 0
    %2505 = vmatprep.subr.bf16.mxu0 0
    %2506 = vmatpush1.bf16.msra.mxu0 0
    %2507 = vmatprep.subr.bf16.mxu0 0
    %2508 = vmatpush1.bf16.msra.mxu0 0
    %2509 = vmatprep.subr.bf16.mxu0 0
    %2510 = vmatpush1.bf16.msra.mxu0 0
    %2511 = vmatprep.subr.bf16.mxu0 0
    %2512 = vmatpush1.bf16.msra.mxu0 0
    %2513 = vmatprep.subr.bf16.mxu0 0
    %2514 = vmatpush1.bf16.msra.mxu0 0
    %2515 = vmatprep.subr.bf16.mxu0 0
    %2516 = vmatpush1.bf16.msra.mxu0 0
    %2517 = vmatprep.subr.bf16.mxu0 0
    %2518 = vmatpush1.bf16.msra.mxu0 0
    %2519 = vmatprep.mubr.bf16.mxu0 0
    %2520 = vmatmul.mubr.bf16.gmra.mrb[0].mxu0 %v982
    %v2521 = vpop.f32.mrb[0].mxu0
    %v2522 = vadd.f32 %v2485, %v2521
    %v2523 = vpop.f32.mrb[0].mxu0
    %v2524 = vpop.f32.mrb[0].mxu0
    %v2525 = vpop.f32.mrb[0].mxu0
    %2526 = vdwg.mxu0
    %v2528 = vcombine.high %v2522, %v2522
    %v2530 = vpack.c.bf16 %v2471, %v2471
    %v2531 = vpack.c.bf16 %v2474, %v2474
    %v2532 = vpack.c.bf16 %v2522, %v2522
    %v2533 = vpack.c.bf16 %v2528, %v2528
    %v2535 = vsel %vm343, %v2530, 0
    %v2538 = vsel %vm343, %v2532, 0
    %2540 = vmatprep.subr.bf16.mxu0 0
    %2541 = vmatpush1.bf16.xpose.msra.mxu0 %v2538
    %2542 = vmatprep.subr.bf16.mxu0 0
    %2543 = vmatpush1.bf16.xpose.msra.mxu0 0
    %2544 = vmatprep.subr.bf16.mxu0 0
    %2545 = vmatpush1.bf16.xpose.msra.mxu0 0
    %2546 = vmatprep.subr.bf16.mxu0 0
    %2547 = vmatpush1.bf16.xpose.msra.mxu0 0
    %2548 = vmatprep.subr.bf16.mxu0 0
    %2549 = vmatpush1.bf16.xpose.msra.mxu0 0
    %2550 = vmatprep.subr.bf16.mxu0 0
    %2551 = vmatpush1.bf16.xpose.msra.mxu0 0
    %2552 = vmatprep.subr.bf16.mxu0 0
    %2553 = vmatpush1.bf16.xpose.msra.mxu0 0
    %2554 = vmatprep.subr.bf16.mxu0 0
    %2555 = vmatpush1.bf16.xpose.msra.mxu0 0
    %2556 = vmatprep.subr.bf16.mxu0 0
    %2557 = vmatpush1.bf16.xpose.msra.mxu0 0
    %2558 = vmatprep.subr.bf16.mxu0 0
    %2559 = vmatpush1.bf16.xpose.msra.mxu0 0
    %2560 = vmatprep.subr.bf16.mxu0 0
    %2561 = vmatpush1.bf16.xpose.msra.mxu0 0
    %2562 = vmatprep.subr.bf16.mxu0 0
    %2563 = vmatpush1.bf16.xpose.msra.mxu0 0
    %2564 = vmatprep.subr.bf16.mxu0 0
    %2565 = vmatpush1.bf16.xpose.msra.mxu0 0
    %2566 = vmatprep.subr.bf16.mxu0 0
    %2567 = vmatpush1.bf16.xpose.msra.mxu0 0
    %2568 = vmatprep.subr.bf16.mxu0 0
    %2569 = vmatpush1.bf16.xpose.msra.mxu0 0
    %2570 = vmatprep.subr.bf16.mxu0 0
    %2571 = vmatpush1.bf16.xpose.msra.mxu0 0
    %2572 = vmatprep.mubr.bf16.mxu0 0
    %2573 = vmatmul.mubr.bf16.gmra.mrb[0].mxu0 %v2535
    %v2574 = vpop.f32.mrb[0].mxu0
    %v2575 = vadd.f32 0.0, %v2574
    %v2576 = vpop.f32.mrb[0].mxu0
    %v2577 = vpop.f32.mrb[0].mxu0
    %v2578 = vpop.f32.mrb[0].mxu0
    %2579 = vdwg.mxu0
    %v2581 = vsel %vm343, %v2531, 0
    %v2584 = vsel %vm343, %v2533, 0
    %2586 = vmatprep.subr.bf16.mxu0 0
    %2587 = vmatpush1.bf16.xpose.msra.mxu0 %v2584
    %2588 = vmatprep.subr.bf16.mxu0 0
    %2589 = vmatpush1.bf16.xpose.msra.mxu0 0
    %2590 = vmatprep.subr.bf16.mxu0 0
    %2591 = vmatpush1.bf16.xpose.msra.mxu0 0
    %2592 = vmatprep.subr.bf16.mxu0 0
    %2593 = vmatpush1.bf16.xpose.msra.mxu0 0
    %2594 = vmatprep.subr.bf16.mxu0 0
    %2595 = vmatpush1.bf16.xpose.msra.mxu0 0
    %2596 = vmatprep.subr.bf16.mxu0 0
    %2597 = vmatpush1.bf16.xpose.msra.mxu0 0
    %2598 = vmatprep.subr.bf16.mxu0 0
    %2599 = vmatpush1.bf16.xpose.msra.mxu0 0
    %2600 = vmatprep.subr.bf16.mxu0 0
    %2601 = vmatpush1.bf16.xpose.msra.mxu0 0
    %2602 = vmatprep.subr.bf16.mxu0 0
    %2603 = vmatpush1.bf16.xpose.msra.mxu0 0
    %2604 = vmatprep.subr.bf16.mxu0 0
    %2605 = vmatpush1.bf16.xpose.msra.mxu0 0
    %2606 = vmatprep.subr.bf16.mxu0 0
    %2607 = vmatpush1.bf16.xpose.msra.mxu0 0
    %2608 = vmatprep.subr.bf16.mxu0 0
    %2609 = vmatpush1.bf16.xpose.msra.mxu0 0
    %2610 = vmatprep.subr.bf16.mxu0 0
    %2611 = vmatpush1.bf16.xpose.msra.mxu0 0
    %2612 = vmatprep.subr.bf16.mxu0 0
    %2613 = vmatpush1.bf16.xpose.msra.mxu0 0
    %2614 = vmatprep.subr.bf16.mxu0 0
    %2615 = vmatpush1.bf16.xpose.msra.mxu0 0
    %2616 = vmatprep.subr.bf16.mxu0 0
    %2617 = vmatpush1.bf16.xpose.msra.mxu0 0
    %2618 = vmatprep.mubr.bf16.mxu0 0
    %2619 = vmatmul.mubr.bf16.gmra.mrb[0].mxu0 %v2581
    %v2620 = vpop.f32.mrb[0].mxu0
    %v2621 = vadd.f32 0.0, %v2620
    %v2622 = vpop.f32.mrb[0].mxu0
    %v2623 = vpop.f32.mrb[0].mxu0
    %v2624 = vpop.f32.mrb[0].mxu0
    %2625 = vdwg.mxu0
    %v2626 = vmul.f32 %v2575, 0.25
    %v2627 = vmul.f32 %v2621, 0.25
    %v2628 = vsel %vm1125, %v2626, -inf
    %2629 = vmax.xlane.f32.xlu0 %v2628
    %v2630 = vpop.xlane.xlu0 %2629
    %v2631 = vsel %vm1125, %v2627, -inf
    %2632 = vmax.xlane.f32.xlu0 %v2631
    %v2633 = vpop.xlane.xlu0 %2632
    %v2634 = vsub.f32 %v2626, %v2630
    %v2635 = vsub.f32 %v2627, %v2633
    %v2636 = vmul.f32 %v2634, 1.442695
    %v2637 = vpow.pop %v2636
    %v2638 = vmul.f32 %v2635, 1.442695
    %v2639 = vpow.pop %v2638
    %v2640 = vsel %vm1125, %v2637, 0.0
    %2641 = vadd.xlane.f32.xlu0 %v2640
    %v2642 = vpop.xlane.xlu0 %2641
    %v2643 = vsel %vm1125, %v2639, 0.0
    %2644 = vadd.xlane.f32.xlu0 %v2643
    %v2645 = vpop.xlane.xlu0 %2644
    %v2646 = vrcp.pop %v2642
    %v2647 = vmul.f32 %v2637, %v2646
    %v2648 = vrcp.pop %v2645
    %v2649 = vmul.f32 %v2639, %v2648
    %v2650 = vpack.c.bf16 %v2647, %v2647
    %v2651 = vpack.c.bf16 %v2649, %v2649
    %2653 = vrot.lane.b32.xlu0 %v2532, 96
    %v2654 = vpop.permute.xlu0 %2653
    %v2656 = vsel %vm1125, %v2650, 0
    %v2659 = vsel %vm1156, %v2654, 0
    %2661 = vmatprep.subr.bf16.mxu0 0
    %2662 = vmatpush1.bf16.msra.mxu0 %v2659
    %2663 = vmatprep.subr.bf16.mxu0 0
    %2664 = vmatpush1.bf16.msra.mxu0 0
    %2665 = vmatprep.subr.bf16.mxu0 0
    %2666 = vmatpush1.bf16.msra.mxu0 0
    %2667 = vmatprep.subr.bf16.mxu0 0
    %2668 = vmatpush1.bf16.msra.mxu0 0
    %2669 = vmatprep.subr.bf16.mxu0 0
    %2670 = vmatpush1.bf16.msra.mxu0 0
    %2671 = vmatprep.subr.bf16.mxu0 0
    %2672 = vmatpush1.bf16.msra.mxu0 0
    %2673 = vmatprep.subr.bf16.mxu0 0
    %2674 = vmatpush1.bf16.msra.mxu0 0
    %2675 = vmatprep.subr.bf16.mxu0 0
    %2676 = vmatpush1.bf16.msra.mxu0 0
    %2677 = vmatprep.subr.bf16.mxu0 0
    %2678 = vmatpush1.bf16.msra.mxu0 0
    %2679 = vmatprep.subr.bf16.mxu0 0
    %2680 = vmatpush1.bf16.msra.mxu0 0
    %2681 = vmatprep.subr.bf16.mxu0 0
    %2682 = vmatpush1.bf16.msra.mxu0 0
    %2683 = vmatprep.subr.bf16.mxu0 0
    %2684 = vmatpush1.bf16.msra.mxu0 0
    %2685 = vmatprep.subr.bf16.mxu0 0
    %2686 = vmatpush1.bf16.msra.mxu0 0
    %2687 = vmatprep.subr.bf16.mxu0 0
    %2688 = vmatpush1.bf16.msra.mxu0 0
    %2689 = vmatprep.subr.bf16.mxu0 0
    %2690 = vmatpush1.bf16.msra.mxu0 0
    %2691 = vmatprep.subr.bf16.mxu0 0
    %2692 = vmatpush1.bf16.msra.mxu0 0
    %2693 = vmatprep.mubr.bf16.mxu0 0
    %2694 = vmatmul.mubr.bf16.gmra.mrb[0].mxu0 %v2656
    %v2695 = vpop.f32.mrb[0].mxu0
    %v2696 = vadd.f32 0.0, %v2695
    %v2697 = vpop.f32.mrb[0].mxu0
    %v2698 = vpop.f32.mrb[0].mxu0
    %v2699 = vpop.f32.mrb[0].mxu0
    %2700 = vdwg.mxu0
    %2702 = vrot.lane.b32.xlu0 %v2533, 96
    %v2703 = vpop.permute.xlu0 %2702
    %v2705 = vsel %vm1125, %v2651, 0
    %v2708 = vsel %vm1156, %v2703, 0
    %2710 = vmatprep.subr.bf16.mxu0 0
    %2711 = vmatpush1.bf16.msra.mxu0 %v2708
    %2712 = vmatprep.subr.bf16.mxu0 0
    %2713 = vmatpush1.bf16.msra.mxu0 0
    %2714 = vmatprep.subr.bf16.mxu0 0
    %2715 = vmatpush1.bf16.msra.mxu0 0
    %2716 = vmatprep.subr.bf16.mxu0 0
    %2717 = vmatpush1.bf16.msra.mxu0 0
    %2718 = vmatprep.subr.bf16.mxu0 0
    %2719 = vmatpush1.bf16.msra.mxu0 0
    %2720 = vmatprep.subr.bf16.mxu0 0
    %2721 = vmatpush1.bf16.msra.mxu0 0
    %2722 = vmatprep.subr.bf16.mxu0 0
    %2723 = vmatpush1.bf16.msra.mxu0 0
    %2724 = vmatprep.subr.bf16.mxu0 0
    %2725 = vmatpush1.bf16.msra.mxu0 0
    %2726 = vmatprep.subr.bf16.mxu0 0
    %2727 = vmatpush1.bf16.msra.mxu0 0
    %2728 = vmatprep.subr.bf16.mxu0 0
    %2729 = vmatpush1.bf16.msra.mxu0 0
    %2730 = vmatprep.subr.bf16.mxu0 0
    %2731 = vmatpush1.bf16.msra.mxu0 0
    %2732 = vmatprep.subr.bf16.mxu0 0
    %2733 = vmatpush1.bf16.msra.mxu0 0
    %2734 = vmatprep.subr.bf16.mxu0 0
    %2735 = vmatpush1.bf16.msra.mxu0 0
    %2736 = vmatprep.subr.bf16.mxu0 0
    %2737 = vmatpush1.bf16.msra.mxu0 0
    %2738 = vmatprep.subr.bf16.mxu0 0
    %2739 = vmatpush1.bf16.msra.mxu0 0
    %2740 = vmatprep.subr.bf16.mxu0 0
    %2741 = vmatpush1.bf16.msra.mxu0 0
    %2742 = vmatprep.mubr.bf16.mxu0 0
    %2743 = vmatmul.mubr.bf16.gmra.mrb[0].mxu0 %v2705
    %v2744 = vpop.f32.mrb[0].mxu0
    %v2745 = vadd.f32 0.0, %v2744
    %v2746 = vpop.f32.mrb[0].mxu0
    %v2747 = vpop.f32.mrb[0].mxu0
    %v2748 = vpop.f32.mrb[0].mxu0
    %2749 = vdwg.mxu0
    %2751 = vrot.lane.b32.xlu0 %v2530, 112
    %v2752 = vpop.permute.xlu0 %2751
    %2753 = vrot.lane.b32.xlu0 %v2532, 112
    %v2754 = vpop.permute.xlu0 %2753
    %v2756 = vsel %vm343, %v2752, 0
    %v2759 = vsel %vm343, %v2754, 0
    %2761 = vmatprep.subr.bf16.mxu0 0
    %2762 = vmatpush1.bf16.xpose.msra.mxu0 %v2759
    %2763 = vmatprep.subr.bf16.mxu0 0
    %2764 = vmatpush1.bf16.xpose.msra.mxu0 0
    %2765 = vmatprep.subr.bf16.mxu0 0
    %2766 = vmatpush1.bf16.xpose.msra.mxu0 0
    %2767 = vmatprep.subr.bf16.mxu0 0
    %2768 = vmatpush1.bf16.xpose.msra.mxu0 0
    %2769 = vmatprep.subr.bf16.mxu0 0
    %2770 = vmatpush1.bf16.xpose.msra.mxu0 0
    %2771 = vmatprep.subr.bf16.mxu0 0
    %2772 = vmatpush1.bf16.xpose.msra.mxu0 0
    %2773 = vmatprep.subr.bf16.mxu0 0
    %2774 = vmatpush1.bf16.xpose.msra.mxu0 0
    %2775 = vmatprep.subr.bf16.mxu0 0
    %2776 = vmatpush1.bf16.xpose.msra.mxu0 0
    %2777 = vmatprep.subr.bf16.mxu0 0
    %2778 = vmatpush1.bf16.xpose.msra.mxu0 0
    %2779 = vmatprep.subr.bf16.mxu0 0
    %2780 = vmatpush1.bf16.xpose.msra.mxu0 0
    %2781 = vmatprep.subr.bf16.mxu0 0
    %2782 = vmatpush1.bf16.xpose.msra.mxu0 0
    %2783 = vmatprep.subr.bf16.mxu0 0
    %2784 = vmatpush1.bf16.xpose.msra.mxu0 0
    %2785 = vmatprep.subr.bf16.mxu0 0
    %2786 = vmatpush1.bf16.xpose.msra.mxu0 0
    %2787 = vmatprep.subr.bf16.mxu0 0
    %2788 = vmatpush1.bf16.xpose.msra.mxu0 0
    %2789 = vmatprep.subr.bf16.mxu0 0
    %2790 = vmatpush1.bf16.xpose.msra.mxu0 0
    %2791 = vmatprep.subr.bf16.mxu0 0
    %2792 = vmatpush1.bf16.xpose.msra.mxu0 0
    %2793 = vmatprep.mubr.bf16.mxu0 0
    %2794 = vmatmul.mubr.bf16.gmra.mrb[0].mxu0 %v2756
    %v2795 = vpop.f32.mrb[0].mxu0
    %v2796 = vadd.f32 0.0, %v2795
    %v2797 = vpop.f32.mrb[0].mxu0
    %v2798 = vpop.f32.mrb[0].mxu0
    %v2799 = vpop.f32.mrb[0].mxu0
    %2800 = vdwg.mxu0
    %2802 = vrot.lane.b32.xlu0 %v2531, 112
    %v2803 = vpop.permute.xlu0 %2802
    %2804 = vrot.lane.b32.xlu0 %v2533, 112
    %v2805 = vpop.permute.xlu0 %2804
    %v2807 = vsel %vm343, %v2803, 0
    %v2810 = vsel %vm343, %v2805, 0
    %2812 = vmatprep.subr.bf16.mxu0 0
    %2813 = vmatpush1.bf16.xpose.msra.mxu0 %v2810
    %2814 = vmatprep.subr.bf16.mxu0 0
    %2815 = vmatpush1.bf16.xpose.msra.mxu0 0
    %2816 = vmatprep.subr.bf16.mxu0 0
    %2817 = vmatpush1.bf16.xpose.msra.mxu0 0
    %2818 = vmatprep.subr.bf16.mxu0 0
    %2819 = vmatpush1.bf16.xpose.msra.mxu0 0
    %2820 = vmatprep.subr.bf16.mxu0 0
    %2821 = vmatpush1.bf16.xpose.msra.mxu0 0
    %2822 = vmatprep.subr.bf16.mxu0 0
    %2823 = vmatpush1.bf16.xpose.msra.mxu0 0
    %2824 = vmatprep.subr.bf16.mxu0 0
    %2825 = vmatpush1.bf16.xpose.msra.mxu0 0
    %2826 = vmatprep.subr.bf16.mxu0 0
    %2827 = vmatpush1.bf16.xpose.msra.mxu0 0
    %2828 = vmatprep.subr.bf16.mxu0 0
    %2829 = vmatpush1.bf16.xpose.msra.mxu0 0
    %2830 = vmatprep.subr.bf16.mxu0 0
    %2831 = vmatpush1.bf16.xpose.msra.mxu0 0
    %2832 = vmatprep.subr.bf16.mxu0 0
    %2833 = vmatpush1.bf16.xpose.msra.mxu0 0
    %2834 = vmatprep.subr.bf16.mxu0 0
    %2835 = vmatpush1.bf16.xpose.msra.mxu0 0
    %2836 = vmatprep.subr.bf16.mxu0 0
    %2837 = vmatpush1.bf16.xpose.msra.mxu0 0
    %2838 = vmatprep.subr.bf16.mxu0 0
    %2839 = vmatpush1.bf16.xpose.msra.mxu0 0
    %2840 = vmatprep.subr.bf16.mxu0 0
    %2841 = vmatpush1.bf16.xpose.msra.mxu0 0
    %2842 = vmatprep.subr.bf16.mxu0 0
    %2843 = vmatpush1.bf16.xpose.msra.mxu0 0
    %2844 = vmatprep.mubr.bf16.mxu0 0
    %2845 = vmatmul.mubr.bf16.gmra.mrb[0].mxu0 %v2807
    %v2846 = vpop.f32.mrb[0].mxu0
    %v2847 = vadd.f32 0.0, %v2846
    %v2848 = vpop.f32.mrb[0].mxu0
    %v2849 = vpop.f32.mrb[0].mxu0
    %v2850 = vpop.f32.mrb[0].mxu0
    %2851 = vdwg.mxu0
    %v2852 = vmul.f32 %v2796, 0.25
    %v2853 = vmul.f32 %v2847, 0.25
    %v2854 = vsel %vm1125, %v2852, -inf
    %2855 = vmax.xlane.f32.xlu0 %v2854
    %v2856 = vpop.xlane.xlu0 %2855
    %v2857 = vsel %vm1125, %v2853, -inf
    %2858 = vmax.xlane.f32.xlu0 %v2857
    %v2859 = vpop.xlane.xlu0 %2858
    %v2860 = vsub.f32 %v2852, %v2856
    %v2861 = vsub.f32 %v2853, %v2859
    %v2862 = vmul.f32 %v2860, 1.442695
    %v2863 = vpow.pop %v2862
    %v2864 = vmul.f32 %v2861, 1.442695
    %v2865 = vpow.pop %v2864
    %v2866 = vsel %vm1125, %v2863, 0.0
    %2867 = vadd.xlane.f32.xlu0 %v2866
    %v2868 = vpop.xlane.xlu0 %2867
    %v2869 = vsel %vm1125, %v2865, 0.0
    %2870 = vadd.xlane.f32.xlu0 %v2869
    %v2871 = vpop.xlane.xlu0 %2870
    %v2872 = vrcp.pop %v2868
    %v2873 = vmul.f32 %v2863, %v2872
    %v2874 = vrcp.pop %v2871
    %v2875 = vmul.f32 %v2865, %v2874
    %v2876 = vpack.c.bf16 %v2873, %v2873
    %v2877 = vpack.c.bf16 %v2875, %v2875
    %2878 = vrot.lane.b32.xlu0 %v2532, 80
    %v2879 = vpop.permute.xlu0 %2878
    %v2881 = vsel %vm1125, %v2876, 0
    %v2884 = vsel %vm1156, %v2879, 0
    %2886 = vmatprep.subr.bf16.mxu0 0
    %2887 = vmatpush1.bf16.msra.mxu0 %v2884
    %2888 = vmatprep.subr.bf16.mxu0 0
    %2889 = vmatpush1.bf16.msra.mxu0 0
    %2890 = vmatprep.subr.bf16.mxu0 0
    %2891 = vmatpush1.bf16.msra.mxu0 0
    %2892 = vmatprep.subr.bf16.mxu0 0
    %2893 = vmatpush1.bf16.msra.mxu0 0
    %2894 = vmatprep.subr.bf16.mxu0 0
    %2895 = vmatpush1.bf16.msra.mxu0 0
    %2896 = vmatprep.subr.bf16.mxu0 0
    %2897 = vmatpush1.bf16.msra.mxu0 0
    %2898 = vmatprep.subr.bf16.mxu0 0
    %2899 = vmatpush1.bf16.msra.mxu0 0
    %2900 = vmatprep.subr.bf16.mxu0 0
    %2901 = vmatpush1.bf16.msra.mxu0 0
    %2902 = vmatprep.subr.bf16.mxu0 0
    %2903 = vmatpush1.bf16.msra.mxu0 0
    %2904 = vmatprep.subr.bf16.mxu0 0
    %2905 = vmatpush1.bf16.msra.mxu0 0
    %2906 = vmatprep.subr.bf16.mxu0 0
    %2907 = vmatpush1.bf16.msra.mxu0 0
    %2908 = vmatprep.subr.bf16.mxu0 0
    %2909 = vmatpush1.bf16.msra.mxu0 0
    %2910 = vmatprep.subr.bf16.mxu0 0
    %2911 = vmatpush1.bf16.msra.mxu0 0
    %2912 = vmatprep.subr.bf16.mxu0 0
    %2913 = vmatpush1.bf16.msra.mxu0 0
    %2914 = vmatprep.subr.bf16.mxu0 0
    %2915 = vmatpush1.bf16.msra.mxu0 0
    %2916 = vmatprep.subr.bf16.mxu0 0
    %2917 = vmatpush1.bf16.msra.mxu0 0
    %2918 = vmatprep.mubr.bf16.mxu0 0
    %2919 = vmatmul.mubr.bf16.gmra.mrb[0].mxu0 %v2881
    %v2920 = vpop.f32.mrb[0].mxu0
    %v2921 = vadd.f32 0.0, %v2920
    %v2922 = vpop.f32.mrb[0].mxu0
    %v2923 = vpop.f32.mrb[0].mxu0
    %v2924 = vpop.f32.mrb[0].mxu0
    %2925 = vdwg.mxu0
    %2926 = vrot.lane.b32.xlu0 %v2533, 80
    %v2927 = vpop.permute.xlu0 %2926
    %v2929 = vsel %vm1125, %v2877, 0
    %v2932 = vsel %vm1156, %v2927, 0
    %2934 = vmatprep.subr.bf16.mxu0 0
    %2935 = vmatpush1.bf16.msra.mxu0 %v2932
    %2936 = vmatprep.subr.bf16.mxu0 0
    %2937 = vmatpush1.bf16.msra.mxu0 0
    %2938 = vmatprep.subr.bf16.mxu0 0
    %2939 = vmatpush1.bf16.msra.mxu0 0
    %2940 = vmatprep.subr.bf16.mxu0 0
    %2941 = vmatpush1.bf16.msra.mxu0 0
    %2942 = vmatprep.subr.bf16.mxu0 0
    %2943 = vmatpush1.bf16.msra.mxu0 0
    %2944 = vmatprep.subr.bf16.mxu0 0
    %2945 = vmatpush1.bf16.msra.mxu0 0
    %2946 = vmatprep.subr.bf16.mxu0 0
    %2947 = vmatpush1.bf16.msra.mxu0 0
    %2948 = vmatprep.subr.bf16.mxu0 0
    %2949 = vmatpush1.bf16.msra.mxu0 0
    %2950 = vmatprep.subr.bf16.mxu0 0
    %2951 = vmatpush1.bf16.msra.mxu0 0
    %2952 = vmatprep.subr.bf16.mxu0 0
    %2953 = vmatpush1.bf16.msra.mxu0 0
    %2954 = vmatprep.subr.bf16.mxu0 0
    %2955 = vmatpush1.bf16.msra.mxu0 0
    %2956 = vmatprep.subr.bf16.mxu0 0
    %2957 = vmatpush1.bf16.msra.mxu0 0
    %2958 = vmatprep.subr.bf16.mxu0 0
    %2959 = vmatpush1.bf16.msra.mxu0 0
    %2960 = vmatprep.subr.bf16.mxu0 0
    %2961 = vmatpush1.bf16.msra.mxu0 0
    %2962 = vmatprep.subr.bf16.mxu0 0
    %2963 = vmatpush1.bf16.msra.mxu0 0
    %2964 = vmatprep.subr.bf16.mxu0 0
    %2965 = vmatpush1.bf16.msra.mxu0 0
    %2966 = vmatprep.mubr.bf16.mxu0 0
    %2967 = vmatmul.mubr.bf16.gmra.mrb[0].mxu0 %v2929
    %v2968 = vpop.f32.mrb[0].mxu0
    %v2969 = vadd.f32 0.0, %v2968
    %v2970 = vpop.f32.mrb[0].mxu0
    %v2971 = vpop.f32.mrb[0].mxu0
    %v2972 = vpop.f32.mrb[0].mxu0
    %2973 = vdwg.mxu0
    %2976 = vrot.lane.b32.xlu0 %v2921, 16
    %v2977 = vpop.permute.xlu0 %2976
    %2978 = vrot.lane.b32.xlu0 %v2969, 16
    %v2979 = vpop.permute.xlu0 %2978
    %v2982 = vsel %vm343, %v2696, %v2977
    %v2983 = vsel %vm343, %v2745, %v2979
    %s2984 = scalar_lea.vmem %s8, 16
    %v2985 = vld [vmem:[%s2984] sm:$0xf]
    %v2986 = vld [vmem:[%s2984 + $0x4] sm:$0xf]
    %v2987 = vld [vmem:[%s2984 + $0x8] sm:$0xf]
    %v2988 = vld [vmem:[%s2984 + $0xc] sm:$0xf]
    %v2989 = vpack.c.bf16 %v2983, %v2982
    %v2990 = vlaneseq
    %v2991 = vshrl.u32 %v2990, 7
    %v2992 = vsub.s32 1, %v2991
    %v2993 = vrot.slane %v1783, %v2992
    %v2998 = vunpack.c.l.b16 %v2985
    %v2999 = vunpack.c.l.b16 %v2986
    %v3000 = vunpack.c.l.b16 %v2987
    %v3001 = vunpack.c.l.b16 %v2988
    %v3002 = vpack.c.b16 %v2999, %v2998
    %v3003 = vpack.c.b16 %v3001, %v3000
    %v3007 = vsel %vm111, %v2989, 0
    %3009 = vmatprep.subr.bf16.mxu0 0
    %3010 = vmatpush1.bf16.msra.mxu0 %v3002
    %3011 = vmatprep.subr.bf16.mxu0 0
    %3012 = vmatpush1.bf16.msra.mxu0 %v3003
    %3013 = vmatprep.subr.bf16.mxu0 0
    %3014 = vmatpush1.bf16.msra.mxu0 0
    %3015 = vmatprep.subr.bf16.mxu0 0
    %3016 = vmatpush1.bf16.msra.mxu0 0
    %3017 = vmatprep.subr.bf16.mxu0 0
    %3018 = vmatpush1.bf16.msra.mxu0 0
    %3019 = vmatprep.subr.bf16.mxu0 0
    %3020 = vmatpush1.bf16.msra.mxu0 0
    %3021 = vmatprep.subr.bf16.mxu0 0
    %3022 = vmatpush1.bf16.msra.mxu0 0
    %3023 = vmatprep.subr.bf16.mxu0 0
    %3024 = vmatpush1.bf16.msra.mxu0 0
    %3025 = vmatprep.subr.bf16.mxu0 0
    %3026 = vmatpush1.bf16.msra.mxu0 0
    %3027 = vmatprep.subr.bf16.mxu0 0
    %3028 = vmatpush1.bf16.msra.mxu0 0
    %3029 = vmatprep.subr.bf16.mxu0 0
    %3030 = vmatpush1.bf16.msra.mxu0 0
    %3031 = vmatprep.subr.bf16.mxu0 0
    %3032 = vmatpush1.bf16.msra.mxu0 0
    %3033 = vmatprep.subr.bf16.mxu0 0
    %3034 = vmatpush1.bf16.msra.mxu0 0
    %3035 = vmatprep.subr.bf16.mxu0 0
    %3036 = vmatpush1.bf16.msra.mxu0 0
    %3037 = vmatprep.subr.bf16.mxu0 0
    %3038 = vmatpush1.bf16.msra.mxu0 0
    %3039 = vmatprep.subr.bf16.mxu0 0
    %3040 = vmatpush1.bf16.msra.mxu0 0
    %3041 = vmatprep.mubr.bf16.mxu0 0
    %3042 = vmatmul.mubr.bf16.gmra.mrb[0].mxu0 %v3007
    %v3043 = vpop.f32.mrb[0].mxu0
    %v3044 = vadd.f32 %v2993, %v3043
    %v3045 = vpop.f32.mrb[0].mxu0
    %v3046 = vpop.f32.mrb[0].mxu0
    %v3047 = vadd.f32 %v2993, %v3046
    %v3048 = vpop.f32.mrb[0].mxu0
    %3049 = vdwg.mxu0
    %v3050 = vadd.f32 %v2409, %v3044
    %v3051 = vadd.f32 %v2410, %v3047
    %v3052 = vsel %vm111, %v3050, 0.0
    %3053 = vadd.xlane.f32.xlu0 %v3052
    %v3054 = vpop.xlane.xlu0 %3053
    %v3055 = vsel %vm111, %v3051, 0.0
    %3056 = vadd.xlane.f32.xlu0 %v3055
    %v3057 = vpop.xlane.xlu0 %3056
    %v3058 = vmul.f32 %v3054, %v868
    %v3059 = vmul.f32 %v3057, %v868
    %v3060 = vsub.f32 %v3050, %v3058
    %v3061 = vsub.f32 %v3051, %v3059
    %v3062 = vmul.f32 %v3060, %v3060
    %v3063 = vmul.f32 %v3061, %v3061
    %v3064 = vsel %vm111, %v3062, 0.0
    %3065 = vadd.xlane.f32.xlu0 %v3064
    %v3066 = vpop.xlane.xlu0 %3065
    %v3067 = vsel %vm111, %v3063, 0.0
    %3068 = vadd.xlane.f32.xlu0 %v3067
    %v3069 = vpop.xlane.xlu0 %3068
    %v3070 = vmul.f32 %v3066, %v868
    %v3071 = vmul.f32 %v3069, %v868
    %v3072 = vadd.f32 %v3070, 1e-05
    %v3073 = vadd.f32 %v3071, 1e-05
    %v3074 = vrsqrt.pop %v3072
    %v3075 = vrsqrt.pop %v3073
    %v3076 = vmul.f32 %v3060, %v3074
    %v3077 = vmul.f32 %v3061, %v3075
    %v3078 = vlaneseq
    %v3079 = vshrl.u32 %v3078, 7
    %v3080 = vsub.s32 5, %v3079
    %v3081 = vrot.slane %v1783, %v3080
    %v3082 = vmul.f32 %v3076, %v3081
    %v3083 = vmul.f32 %v3077, %v3081
    %v3084 = vlaneseq
    %v3085 = vshrl.u32 %v3084, 7
    %v3086 = vsub.s32 6, %v3085
    %v3087 = vrot.slane %v1783, %v3086
    %v3088 = vadd.f32 %v3082, %v3087
    %v3089 = vadd.f32 %v3083, %v3087
    %s3090 = scalar_lea.vmem %s9, 16
    %v3091 = vld [vmem:[%s3090] sm:$0xf]
    %v3092 = vld [vmem:[%s3090 + $0x4] sm:$0xf]
    %v3093 = vld [vmem:[%s3090 + $0x8] sm:$0xf]
    %v3094 = vld [vmem:[%s3090 + $0xc] sm:$0xf]
    %v3095 = vpack.c.bf16 %v3089, %v3088
    %s3096 = scalar_lea.vmem %s13, 1
    %v3097 = vld [vmem:[%s3096] sm:$0x1]
    %v3099 = vlaneseq
    %v3100 = vshrl.u32 %v3099, 7
    %v3101 = vsub.s32 0, %v3100
    %v3102 = vrot.slane %v3097, %v3101
    %v3108 = vunpack.c.l.b16 %v3091
    %v3109 = vunpack.c.l.b16 %v3092
    %v3110 = vunpack.c.l.b16 %v3093
    %v3111 = vunpack.c.l.b16 %v3094
    %v3112 = vpack.c.b16 %v3109, %v3108
    %v3113 = vpack.c.b16 %v3111, %v3110
    %v3117 = vsel %vm111, %v3095, 0
    %3119 = vmatprep.subr.bf16.mxu0 0
    %3120 = vmatpush1.bf16.msra.mxu0 %v3112
    %3121 = vmatprep.subr.bf16.mxu0 0
    %3122 = vmatpush1.bf16.msra.mxu0 %v3113
    %3123 = vmatprep.subr.bf16.mxu0 0
    %3124 = vmatpush1.bf16.msra.mxu0 0
    %3125 = vmatprep.subr.bf16.mxu0 0
    %3126 = vmatpush1.bf16.msra.mxu0 0
    %3127 = vmatprep.subr.bf16.mxu0 0
    %3128 = vmatpush1.bf16.msra.mxu0 0
    %3129 = vmatprep.subr.bf16.mxu0 0
    %3130 = vmatpush1.bf16.msra.mxu0 0
    %3131 = vmatprep.subr.bf16.mxu0 0
    %3132 = vmatpush1.bf16.msra.mxu0 0
    %3133 = vmatprep.subr.bf16.mxu0 0
    %3134 = vmatpush1.bf16.msra.mxu0 0
    %3135 = vmatprep.subr.bf16.mxu0 0
    %3136 = vmatpush1.bf16.msra.mxu0 0
    %3137 = vmatprep.subr.bf16.mxu0 0
    %3138 = vmatpush1.bf16.msra.mxu0 0
    %3139 = vmatprep.subr.bf16.mxu0 0
    %3140 = vmatpush1.bf16.msra.mxu0 0
    %3141 = vmatprep.subr.bf16.mxu0 0
    %3142 = vmatpush1.bf16.msra.mxu0 0
    %3143 = vmatprep.subr.bf16.mxu0 0
    %3144 = vmatpush1.bf16.msra.mxu0 0
    %3145 = vmatprep.subr.bf16.mxu0 0
    %3146 = vmatpush1.bf16.msra.mxu0 0
    %3147 = vmatprep.subr.bf16.mxu0 0
    %3148 = vmatpush1.bf16.msra.mxu0 0
    %3149 = vmatprep.subr.bf16.mxu0 0
    %3150 = vmatpush1.bf16.msra.mxu0 0
    %3151 = vmatprep.mubr.bf16.mxu0 0
    %3152 = vmatmul.mubr.bf16.gmra.mrb[0].mxu0 %v3117
    %v3153 = vpop.f32.mrb[0].mxu0
    %v3154 = vadd.f32 %v3102, %v3153
    %v3155 = vpop.f32.mrb[0].mxu0
    %v3156 = vpop.f32.mrb[0].mxu0
    %v3157 = vadd.f32 %v3102, %v3156
    %v3158 = vpop.f32.mrb[0].mxu0
    %3159 = vdwg.mxu0
    %v3160 = vmax.f32 %v3154, 0.0
    %v3161 = vmax.f32 %v3157, 0.0
    %s3162 = scalar_lea.vmem %s10, 32
    %v3163 = vld [vmem:[%s3162] sm:$0xf]
    %v3164 = vld [vmem:[%s3162 + $0x4] sm:$0xf]
    %v3165 = vld [vmem:[%s3162 + $0x8] sm:$0xf]
    %v3166 = vld [vmem:[%s3162 + $0xc] sm:$0xf]
    %v3167 = vld [vmem:[%s3162 + $0x10] sm:$0xf]
    %v3168 = vld [vmem:[%s3162 + $0x14] sm:$0xf]
    %v3169 = vld [vmem:[%s3162 + $0x18] sm:$0xf]
    %v3170 = vld [vmem:[%s3162 + $0x1c] sm:$0xf]
    %v3171 = vpack.c.bf16 %v3161, %v3160
    %v3172 = vlaneseq
    %v3173 = vshrl.u32 %v3172, 7
    %v3174 = vsub.s32 2, %v3173
    %v3175 = vrot.slane %v1783, %v3174
    %v3184 = vunpack.c.l.b16 %v3163
    %v3185 = vunpack.c.l.b16 %v3164
    %v3186 = vunpack.c.l.b16 %v3165
    %v3187 = vunpack.c.l.b16 %v3166
    %v3188 = vunpack.c.l.b16 %v3167
    %v3189 = vunpack.c.l.b16 %v3168
    %v3190 = vunpack.c.l.b16 %v3169
    %v3191 = vunpack.c.l.b16 %v3170
    %v3192 = vpack.c.b16 %v3185, %v3184
    %v3193 = vpack.c.b16 %v3187, %v3186
    %v3194 = vpack.c.b16 %v3189, %v3188
    %v3195 = vpack.c.b16 %v3191, %v3190
    %v3201 = vsel %vm1695, %v3171, 0
    %3203 = vmatprep.subr.bf16.mxu0 0
    %3204 = vmatpush1.bf16.msra.mxu0 %v3192
    %3205 = vmatprep.subr.bf16.mxu0 0
    %3206 = vmatpush1.bf16.msra.mxu0 %v3193
    %3207 = vmatprep.subr.bf16.mxu0 0
    %3208 = vmatpush1.bf16.msra.mxu0 %v3194
    %3209 = vmatprep.subr.bf16.mxu0 0
    %3210 = vmatpush1.bf16.msra.mxu0 %v3195
    %3211 = vmatprep.subr.bf16.mxu0 0
    %3212 = vmatpush1.bf16.msra.mxu0 0
    %3213 = vmatprep.subr.bf16.mxu0 0
    %3214 = vmatpush1.bf16.msra.mxu0 0
    %3215 = vmatprep.subr.bf16.mxu0 0
    %3216 = vmatpush1.bf16.msra.mxu0 0
    %3217 = vmatprep.subr.bf16.mxu0 0
    %3218 = vmatpush1.bf16.msra.mxu0 0
    %3219 = vmatprep.subr.bf16.mxu0 0
    %3220 = vmatpush1.bf16.msra.mxu0 0
    %3221 = vmatprep.subr.bf16.mxu0 0
    %3222 = vmatpush1.bf16.msra.mxu0 0
    %3223 = vmatprep.subr.bf16.mxu0 0
    %3224 = vmatpush1.bf16.msra.mxu0 0
    %3225 = vmatprep.subr.bf16.mxu0 0
    %3226 = vmatpush1.bf16.msra.mxu0 0
    %3227 = vmatprep.subr.bf16.mxu0 0
    %3228 = vmatpush1.bf16.msra.mxu0 0
    %3229 = vmatprep.subr.bf16.mxu0 0
    %3230 = vmatpush1.bf16.msra.mxu0 0
    %3231 = vmatprep.subr.bf16.mxu0 0
    %3232 = vmatpush1.bf16.msra.mxu0 0
    %3233 = vmatprep.subr.bf16.mxu0 0
    %3234 = vmatpush1.bf16.msra.mxu0 0
    %3235 = vmatprep.mubr.bf16.mxu0 0
    %3236 = vmatmul.mubr.bf16.gmra.mrb[0].mxu0 %v3201
    %v3237 = vpop.f32.mrb[0].mxu0
    %v3238 = vadd.f32 %v3175, %v3237
    %v3239 = vpop.f32.mrb[0].mxu0
    %v3240 = vpop.f32.mrb[0].mxu0
    %v3241 = vadd.f32 %v3175, %v3240
    %v3242 = vpop.f32.mrb[0].mxu0
    %3243 = vdwg.mxu0
    %v3244 = vadd.f32 %v3088, %v3238
    %v3245 = vadd.f32 %v3089, %v3241
    %v3246 = vsel %vm111, %v3244, 0.0
    %3247 = vadd.xlane.f32.xlu0 %v3246
    %v3248 = vpop.xlane.xlu0 %3247
    %v3249 = vsel %vm111, %v3245, 0.0
    %3250 = vadd.xlane.f32.xlu0 %v3249
    %v3251 = vpop.xlane.xlu0 %3250
    %v3252 = vmul.f32 %v3248, %v868
    %v3253 = vmul.f32 %v3251, %v868
    %v3254 = vsub.f32 %v3244, %v3252
    %v3255 = vsub.f32 %v3245, %v3253
    %v3256 = vmul.f32 %v3254, %v3254
    %v3257 = vmul.f32 %v3255, %v3255
    %v3258 = vsel %vm111, %v3256, 0.0
    %3259 = vadd.xlane.f32.xlu0 %v3258
    %v3260 = vpop.xlane.xlu0 %3259
    %v3261 = vsel %vm111, %v3257, 0.0
    %3262 = vadd.xlane.f32.xlu0 %v3261
    %v3263 = vpop.xlane.xlu0 %3262
    %v3264 = vmul.f32 %v3260, %v868
    %v3265 = vmul.f32 %v3263, %v868
    %v3266 = vadd.f32 %v3264, 1e-05
    %v3267 = vadd.f32 %v3265, 1e-05
    %v3268 = vrsqrt.pop %v3266
    %v3269 = vrsqrt.pop %v3267
    %v3270 = vmul.f32 %v3254, %v3268
    %v3271 = vmul.f32 %v3255, %v3269
    %v3272 = vlaneseq
    %v3273 = vshrl.u32 %v3272, 7
    %v3274 = vsub.s32 7, %v3273
    %v3275 = vrot.slane %v1783, %v3274
    %v3276 = vmul.f32 %v3270, %v3275
    %v3277 = vmul.f32 %v3271, %v3275
    %v3278 = vlaneseq
    %v3279 = vshrl.u32 %v3278, 7
    %v3280 = vsub.s32 0, %v3279
    %v3281 = vrot.slane %v1784, %v3280
    %v3282 = vadd.f32 %v3276, %v3281
    %v3283 = vadd.f32 %v3277, %v3281
    %v3284 = vld [vmem:[%s14] sm:$0x3]
    %v3285 = vsel %vm111, %v3282, 0.0
    %3286 = vadd.xlane.f32.xlu0 %v3285
    %v3287 = vpop.xlane.xlu0 %3286
    %v3288 = vsel %vm111, %v3283, 0.0
    %3289 = vadd.xlane.f32.xlu0 %v3288
    %v3290 = vpop.xlane.xlu0 %3289
    %v3291 = vmul.f32 %v3287, %v868
    %v3292 = vmul.f32 %v3290, %v868
    %v3293 = vsub.f32 %v3282, %v3291
    %v3294 = vsub.f32 %v3283, %v3292
    %v3295 = vmul.f32 %v3293, %v3293
    %v3296 = vmul.f32 %v3294, %v3294
    %v3297 = vsel %vm111, %v3295, 0.0
    %3298 = vadd.xlane.f32.xlu0 %v3297
    %v3299 = vpop.xlane.xlu0 %3298
    %v3300 = vsel %vm111, %v3296, 0.0
    %3301 = vadd.xlane.f32.xlu0 %v3300
    %v3302 = vpop.xlane.xlu0 %3301
    %v3303 = vmul.f32 %v3299, %v868
    %v3304 = vmul.f32 %v3302, %v868
    %v3305 = vadd.f32 %v3303, 1e-05
    %v3306 = vadd.f32 %v3304, 1e-05
    %v3307 = vrsqrt.pop %v3305
    %v3308 = vrsqrt.pop %v3306
    %v3309 = vmul.f32 %v3293, %v3307
    %v3310 = vmul.f32 %v3294, %v3308
    %v3311 = vlaneseq
    %v3312 = vshrl.u32 %v3311, 7
    %v3313 = vsub.s32 0, %v3312
    %v3314 = vrot.slane %v3284, %v3313
    %v3315 = vmul.f32 %v3309, %v3314
    %v3316 = vmul.f32 %v3310, %v3314
    %v3317 = vlaneseq
    %v3318 = vshrl.u32 %v3317, 7
    %v3319 = vsub.s32 1, %v3318
    %v3320 = vrot.slane %v3284, %v3319
    %v3321 = vadd.f32 %v3315, %v3320
    %v3322 = vadd.f32 %v3316, %v3320
    %v3323 = vld [vmem:[%s15] sm:$0xf]
    %v3324 = vld [vmem:[%s15 + $0x4] sm:$0xf]
    %v3325 = vld [vmem:[%s15 + $0x8] sm:$0xf]
    %v3326 = vld [vmem:[%s15 + $0xc] sm:$0xf]
    %v3327 = vpack.c.bf16 %v3322, %v3321
    %v3328 = vld [vmem:[%s16] sm:$0x1]
    %v3330 = vlaneseq
    %v3331 = vshrl.u32 %v3330, 7
    %v3332 = vsub.s32 0, %v3331
    %v3333 = vrot.slane %v3328, %v3332
    %v3339 = vunpack.c.l.b16 %v3323
    %v3340 = vunpack.c.l.b16 %v3324
    %v3341 = vunpack.c.l.b16 %v3325
    %v3342 = vunpack.c.l.b16 %v3326
    %v3343 = vpack.c.b16 %v3340, %v3339
    %v3344 = vpack.c.b16 %v3342, %v3341
    %v3348 = vsel %vm111, %v3327, 0
    %3350 = vmatprep.subr.bf16.mxu0 0
    %3351 = vmatpush1.bf16.msra.mxu0 %v3343
    %3352 = vmatprep.subr.bf16.mxu0 0
    %3353 = vmatpush1.bf16.msra.mxu0 %v3344
    %3354 = vmatprep.subr.bf16.mxu0 0
    %3355 = vmatpush1.bf16.msra.mxu0 0
    %3356 = vmatprep.subr.bf16.mxu0 0
    %3357 = vmatpush1.bf16.msra.mxu0 0
    %3358 = vmatprep.subr.bf16.mxu0 0
    %3359 = vmatpush1.bf16.msra.mxu0 0
    %3360 = vmatprep.subr.bf16.mxu0 0
    %3361 = vmatpush1.bf16.msra.mxu0 0
    %3362 = vmatprep.subr.bf16.mxu0 0
    %3363 = vmatpush1.bf16.msra.mxu0 0
    %3364 = vmatprep.subr.bf16.mxu0 0
    %3365 = vmatpush1.bf16.msra.mxu0 0
    %3366 = vmatprep.subr.bf16.mxu0 0
    %3367 = vmatpush1.bf16.msra.mxu0 0
    %3368 = vmatprep.subr.bf16.mxu0 0
    %3369 = vmatpush1.bf16.msra.mxu0 0
    %3370 = vmatprep.subr.bf16.mxu0 0
    %3371 = vmatpush1.bf16.msra.mxu0 0
    %3372 = vmatprep.subr.bf16.mxu0 0
    %3373 = vmatpush1.bf16.msra.mxu0 0
    %3374 = vmatprep.subr.bf16.mxu0 0
    %3375 = vmatpush1.bf16.msra.mxu0 0
    %3376 = vmatprep.subr.bf16.mxu0 0
    %3377 = vmatpush1.bf16.msra.mxu0 0
    %3378 = vmatprep.subr.bf16.mxu0 0
    %3379 = vmatpush1.bf16.msra.mxu0 0
    %3380 = vmatprep.subr.bf16.mxu0 0
    %3381 = vmatpush1.bf16.msra.mxu0 0
    %3382 = vmatprep.mubr.bf16.mxu0 0
    %3383 = vmatmul.mubr.bf16.gmra.mrb[0].mxu0 %v3348
    %v3384 = vpop.f32.mrb[0].mxu0
    %v3385 = vadd.f32 %v3333, %v3384
    %v3386 = vpop.f32.mrb[0].mxu0
    %v3387 = vpop.f32.mrb[0].mxu0
    %v3388 = vadd.f32 %v3333, %v3387
    %v3389 = vpop.f32.mrb[0].mxu0
    %3390 = vdwg.mxu0
    %v3391 = vxor.u32 %v3385, 2147483648
    %v3392 = vxor.u32 %v3388, 2147483648
    %v3393 = vmul.f32 %v3391, 1.442695
    %v3394 = vpow.pop %v3393
    %v3395 = vmul.f32 %v3392, 1.442695
    %v3396 = vpow.pop %v3395
    %v3397 = vadd.f32 %v3394, 1.0
    %v3398 = vadd.f32 %v3396, 1.0
    %v3399 = vrcp.pop %v3397
    %v3400 = vmul.f32 1.0, %v3399
    %v3401 = vrcp.pop %v3398
    %v3402 = vmul.f32 1.0, %v3401
    %3403 = vst.msk [vmem:[#allocation7] sm:$0xff] %vm441, %v3400
    %3404 = vst.msk [vmem:[#allocation7 + $0x8] sm:$0xff] %vm441, %v3402
    // Predicated region
    $region78: #{tpu_custom_call.1} parent=1 // pred_check
      _
    $region79: #{tpu_custom_call.1} parent=1 // pred_check_branch
      %3406 = sbr.rel (0) target = $region81
    $region80: #{tpu_custom_call.1} parent=1 // pred_region
      %s3408 = ssub.s32 256, 256
      %3409 = vsyncadd [#allocation4], %s3408
      %s3410 = sshll.u32 [#allocation7], 4
      %s3411 = int_to_ptr.vmem [resolvable:$true] %s3410
      %3416 = dma.vmem_to_hbm [thread:$0]  %s3411, 256, %s17, [#allocation4], 128, 128, 8
    $region81: #{tpu_custom_call.1} parent=1 // pred_fallthru
      _
    // Predicated region
    $region82: #{tpu_custom_call.1} parent=1 // pred_check
      _
    $region83: #{tpu_custom_call.1} parent=1 // pred_check_branch
      %3418 = sbr.rel (0) target = $region85
    $region84: #{tpu_custom_call.1} parent=1 // pred_region
      %3419 = dma.done [#allocation4], 256
    $region85: #{tpu_custom_call.1} parent=1 // pred_fallthru
      _
    %3420 = vsyncpa [#allocation3], 1
    %3421 = vsyncpa [#allocation6], 1
    %3422 = vsyncpa [#allocation4], 1

</llo_original>
